<compile_context>
chip_gen: v7x
topology: tpu7x:2x2x1
jax: 0.10.0
libtpu: 0.0.40
codegen_flags: <defaults>
</compile_context>

<pallas_src>
import jax
import jax.numpy as jnp
from jax.experimental import pallas as pl
from jax.experimental.pallas import tpu as pltpu


# ----------------------------------------------------------------------------
# Model structure (matches the PyTorch module)
# ----------------------------------------------------------------------------
def _layer_dims(input_shape: int, n_layers: int):
    enc = [(input_shape // 2**i, input_shape // 2**(i + 1)) for i in range(n_layers)]
    dec = [(input_shape // 2**(n_layers - i), input_shape // 2**(n_layers - i - 1))
           for i in range(n_layers)]
    return enc + dec


def _relu_flags(n_layers: int):
    # ReLU after every Linear except the last encoder layer and the final layer.
    n_total = 2 * n_layers
    return [i not in (n_layers - 1, n_total - 1) for i in range(n_total)]


def init_params(key, input_shape: int, n_layers: int):
    """nn.Linear-style U(-1/sqrt(fan_in), 1/sqrt(fan_in)); weights stored (in, out)."""
    params = []
    for (din, dout) in _layer_dims(input_shape, n_layers):
        key, kw, kb = jax.random.split(key, 3)
        bound = 1.0 / jnp.sqrt(jnp.float32(din))
        w = jax.random.uniform(kw, (din, dout), jnp.float32, -bound, bound)
        b = jax.random.uniform(kb, (1, dout), jnp.float32, -bound, bound)
        params.append((w, b))
    return params


def _round_up(x: int, m: int) -> int:
    return (x + m - 1) // m * m


# ----------------------------------------------------------------------------
# Host-side seam fusion + lane-dense parameter packing
# ----------------------------------------------------------------------------
def fuse_and_pack(params, input_shape: int, n_layers: int, *, uniform_hidden=None):
    """Fuse the ReLU-free encoder/decoder seam and pack parameters into:
      w_slab : bf16 (sum of padded din over hidden layers, slab_w)  -- hidden weights
      w_fin  : bf16 (padded din_fin, input_shape)                   -- final layer weight
      b_slab : f32  (round_up(n_fused, 8), max(input_shape, slab_w))
    All hidden output widths are padded to multiples of 128 (or to a uniform
    width on v6e/v7x via `uniform_hidden=384`).  Zero padding is exact.
    Returns (w_slab, w_fin, b_slab, layout, fused, final_relu) where layout is a
    static tuple of (row_offset, padded_din, padded_dout, relu) and `fused` is
    the unpadded [(w_bf16, b_f32, relu), ...] list for reference checking."""
    lane = 128
    relu = _relu_flags(n_layers)
    ws = [w for w, _ in params]
    bs = [b for _, b in params]

    # Seam: Linear[n_layers-1] (no ReLU) directly followed by Linear[n_layers].
    s = n_layers - 1
    w_seam = ws[s] @ ws[s + 1]
    b_seam = bs[s] @ ws[s + 1] + bs[s + 1]
    ws = ws[:s] + [w_seam] + ws[s + 2:]
    bs = bs[:s] + [b_seam] + bs[s + 2:]
    relu = relu[:s] + [relu[s + 1]] + relu[s + 2:]
    n_fused = len(ws)

    # Reference list mirroring the kernel's math (bf16 weights, unpadded).
    fused = [(ws[i].astype(jnp.bfloat16), bs[i], bool(relu[i])) for i in range(n_fused)]

    # Padded (lane-dense) output width for each hidden layer.
    def padded(d):
        dp = uniform_hidden if uniform_hidden is not None else _round_up(d, lane)
        assert dp >= d and dp % lane == 0
        return int(dp)

    douts_p = [padded(w.shape[1]) for w in ws[:-1]]
    dins_p = [input_shape] + douts_p[:-1]
    din_fin_p = douts_p[-1]
    slab_w = max(douts_p)

    # Weight slab: hidden layers row-stacked, rows/cols zero-padded, bf16.
    layout, blocks, off = [], [], 0
    for w, r, din_p, dout_p in zip(ws[:-1], relu[:-1], dins_p, douts_p):
        din, dout = w.shape
        blk = jnp.zeros((din_p, slab_w), jnp.float32).at[:din, :dout].set(w)
        blocks.append(blk)
        layout.append((off, din_p, dout_p, bool(r)))
        off += din_p
    w_slab = jnp.concatenate(blocks, axis=0).astype(jnp.bfloat16)

    # Final layer weight, rows zero-padded to the padded width of the last hidden out.
    w_last = ws[-1]
    w_fin = (jnp.zeros((din_fin_p, input_shape), jnp.float32)
             .at[:w_last.shape[0], :].set(w_last).astype(jnp.bfloat16))

    # Bias slab (f32): one row per fused layer, lanes zero-padded, rows padded to 8.
    b_w = max(input_shape, slab_w)
    nb_rows = _round_up(n_fused, 8)
    b_slab = jnp.zeros((nb_rows, b_w), jnp.float32)
    for i, b in enumerate(bs):
        b_slab = b_slab.at[i, :b.shape[1]].set(b[0])

    return w_slab, w_fin, b_slab, tuple(layout), fused, bool(relu[-1])


# ----------------------------------------------------------------------------
# Kernel
# ----------------------------------------------------------------------------
def _make_kernel(layout, final_relu: bool):
    layout = tuple(layout)
    n_hidden = len(layout)  # bias row index of the final layer

    def ae_kernel(x_ref, w_ref, wf_ref, b_ref, o_ref):
        # Cast once; h stays bf16 between layers (f32 only inside the MXU
        # accumulate and the bias+ReLU epilogue).
        h = x_ref[...].astype(jnp.bfloat16)
        for li, (off, din_p, dout_p, relu) in enumerate(layout):
            w = w_ref[off:off + din_p, 0:dout_p]         # bf16, static lane-dense slice
            b = b_ref[li:li + 1, 0:dout_p]               # f32
            acc = jnp.dot(h, w, preferred_element_type=jnp.float32) + b
            if relu:
                acc = jnp.maximum(acc, 0.0)
            h = acc.astype(jnp.bfloat16)
        out_w = wf_ref.shape[1]
        out = (jnp.dot(h, wf_ref[...], preferred_element_type=jnp.float32)
               + b_ref[n_hidden:n_hidden + 1, 0:out_w])
        if final_relu:
            out = jnp.maximum(out, 0.0)
        o_ref[...] = out.astype(o_ref.dtype)

    return ae_kernel


def make_ae_forward(input_shape: int, layout, final_relu: bool, *, tb_max: int = 128):
    kernel = _make_kernel(layout, final_relu)

    @jax.jit
    def fwd(x, w_slab, w_fin, b_slab):
        B, D = x.shape
        assert D == input_shape
        tb = min(tb_max, _round_up(B, 8))          # sublane-aligned batch tile
        Bp = _round_up(B, tb)                      # pad batch to whole tiles
        xp = jnp.pad(x, ((0, Bp - B), (0, 0))) if Bp != B else x
        grid = (Bp // tb,)

        flops = 2 * Bp * (sum(din * dout for (_, din, dout, _) in layout)
                          + w_fin.shape[0] * w_fin.shape[1])
        bytes_accessed = (xp.size * xp.dtype.itemsize + Bp * D * 2
                          + w_slab.size * 2 + w_fin.size * 2 + b_slab.size * 4)

        out = pl.pallas_call(
            kernel,
            out_shape=jax.ShapeDtypeStruct((Bp, D), jnp.bfloat16),
            grid_spec=pltpu.PrefetchScalarGridSpec(
                num_scalar_prefetch=0,
                grid=grid,
                in_specs=[
                    pl.BlockSpec((tb, D), lambda i: (i, 0)),       # activations stream
                    pl.BlockSpec(w_slab.shape, lambda i: (0, 0)),  # weights resident
                    pl.BlockSpec(w_fin.shape, lambda i: (0, 0)),   # final weight resident
                    pl.BlockSpec(b_slab.shape, lambda i: (0, 0)),  # biases resident
                ],
                out_specs=pl.BlockSpec((tb, D), lambda i: (i, 0)),
            ),
            compiler_params=pltpu.CompilerParams(
                dimension_semantics=("parallel",),
                vmem_limit_bytes=32 * 1024 * 1024,
            ),
            cost_estimate=pl.CostEstimate(
                flops=int(flops), transcendentals=0,
                bytes_accessed=int(bytes_accessed)),
        )(xp, w_slab, w_fin, b_slab)
        return out[:B] if Bp != B else out

    return fwd


# ----------------------------------------------------------------------------
# Pure-JAX references
# ----------------------------------------------------------------------------
def ae_forward_ref_f32(x, params, n_layers: int):
    """Faithful (unfused, f32) PyTorch-forward reference."""
    relu = _relu_flags(n_layers)
    h = x
    for i, (w, b) in enumerate(params):
        h = h @ w + b
        if relu[i]:
            h = jnp.maximum(h, 0.0)
    return h


def ae_forward_ref_quant(x, fused):
    """Reference mirroring the kernel's exact math (fused seam, bf16 weights/acts)."""
    h = x.astype(jnp.bfloat16)
    for w_bf16, b, relu in fused:
        acc = jnp.dot(h, w_bf16, preferred_element_type=jnp.float32) + b
        if relu:
            acc = jnp.maximum(acc, 0.0)
        h = acc.astype(jnp.bfloat16)
    return h


# ----------------------------------------------------------------------------
# Demo / self-test
# ----------------------------------------------------------------------------
if __name__ == "__main__":
    INPUT_SHAPE = 768   # module default
    N_LAYERS = 5        # module default
    BATCH = 256         # small; tb=128 -> grid=(2,), exercises pipelining

    key = jax.random.PRNGKey(0)
    kx, kp = jax.random.split(key)
    x_f32 = jax.random.normal(kx, (BATCH, INPUT_SHAPE), jnp.float32)
    x = x_f32.astype(jnp.bfloat16)        # producer supplies bf16 activations
    params = init_params(kp, INPUT_SHAPE, N_LAYERS)

    # Default: 128-multiple padding (safe on v5e/v6e/v7x).
    # On v6e/v7x one can use fuse_and_pack(..., uniform_hidden=384) for
    # homogeneous (., 384) hidden tiles (extra MXU FLOPs are free there).
    w_slab, w_fin, b_slab, layout, fused, final_relu = fuse_and_pack(
        params, INPUT_SHAPE, N_LAYERS)

    ae_forward = make_ae_forward(INPUT_SHAPE, layout, final_relu)

    out = jax.block_until_ready(ae_forward(x, w_slab, w_fin, b_slab))
    assert out.shape == (BATCH, INPUT_SHAPE), out.shape
    assert out.dtype == jnp.bfloat16, out.dtype

    # Tight check vs a reference that matches the kernel's quantized math.
    ref_exact = ae_forward_ref_quant(x, fused)
    err_exact = float(jnp.max(jnp.abs(out.astype(jnp.float32)
                                      - ref_exact.astype(jnp.float32))))
    assert err_exact < 5e-3, err_exact

    # Looser sanity check vs the faithful f32 PyTorch-semantics forward.
    ref_f32 = ae_forward_ref_f32(x_f32, params, N_LAYERS)
    err_f32 = float(jnp.max(jnp.abs(out.astype(jnp.float32) - ref_f32)))
    assert err_f32 < 5e-2, err_f32

    # Small / ragged batch path (exercises padding to the sublane tile).
    x_small = x[:6]
    out_small = jax.block_until_ready(ae_forward(x_small, w_slab, w_fin, b_slab))
    assert out_small.shape == (6, INPUT_SHAPE), out_small.shape
    err_small = float(jnp.max(jnp.abs(out_small.astype(jnp.float32)
                                      - out[:6].astype(jnp.float32))))
    assert err_small < 5e-3, err_small

    print("KERNEL_OK")
</pallas_src>

<mosaic_0001>
module attributes {stable_mosaic.version = 11 : i64} {
  func.func @ae_kernel(%arg0: i32, %arg1: memref<128x768xbf16, #tpu.memory_space<vmem>>, %arg2: memref<2176x384xbf16, #tpu.memory_space<vmem>>, %arg3: memref<384x768xbf16, #tpu.memory_space<vmem>>, %arg4: memref<16x768xf32, #tpu.memory_space<vmem>>, %arg5: memref<128x768xbf16, #tpu.memory_space<vmem>>) attributes {dimension_semantics = [#tpu.dimension_semantics<parallel>], iteration_bounds = array<i64: 2>, scalar_prefetch = 0 : i64, scratch_operands = 0 : i64, tpu.core_type = #tpu.core_type<tc>, window_params = [{transform_indices = @transform_0, window_bounds = array<i64: 128, 768>}, {pipeline_mode = #tpu.pipeline_mode<synchronous>, transform_indices = @transform_1, window_bounds = array<i64: 2176, 384>}, {pipeline_mode = #tpu.pipeline_mode<synchronous>, transform_indices = @transform_2, window_bounds = array<i64: 384, 768>}, {pipeline_mode = #tpu.pipeline_mode<synchronous>, transform_indices = @transform_3, window_bounds = array<i64: 16, 768>}, {transform_indices = @transform_4, window_bounds = array<i64: 128, 768>}]} {
    %c0 = arith.constant 0 : index
    %c0_0 = arith.constant 0 : index
    %0 = vector.load %arg1[%c0, %c0_0] : memref<128x768xbf16, #tpu.memory_space<vmem>>, vector<128x768xbf16>
    %c0_1 = arith.constant 0 : index
    %c0_2 = arith.constant 0 : index
    %1 = vector.load %arg2[%c0_1, %c0_2] : memref<2176x384xbf16, #tpu.memory_space<vmem>>, vector<768x384xbf16>
    %c0_3 = arith.constant 0 : index
    %c0_4 = arith.constant 0 : index
    %2 = vector.load %arg4[%c0_3, %c0_4] : memref<16x768xf32, #tpu.memory_space<vmem>>, vector<1x384xf32>
    %cst = arith.constant dense<0.000000e+00> : vector<128x384xf32>
    %3 = tpu.matmul %0, %1, %cst {dimension_numbers = #tpu.dot_dimension_numbers<[1], [0], [0], [1], [0, 0, 1, 1], [], []>} : vector<128x768xbf16>, vector<768x384xbf16>, vector<128x384xf32> -> vector<128x384xf32>
    %4 = vector.broadcast %2 : vector<1x384xf32> to vector<128x384xf32>
    %5 = arith.addf %3, %4 : vector<128x384xf32>
    %cst_5 = arith.constant 0.000000e+00 : f32
    %6 = vector.broadcast %cst_5 : f32 to vector<128x384xf32>
    %7 = arith.maximumf %5, %6 : vector<128x384xf32>
    %8 = arith.truncf %7 : vector<128x384xf32> to vector<128x384xbf16>
    %c768 = arith.constant 768 : index
    %c0_6 = arith.constant 0 : index
    %9 = vector.load %arg2[%c768, %c0_6] : memref<2176x384xbf16, #tpu.memory_space<vmem>>, vector<384x256xbf16>
    %c1 = arith.constant 1 : index
    %c0_7 = arith.constant 0 : index
    %10 = vector.load %arg4[%c1, %c0_7] : memref<16x768xf32, #tpu.memory_space<vmem>>, vector<1x256xf32>
    %cst_8 = arith.constant dense<0.000000e+00> : vector<128x256xf32>
    %11 = tpu.matmul %8, %9, %cst_8 {dimension_numbers = #tpu.dot_dimension_numbers<[1], [0], [0], [1], [0, 0, 1, 1], [], []>} : vector<128x384xbf16>, vector<384x256xbf16>, vector<128x256xf32> -> vector<128x256xf32>
    %12 = vector.broadcast %10 : vector<1x256xf32> to vector<128x256xf32>
    %13 = arith.addf %11, %12 : vector<128x256xf32>
    %cst_9 = arith.constant 0.000000e+00 : f32
    %14 = vector.broadcast %cst_9 : f32 to vector<128x256xf32>
    %15 = arith.maximumf %13, %14 : vector<128x256xf32>
    %16 = arith.truncf %15 : vector<128x256xf32> to vector<128x256xbf16>
    %c1152 = arith.constant 1152 : index
    %c0_10 = arith.constant 0 : index
    %17 = vector.load %arg2[%c1152, %c0_10] : memref<2176x384xbf16, #tpu.memory_space<vmem>>, vector<256x128xbf16>
    %c2 = arith.constant 2 : index
    %c0_11 = arith.constant 0 : index
    %18 = vector.load %arg4[%c2, %c0_11] : memref<16x768xf32, #tpu.memory_space<vmem>>, vector<1x128xf32>
    %cst_12 = arith.constant dense<0.000000e+00> : vector<128x128xf32>
    %19 = tpu.matmul %16, %17, %cst_12 {dimension_numbers = #tpu.dot_dimension_numbers<[1], [0], [0], [1], [0, 0, 1, 1], [], []>} : vector<128x256xbf16>, vector<256x128xbf16>, vector<128x128xf32> -> vector<128x128xf32>
    %20 = vector.broadcast %18 : vector<1x128xf32> to vector<128x128xf32>
    %21 = arith.addf %19, %20 : vector<128x128xf32>
    %cst_13 = arith.constant 0.000000e+00 : f32
    %22 = vector.broadcast %cst_13 : f32 to vector<128x128xf32>
    %23 = arith.maximumf %21, %22 : vector<128x128xf32>
    %24 = arith.truncf %23 : vector<128x128xf32> to vector<128x128xbf16>
    %c1408 = arith.constant 1408 : index
    %c0_14 = arith.constant 0 : index
    %25 = vector.load %arg2[%c1408, %c0_14] : memref<2176x384xbf16, #tpu.memory_space<vmem>>, vector<128x128xbf16>
    %c3 = arith.constant 3 : index
    %c0_15 = arith.constant 0 : index
    %26 = vector.load %arg4[%c3, %c0_15] : memref<16x768xf32, #tpu.memory_space<vmem>>, vector<1x128xf32>
    %cst_16 = arith.constant dense<0.000000e+00> : vector<128x128xf32>
    %27 = tpu.matmul %24, %25, %cst_16 {dimension_numbers = #tpu.dot_dimension_numbers<[1], [0], [0], [1], [0, 0, 1, 1], [], []>} : vector<128x128xbf16>, vector<128x128xbf16>, vector<128x128xf32> -> vector<128x128xf32>
    %28 = vector.broadcast %26 : vector<1x128xf32> to vector<128x128xf32>
    %29 = arith.addf %27, %28 : vector<128x128xf32>
    %cst_17 = arith.constant 0.000000e+00 : f32
    %30 = vector.broadcast %cst_17 : f32 to vector<128x128xf32>
    %31 = arith.maximumf %29, %30 : vector<128x128xf32>
    %32 = arith.truncf %31 : vector<128x128xf32> to vector<128x128xbf16>
    %c1536 = arith.constant 1536 : index
    %c0_18 = arith.constant 0 : index
    %33 = vector.load %arg2[%c1536, %c0_18] : memref<2176x384xbf16, #tpu.memory_space<vmem>>, vector<128x128xbf16>
    %c4 = arith.constant 4 : index
    %c0_19 = arith.constant 0 : index
    %34 = vector.load %arg4[%c4, %c0_19] : memref<16x768xf32, #tpu.memory_space<vmem>>, vector<1x128xf32>
    %cst_20 = arith.constant dense<0.000000e+00> : vector<128x128xf32>
    %35 = tpu.matmul %32, %33, %cst_20 {dimension_numbers = #tpu.dot_dimension_numbers<[1], [0], [0], [1], [0, 0, 1, 1], [], []>} : vector<128x128xbf16>, vector<128x128xbf16>, vector<128x128xf32> -> vector<128x128xf32>
    %36 = vector.broadcast %34 : vector<1x128xf32> to vector<128x128xf32>
    %37 = arith.addf %35, %36 : vector<128x128xf32>
    %cst_21 = arith.constant 0.000000e+00 : f32
    %38 = vector.broadcast %cst_21 : f32 to vector<128x128xf32>
    %39 = arith.maximumf %37, %38 : vector<128x128xf32>
    %40 = arith.truncf %39 : vector<128x128xf32> to vector<128x128xbf16>
    %c1664 = arith.constant 1664 : index
    %c0_22 = arith.constant 0 : index
    %41 = vector.load %arg2[%c1664, %c0_22] : memref<2176x384xbf16, #tpu.memory_space<vmem>>, vector<128x128xbf16>
    %c5 = arith.constant 5 : index
    %c0_23 = arith.constant 0 : index
    %42 = vector.load %arg4[%c5, %c0_23] : memref<16x768xf32, #tpu.memory_space<vmem>>, vector<1x128xf32>
    %cst_24 = arith.constant dense<0.000000e+00> : vector<128x128xf32>
    %43 = tpu.matmul %40, %41, %cst_24 {dimension_numbers = #tpu.dot_dimension_numbers<[1], [0], [0], [1], [0, 0, 1, 1], [], []>} : vector<128x128xbf16>, vector<128x128xbf16>, vector<128x128xf32> -> vector<128x128xf32>
    %44 = vector.broadcast %42 : vector<1x128xf32> to vector<128x128xf32>
    %45 = arith.addf %43, %44 : vector<128x128xf32>
    %cst_25 = arith.constant 0.000000e+00 : f32
    %46 = vector.broadcast %cst_25 : f32 to vector<128x128xf32>
    %47 = arith.maximumf %45, %46 : vector<128x128xf32>
    %48 = arith.truncf %47 : vector<128x128xf32> to vector<128x128xbf16>
    %c1792 = arith.constant 1792 : index
    %c0_26 = arith.constant 0 : index
    %49 = vector.load %arg2[%c1792, %c0_26] : memref<2176x384xbf16, #tpu.memory_space<vmem>>, vector<128x256xbf16>
    %c6 = arith.constant 6 : index
    %c0_27 = arith.constant 0 : index
    %50 = vector.load %arg4[%c6, %c0_27] : memref<16x768xf32, #tpu.memory_space<vmem>>, vector<1x256xf32>
    %cst_28 = arith.constant dense<0.000000e+00> : vector<128x256xf32>
    %51 = tpu.matmul %48, %49, %cst_28 {dimension_numbers = #tpu.dot_dimension_numbers<[1], [0], [0], [1], [0, 0, 1, 1], [], []>} : vector<128x128xbf16>, vector<128x256xbf16>, vector<128x256xf32> -> vector<128x256xf32>
    %52 = vector.broadcast %50 : vector<1x256xf32> to vector<128x256xf32>
    %53 = arith.addf %51, %52 : vector<128x256xf32>
    %cst_29 = arith.constant 0.000000e+00 : f32
    %54 = vector.broadcast %cst_29 : f32 to vector<128x256xf32>
    %55 = arith.maximumf %53, %54 : vector<128x256xf32>
    %56 = arith.truncf %55 : vector<128x256xf32> to vector<128x256xbf16>
    %c1920 = arith.constant 1920 : index
    %c0_30 = arith.constant 0 : index
    %57 = vector.load %arg2[%c1920, %c0_30] : memref<2176x384xbf16, #tpu.memory_space<vmem>>, vector<256x384xbf16>
    %c7 = arith.constant 7 : index
    %c0_31 = arith.constant 0 : index
    %58 = vector.load %arg4[%c7, %c0_31] : memref<16x768xf32, #tpu.memory_space<vmem>>, vector<1x384xf32>
    %cst_32 = arith.constant dense<0.000000e+00> : vector<128x384xf32>
    %59 = tpu.matmul %56, %57, %cst_32 {dimension_numbers = #tpu.dot_dimension_numbers<[1], [0], [0], [1], [0, 0, 1, 1], [], []>} : vector<128x256xbf16>, vector<256x384xbf16>, vector<128x384xf32> -> vector<128x384xf32>
    %60 = vector.broadcast %58 : vector<1x384xf32> to vector<128x384xf32>
    %61 = arith.addf %59, %60 : vector<128x384xf32>
    %cst_33 = arith.constant 0.000000e+00 : f32
    %62 = vector.broadcast %cst_33 : f32 to vector<128x384xf32>
    %63 = arith.maximumf %61, %62 : vector<128x384xf32>
    %64 = arith.truncf %63 : vector<128x384xf32> to vector<128x384xbf16>
    %c0_34 = arith.constant 0 : index
    %c0_35 = arith.constant 0 : index
    %65 = vector.load %arg3[%c0_34, %c0_35] : memref<384x768xbf16, #tpu.memory_space<vmem>>, vector<384x768xbf16>
    %cst_36 = arith.constant dense<0.000000e+00> : vector<128x768xf32>
    %66 = tpu.matmul %64, %65, %cst_36 {dimension_numbers = #tpu.dot_dimension_numbers<[1], [0], [0], [1], [0, 0, 1, 1], [], []>} : vector<128x384xbf16>, vector<384x768xbf16>, vector<128x768xf32> -> vector<128x768xf32>
    %c8 = arith.constant 8 : index
    %c0_37 = arith.constant 0 : index
    %67 = vector.load %arg4[%c8, %c0_37] : memref<16x768xf32, #tpu.memory_space<vmem>>, vector<1x768xf32>
    %68 = vector.broadcast %67 : vector<1x768xf32> to vector<128x768xf32>
    %69 = arith.addf %66, %68 : vector<128x768xf32>
    %70 = arith.truncf %69 : vector<128x768xf32> to vector<128x768xbf16>
    %c0_38 = arith.constant 0 : index
    %c0_39 = arith.constant 0 : index
    %71 = vector.load %arg5[%c0_38, %c0_39] : memref<128x768xbf16, #tpu.memory_space<vmem>>, vector<128x768xbf16>
    tpu.vector_store %arg5[%c0_38, %c0_39], %70 {strides = array<i32>} : memref<128x768xbf16, #tpu.memory_space<vmem>>, vector<128x768xbf16>,
    return
  }
  func.func @transform_0(%arg0: i32) -> (i32, i32) {
    %c0_i32 = arith.constant 0 : i32
    %c0_i32_0 = arith.constant 0 : i32
    return %arg0, %c0_i32 : i32, i32
  }
  func.func @transform_1(%arg0: i32) -> (i32, i32) {
    %c0_i32 = arith.constant 0 : i32
    %c0_i32_0 = arith.constant 0 : i32
    %c0_i32_1 = arith.constant 0 : i32
    return %c0_i32, %c0_i32_0 : i32, i32
  }
  func.func @transform_2(%arg0: i32) -> (i32, i32) {
    %c0_i32 = arith.constant 0 : i32
    %c0_i32_0 = arith.constant 0 : i32
    %c0_i32_1 = arith.constant 0 : i32
    return %c0_i32, %c0_i32_0 : i32, i32
  }
  func.func @transform_3(%arg0: i32) -> (i32, i32) {
    %c0_i32 = arith.constant 0 : i32
    %c0_i32_0 = arith.constant 0 : i32
    %c0_i32_1 = arith.constant 0 : i32
    return %c0_i32, %c0_i32_0 : i32, i32
  }
  func.func @transform_4(%arg0: i32) -> (i32, i32) {
    %c0_i32 = arith.constant 0 : i32
    %c0_i32_0 = arith.constant 0 : i32
    return %arg0, %c0_i32 : i32, i32
  }
}

</mosaic_0001>

<llo_original>
// kernel: fwd.1
$region0: #{fwd.1}
  #allocation0 [shape = 'u32[]', space=smem, size = 0x4, offset = 0x4, fixed_abs, tag = 'smem constant byte address 0x4 - core index']
  #allocation1 [shape = 'u32[144,128]{1,0:T(1,128)}', space=vmem, size = 0x12000, scoped, tag = 'internal scratch']
  %s0 = inlined_call_operand.hbm [shape: bf16[256,768], index: 0, kind: input, shape index: {}]
  %s1 = inlined_call_operand.hbm [shape: bf16[2176,384], index: 1, kind: input, shape index: {}]
  %s2 = inlined_call_operand.hbm [shape: bf16[384,768], index: 2, kind: input, shape index: {}]
  %s3 = inlined_call_operand.hbm [shape: f32[16,768], index: 3, kind: input, shape index: {}]
  %s4 = inlined_call_operand.hbm [shape: bf16[256,768], index: 4, kind: output, shape index: {}]
  %s5 = sld [smem:[#allocation0]]
  $region65: #{fwd.1} parent=0
    _
  %s7 = ssub.s32 1, %s5
  %s8 = scalar_select 0, %s7, %s5
  $region1: #{fwd.1} parent=0
    #allocation2 [shape = 'u8[393216]{0}', space=vmem, size = 0x60000, scoped, tag = 'input window, operand 0']
    #allocation3 [shape = 's32[2]{0}', space=sflag, size = 0x8, scoped, tag = 'scoped memory for fwd.1']
    #allocation4 [shape = 's32[2]{0}', space=sflag, size = 0x8, scoped, tag = 'scoped memory for fwd.1']
    #allocation5 [shape = 'u8[1671168]{0}', space=vmem, size = 0x198000, scoped, tag = 'input window, operand 1, single buffered']
    #allocation6 [shape = 's32[1]{0}', space=sflag, size = 0x4, scoped, tag = 'scoped memory for fwd.1']
    #allocation7 [shape = 'u8[589824]{0}', space=vmem, size = 0x90000, scoped, tag = 'input window, operand 2, single buffered']
    #allocation8 [shape = 'u8[49152]{0}', space=vmem, size = 0xc000, scoped, tag = 'input window, operand 3, single buffered']
    #allocation9 [shape = 's32[1]{0}', space=sflag, size = 0x4, scoped, tag = 'scoped memory for fwd.1']
    #allocation10 [shape = 'u8[393216]{0}', space=vmem, size = 0x60000, scoped, tag = 'output window, operand 0']
    %9 = vsyncpa [#allocation3], 0
    %s10 = scalar_lea.sflag [#allocation3], 1
    %11 = vsyncpa %s10, 0
    %12 = vsyncpa [#allocation6], 0
    %13 = vsyncpa [#allocation9], 0
    %14 = vsyncpa [#allocation4], 0
    %s15 = scalar_lea.sflag [#allocation4], 1
    %16 = vsyncpa %s15, 0
    loop: start=0, step=1, limit=4
    $region2: #{fwd.1} parent=1 // loop_pre_header
      _
    $region3: #{fwd.1} parent=1 // loop_header
      %s18 = sphi 0, %s22
      %p19 = scmp.ge.s32.totalorder %s18, 4
      %s28 = sphi 0, %s30
      %s31 = sphi 0, %s28
      %s32 = sphi 0, %s31
      %s48 = sphi 0, %s32
      %s52 = sphi 0, %s52
      %s54 = sphi 0, %s52
      %s55 = sphi 0, %s54
      %s69 = sphi 0, %s55
      %s73 = sphi 0, %s73
      %s75 = sphi 0, %s73
      %s76 = sphi 0, %s75
      %s90 = sphi 0, %s76
      %s94 = sphi 0, %s94
      %s96 = sphi 0, %s94
      %s97 = sphi 0, %s96
      %s111 = sphi 0, %s97
      %s117 = sphi 0, %s119
      %s120 = sphi 0, %s117
      %s121 = sphi 0, %s120
      %s137 = sphi 0, %s121
    $region4: #{fwd.1} parent=1 // loop_header_branch
      %21 = sbr.rel (%p19) target = $region8
    $region5: #{fwd.1} parent=1 // loop_body
      %s23 = ssub.s32 %s18, 1
      %s24 = ssub.s32 %s18, 2
      %s25 = sadd.s32 %s18, 1
      %s26 = ssub.s32 %s18, %s25
      %p27 = scmp.eq.s32.totalorder %s26, 0
      %s29 = sadd.s32 %s28, 1
      %s30 = scalar_select %p27, %s28, %s29
      %p33 = pneg %p27
      %p34 = scmp.eq.s32.totalorder %s18, 1
      %p35 = por %p33, %p34
      %p36 = scmp.ne.s32.totalorder %s28, %s31
      %p37 = scmp.eq.s32.totalorder %s18, 0
      %p38 = por %p36, %p37
      %p39 = scmp.ne.s32.totalorder %s28, %s31
      %p40 = scmp.eq.s32.totalorder %s23, 1
      %p41 = por %p39, %p40
      %p42 = scmp.ne.s32.totalorder %s31, %s32
      %p43 = scmp.eq.s32.totalorder %s23, 0
      %p44 = por %p42, %p43
      %p45 = scmp.ne.s32.totalorder %s31, %s32
      %p46 = scmp.eq.s32.totalorder %s24, 1
      %p47 = por %p45, %p46
      %p49 = scmp.ne.s32.totalorder %s32, %s48
      %p50 = scmp.eq.s32.totalorder %s24, 0
      %p51 = por %p49, %p50
      %s53 = sadd.s32 %s52, 1
      %p56 = scmp.eq.s32.totalorder %s18, 1
      %p57 = scmp.ne.s32.totalorder %s52, %s54
      %p58 = scmp.eq.s32.totalorder %s18, 0
      %p59 = por %p57, %p58
      %p60 = scmp.ne.s32.totalorder %s52, %s54
      %p61 = scmp.eq.s32.totalorder %s23, 1
      %p62 = por %p60, %p61
      %p63 = scmp.ne.s32.totalorder %s54, %s55
      %p64 = scmp.eq.s32.totalorder %s23, 0
      %p65 = por %p63, %p64
      %p66 = scmp.ne.s32.totalorder %s54, %s55
      %p67 = scmp.eq.s32.totalorder %s24, 1
      %p68 = por %p66, %p67
      %p70 = scmp.ne.s32.totalorder %s55, %s69
      %p71 = scmp.eq.s32.totalorder %s24, 0
      %p72 = por %p70, %p71
      %s74 = sadd.s32 %s73, 1
      %p77 = scmp.eq.s32.totalorder %s18, 1
      %p78 = scmp.ne.s32.totalorder %s73, %s75
      %p79 = scmp.eq.s32.totalorder %s18, 0
      %p80 = por %p78, %p79
      %p81 = scmp.ne.s32.totalorder %s73, %s75
      %p82 = scmp.eq.s32.totalorder %s23, 1
      %p83 = por %p81, %p82
      %p84 = scmp.ne.s32.totalorder %s75, %s76
      %p85 = scmp.eq.s32.totalorder %s23, 0
      %p86 = por %p84, %p85
      %p87 = scmp.ne.s32.totalorder %s75, %s76
      %p88 = scmp.eq.s32.totalorder %s24, 1
      %p89 = por %p87, %p88
      %p91 = scmp.ne.s32.totalorder %s76, %s90
      %p92 = scmp.eq.s32.totalorder %s24, 0
      %p93 = por %p91, %p92
      %s95 = sadd.s32 %s94, 1
      %p98 = scmp.eq.s32.totalorder %s18, 1
      %p99 = scmp.ne.s32.totalorder %s94, %s96
      %p100 = scmp.eq.s32.totalorder %s18, 0
      %p101 = por %p99, %p100
      %p102 = scmp.ne.s32.totalorder %s94, %s96
      %p103 = scmp.eq.s32.totalorder %s23, 1
      %p104 = por %p102, %p103
      %p105 = scmp.ne.s32.totalorder %s96, %s97
      %p106 = scmp.eq.s32.totalorder %s23, 0
      %p107 = por %p105, %p106
      %p108 = scmp.ne.s32.totalorder %s96, %s97
      %p109 = scmp.eq.s32.totalorder %s24, 1
      %p110 = por %p108, %p109
      %p112 = scmp.ne.s32.totalorder %s97, %s111
      %p113 = scmp.eq.s32.totalorder %s24, 0
      %p114 = por %p112, %p113
      %s115 = ssub.s32 %s18, %s25
      %p116 = scmp.eq.s32.totalorder %s115, 0
      %s118 = sadd.s32 %s117, 1
      %s119 = scalar_select %p116, %s117, %s118
      %p122 = pneg %p116
      %p123 = scmp.eq.s32.totalorder %s18, 1
      %p124 = por %p122, %p123
      %p125 = scmp.ne.s32.totalorder %s117, %s120
      %p126 = scmp.eq.s32.totalorder %s18, 0
      %p127 = por %p125, %p126
      %p128 = scmp.ne.s32.totalorder %s117, %s120
      %p129 = scmp.eq.s32.totalorder %s23, 1
      %p130 = por %p128, %p129
      %p131 = scmp.ne.s32.totalorder %s120, %s121
      %p132 = scmp.eq.s32.totalorder %s23, 0
      %p133 = por %p131, %p132
      %p134 = scmp.ne.s32.totalorder %s120, %s121
      %p135 = scmp.eq.s32.totalorder %s24, 1
      %p136 = por %p134, %p135
      %p138 = scmp.ne.s32.totalorder %s121, %s137
      %p139 = scmp.eq.s32.totalorder %s24, 0
      %p140 = por %p138, %p139
      %p141 = scmp.le.s32.totalorder 1, %s18
      %p142 = scmp.lt.s32.totalorder %s18, 3
      %p143 = pnand %p141, %p142
      %p144 = pneg %p143
      // Predicated region
      $region9: #{fwd.1} parent=5 // pred_check
        _
      $region10: #{fwd.1} parent=5 // pred_check_branch
        %146 = sbr.rel (%p143) target = $region12
      $region11: #{fwd.1} parent=5 // pred_region
        %s147 = ssub.s32 %s18, 1
        // Predicated region
        $region13: #{fwd.1} parent=11 // pred_check
          %p148 = pneg %p65
        $region14: #{fwd.1} parent=11 // pred_check_branch
          %150 = sbr.rel (%p148) target = $region16
        $region15: #{fwd.1} parent=11 // pred_region
          %s152 = ssub.s32 52224, 52224
          %153 = vsyncadd [#allocation6], %s152
          %s154 = sshll.u32 [#allocation5], 4
          %s155 = int_to_ptr.vmem [resolvable:$true] %s154
          %160 = dma.hbm_to_vmem [thread:$0]  %s1, 52224, %s155, [#allocation6], 192, 192, 12
        $region16: #{fwd.1} parent=11 // pred_fallthru
          _
        // Predicated region
        $region17: #{fwd.1} parent=11 // pred_check
          %p161 = pneg %p86
        $region18: #{fwd.1} parent=11 // pred_check_branch
          %163 = sbr.rel (%p161) target = $region20
        $region19: #{fwd.1} parent=11 // pred_region
          %s165 = ssub.s32 18432, 18432
          %166 = vsyncadd [#allocation6], %s165
          %s167 = sshll.u32 [#allocation7], 4
          %s168 = int_to_ptr.vmem [resolvable:$true] %s167
          %173 = dma.hbm_to_vmem [thread:$0]  %s2, 18432, %s168, [#allocation6], 384, 384, 24
        $region20: #{fwd.1} parent=11 // pred_fallthru
          _
        // Predicated region
        $region21: #{fwd.1} parent=11 // pred_check
          %p174 = pneg %p107
        $region22: #{fwd.1} parent=11 // pred_check_branch
          %176 = sbr.rel (%p174) target = $region24
        $region23: #{fwd.1} parent=11 // pred_region
          %s178 = ssub.s32 1536, 1536
          %179 = vsyncadd [#allocation9], %s178
          %s180 = sshll.u32 [#allocation8], 4
          %s181 = int_to_ptr.vmem [resolvable:$true] %s180
          %186 = dma.hbm_to_vmem [thread:$0]  %s3, 1536, %s181, [#allocation9], 768, 768, 48
        $region24: #{fwd.1} parent=11 // pred_fallthru
          _
      $region12: #{fwd.1} parent=5 // pred_fallthru
        _
      %p187 = scmp.lt.s32.totalorder %s18, 2
      // Predicated region
      $region25: #{fwd.1} parent=5 // pred_check
        %p188 = pneg %p187
      $region26: #{fwd.1} parent=5 // pred_check_branch
        %190 = sbr.rel (%p188) target = $region28
      $region27: #{fwd.1} parent=5 // pred_region
        // Predicated region
        $region29: #{fwd.1} parent=27 // pred_check
          %p191 = pneg %p38
        $region30: #{fwd.1} parent=27 // pred_check_branch
          %193 = sbr.rel (%p191) target = $region32
        $region31: #{fwd.1} parent=27 // pred_region
          %s194 = sand.u32 %s28, 1
          %s195 = scalar_lea.sflag [#allocation3], %s194
          %s196 = sand.u32 %s28, 1
          %s197 = smul.addr %s196, 384
          %s198 = scalar_lea.vmem [#allocation2], %s197
          %s199 = smul.u32 16, %s18
          %s201 = ssub.s32 6144, 6144
          %202 = vsyncadd %s195, %s201
          %s203 = smul.addr %s199, 6
          %s204 = smul.addr %s203, 64
          %s205 = scalar_lea.hbm %s0, %s204
          %s206 = sshll.u32 %s198, 4
          %s207 = int_to_ptr.vmem [resolvable:$true] %s206
          %212 = dma.hbm_to_vmem [thread:$0]  %s205, 6144, %s207, %s195, 384, 384, 24
        $region32: #{fwd.1} parent=27 // pred_fallthru
          _
      $region28: #{fwd.1} parent=5 // pred_fallthru
        _
      %p213 = scmp.le.s32.totalorder 1, %s18
      %p214 = scmp.lt.s32.totalorder %s18, 3
      %p215 = pnand %p213, %p214
      %p216 = pneg %p215
      // Predicated region
      $region33: #{fwd.1} parent=5 // pred_check
        _
      $region34: #{fwd.1} parent=5 // pred_check_branch
        %218 = sbr.rel (%p215) target = $region36
      $region35: #{fwd.1} parent=5 // pred_region
        %s219 = ssub.s32 %s18, 1
        %s220 = sand.u32 %s31, 1
        %s221 = scalar_lea.sflag [#allocation3], %s220
        %s222 = sand.u32 %s31, 1
        %s223 = smul.addr %s222, 384
        %s224 = scalar_lea.vmem [#allocation2], %s223
        // Predicated region
        $region37: #{fwd.1} parent=35 // pred_check
          %p225 = pneg %p44
        $region38: #{fwd.1} parent=35 // pred_check_branch
          %227 = sbr.rel (%p225) target = $region40
        $region39: #{fwd.1} parent=35 // pred_region
          %228 = dma.done %s221, 6144
        $region40: #{fwd.1} parent=35 // pred_fallthru
          _
        // Predicated region
        $region41: #{fwd.1} parent=35 // pred_check
          %p229 = pneg %p65
        $region42: #{fwd.1} parent=35 // pred_check_branch
          %231 = sbr.rel (%p229) target = $region44
        $region43: #{fwd.1} parent=35 // pred_region
          %232 = dma.done [#allocation6], 52224
        $region44: #{fwd.1} parent=35 // pred_fallthru
          _
        // Predicated region
        $region45: #{fwd.1} parent=35 // pred_check
          %p233 = pneg %p86
        $region46: #{fwd.1} parent=35 // pred_check_branch
          %235 = sbr.rel (%p233) target = $region48
        $region47: #{fwd.1} parent=35 // pred_region
          %236 = dma.done [#allocation6], 18432
        $region48: #{fwd.1} parent=35 // pred_fallthru
          _
        // Predicated region
        $region49: #{fwd.1} parent=35 // pred_check
          %p237 = pneg %p107
        $region50: #{fwd.1} parent=35 // pred_check_branch
          %239 = sbr.rel (%p237) target = $region52
        $region51: #{fwd.1} parent=35 // pred_region
          %240 = dma.done [#allocation9], 1536
        $region52: #{fwd.1} parent=35 // pred_fallthru
          _
        %s241 = sand.u32 %s31, 1
        %s242 = scalar_lea.sflag [#allocation3], %s241
        %s243 = sand.u32 %s31, 1
        %s244 = smul.addr %s243, 384
        %s245 = scalar_lea.vmem [#allocation2], %s244
        %p246 = pneg %p44
        %p247 = pneg %p41
        %p248 = pneg %p65
        %p249 = pneg %p62
        %p250 = pneg %p86
        %p251 = pneg %p83
        %p252 = pneg %p107
        %p253 = pneg %p104
        %p254 = pneg %p133
        %p255 = pneg %p130
        %s256 = sand.u32 %s120, 1
        %s257 = scalar_lea.sflag [#allocation4], %s256
        %s258 = sand.u32 %s120, 1
        %s259 = smul.addr %s258, 384
        %s260 = scalar_lea.vmem [#allocation10], %s259
        %s261 = smul.u32 16, %s23
        %s262 = smul.u32 16, %s23
        %v264 = vld [vmem:[%s224] sm:$0xff]
        %v265 = vld [vmem:[%s224 + $0x8] sm:$0xff]
        %v266 = vld [vmem:[%s224 + $0x10] sm:$0xff]
        %v267 = vld [vmem:[%s224 + $0x18] sm:$0xff]
        %v268 = vld [vmem:[%s224 + $0x20] sm:$0xff]
        %v269 = vld [vmem:[%s224 + $0x28] sm:$0xff]
        %v270 = vld [vmem:[%s224 + $0x30] sm:$0xff]
        %v271 = vld [vmem:[%s224 + $0x38] sm:$0xff]
        %v272 = vld [vmem:[%s224 + $0x40] sm:$0xff]
        %v273 = vld [vmem:[%s224 + $0x48] sm:$0xff]
        %v274 = vld [vmem:[%s224 + $0x50] sm:$0xff]
        %v275 = vld [vmem:[%s224 + $0x58] sm:$0xff]
        %v276 = vld [vmem:[%s224 + $0x60] sm:$0xff]
        %v277 = vld [vmem:[%s224 + $0x68] sm:$0xff]
        %v278 = vld [vmem:[%s224 + $0x70] sm:$0xff]
        %v279 = vld [vmem:[%s224 + $0x78] sm:$0xff]
        %v280 = vld [vmem:[%s224 + $0x80] sm:$0xff]
        %v281 = vld [vmem:[%s224 + $0x88] sm:$0xff]
        %v282 = vld [vmem:[%s224 + $0x90] sm:$0xff]
        %v283 = vld [vmem:[%s224 + $0x98] sm:$0xff]
        %v284 = vld [vmem:[%s224 + $0xa0] sm:$0xff]
        %v285 = vld [vmem:[%s224 + $0xa8] sm:$0xff]
        %v286 = vld [vmem:[%s224 + $0xb0] sm:$0xff]
        %v287 = vld [vmem:[%s224 + $0xb8] sm:$0xff]
        %v288 = vld [vmem:[%s224 + $0xc0] sm:$0xff]
        %v289 = vld [vmem:[%s224 + $0xc8] sm:$0xff]
        %v290 = vld [vmem:[%s224 + $0xd0] sm:$0xff]
        %v291 = vld [vmem:[%s224 + $0xd8] sm:$0xff]
        %v292 = vld [vmem:[%s224 + $0xe0] sm:$0xff]
        %v293 = vld [vmem:[%s224 + $0xe8] sm:$0xff]
        %v294 = vld [vmem:[%s224 + $0xf0] sm:$0xff]
        %v295 = vld [vmem:[%s224 + $0xf8] sm:$0xff]
        %v296 = vld [vmem:[%s224 + $0x100] sm:$0xff]
        %v297 = vld [vmem:[%s224 + $0x108] sm:$0xff]
        %v298 = vld [vmem:[%s224 + $0x110] sm:$0xff]
        %v299 = vld [vmem:[%s224 + $0x118] sm:$0xff]
        %v300 = vld [vmem:[%s224 + $0x120] sm:$0xff]
        %v301 = vld [vmem:[%s224 + $0x128] sm:$0xff]
        %v302 = vld [vmem:[%s224 + $0x130] sm:$0xff]
        %v303 = vld [vmem:[%s224 + $0x138] sm:$0xff]
        %v304 = vld [vmem:[%s224 + $0x140] sm:$0xff]
        %v305 = vld [vmem:[%s224 + $0x148] sm:$0xff]
        %v306 = vld [vmem:[%s224 + $0x150] sm:$0xff]
        %v307 = vld [vmem:[%s224 + $0x158] sm:$0xff]
        %v308 = vld [vmem:[%s224 + $0x160] sm:$0xff]
        %v309 = vld [vmem:[%s224 + $0x168] sm:$0xff]
        %v310 = vld [vmem:[%s224 + $0x170] sm:$0xff]
        %v311 = vld [vmem:[%s224 + $0x178] sm:$0xff]
        %v312 = vld [vmem:[#allocation5] sm:$0xff]
        %v313 = vld [vmem:[#allocation5 + $0x8] sm:$0xf]
        %v314 = vld [vmem:[#allocation5 + $0xc] sm:$0xff]
        %v315 = vld [vmem:[#allocation5 + $0x14] sm:$0xf]
        %v316 = vld [vmem:[#allocation5 + $0x18] sm:$0xff]
        %v317 = vld [vmem:[#allocation5 + $0x20] sm:$0xf]
        %v318 = vld [vmem:[#allocation5 + $0x24] sm:$0xff]
        %v319 = vld [vmem:[#allocation5 + $0x2c] sm:$0xf]
        %v320 = vld [vmem:[#allocation5 + $0x30] sm:$0xff]
        %v321 = vld [vmem:[#allocation5 + $0x38] sm:$0xf]
        %v322 = vld [vmem:[#allocation5 + $0x3c] sm:$0xff]
        %v323 = vld [vmem:[#allocation5 + $0x44] sm:$0xf]
        %v324 = vld [vmem:[#allocation5 + $0x48] sm:$0xff]
        %v325 = vld [vmem:[#allocation5 + $0x50] sm:$0xf]
        %v326 = vld [vmem:[#allocation5 + $0x54] sm:$0xff]
        %v327 = vld [vmem:[#allocation5 + $0x5c] sm:$0xf]
        %v328 = vld [vmem:[#allocation5 + $0x60] sm:$0xff]
        %v329 = vld [vmem:[#allocation5 + $0x68] sm:$0xf]
        %v330 = vld [vmem:[#allocation5 + $0x6c] sm:$0xff]
        %v331 = vld [vmem:[#allocation5 + $0x74] sm:$0xf]
        %v332 = vld [vmem:[#allocation5 + $0x78] sm:$0xff]
        %v333 = vld [vmem:[#allocation5 + $0x80] sm:$0xf]
        %v334 = vld [vmem:[#allocation5 + $0x84] sm:$0xff]
        %v335 = vld [vmem:[#allocation5 + $0x8c] sm:$0xf]
        %v336 = vld [vmem:[#allocation5 + $0x90] sm:$0xff]
        %v337 = vld [vmem:[#allocation5 + $0x98] sm:$0xf]
        %v338 = vld [vmem:[#allocation5 + $0x9c] sm:$0xff]
        %v339 = vld [vmem:[#allocation5 + $0xa4] sm:$0xf]
        %v340 = vld [vmem:[#allocation5 + $0xa8] sm:$0xff]
        %v341 = vld [vmem:[#allocation5 + $0xb0] sm:$0xf]
        %v342 = vld [vmem:[#allocation5 + $0xb4] sm:$0xff]
        %v343 = vld [vmem:[#allocation5 + $0xbc] sm:$0xf]
        %v344 = vld [vmem:[#allocation5 + $0xc0] sm:$0xff]
        %v345 = vld [vmem:[#allocation5 + $0xc8] sm:$0xf]
        %v346 = vld [vmem:[#allocation5 + $0xcc] sm:$0xff]
        %v347 = vld [vmem:[#allocation5 + $0xd4] sm:$0xf]
        %v348 = vld [vmem:[#allocation5 + $0xd8] sm:$0xff]
        %v349 = vld [vmem:[#allocation5 + $0xe0] sm:$0xf]
        %v350 = vld [vmem:[#allocation5 + $0xe4] sm:$0xff]
        %v351 = vld [vmem:[#allocation5 + $0xec] sm:$0xf]
        %v352 = vld [vmem:[#allocation5 + $0xf0] sm:$0xff]
        %v353 = vld [vmem:[#allocation5 + $0xf8] sm:$0xf]
        %v354 = vld [vmem:[#allocation5 + $0xfc] sm:$0xff]
        %v355 = vld [vmem:[#allocation5 + $0x104] sm:$0xf]
        %v356 = vld [vmem:[#allocation5 + $0x108] sm:$0xff]
        %v357 = vld [vmem:[#allocation5 + $0x110] sm:$0xf]
        %v358 = vld [vmem:[#allocation5 + $0x114] sm:$0xff]
        %v359 = vld [vmem:[#allocation5 + $0x11c] sm:$0xf]
        %v360 = vld [vmem:[#allocation5 + $0x120] sm:$0xff]
        %v361 = vld [vmem:[#allocation5 + $0x128] sm:$0xf]
        %v362 = vld [vmem:[#allocation5 + $0x12c] sm:$0xff]
        %v363 = vld [vmem:[#allocation5 + $0x134] sm:$0xf]
        %v364 = vld [vmem:[#allocation5 + $0x138] sm:$0xff]
        %v365 = vld [vmem:[#allocation5 + $0x140] sm:$0xf]
        %v366 = vld [vmem:[#allocation5 + $0x144] sm:$0xff]
        %v367 = vld [vmem:[#allocation5 + $0x14c] sm:$0xf]
        %v368 = vld [vmem:[#allocation5 + $0x150] sm:$0xff]
        %v369 = vld [vmem:[#allocation5 + $0x158] sm:$0xf]
        %v370 = vld [vmem:[#allocation5 + $0x15c] sm:$0xff]
        %v371 = vld [vmem:[#allocation5 + $0x164] sm:$0xf]
        %v372 = vld [vmem:[#allocation5 + $0x168] sm:$0xff]
        %v373 = vld [vmem:[#allocation5 + $0x170] sm:$0xf]
        %v374 = vld [vmem:[#allocation5 + $0x174] sm:$0xff]
        %v375 = vld [vmem:[#allocation5 + $0x17c] sm:$0xf]
        %v376 = vld [vmem:[#allocation5 + $0x180] sm:$0xff]
        %v377 = vld [vmem:[#allocation5 + $0x188] sm:$0xf]
        %v378 = vld [vmem:[#allocation5 + $0x18c] sm:$0xff]
        %v379 = vld [vmem:[#allocation5 + $0x194] sm:$0xf]
        %v380 = vld [vmem:[#allocation5 + $0x198] sm:$0xff]
        %v381 = vld [vmem:[#allocation5 + $0x1a0] sm:$0xf]
        %v382 = vld [vmem:[#allocation5 + $0x1a4] sm:$0xff]
        %v383 = vld [vmem:[#allocation5 + $0x1ac] sm:$0xf]
        %v384 = vld [vmem:[#allocation5 + $0x1b0] sm:$0xff]
        %v385 = vld [vmem:[#allocation5 + $0x1b8] sm:$0xf]
        %v386 = vld [vmem:[#allocation5 + $0x1bc] sm:$0xff]
        %v387 = vld [vmem:[#allocation5 + $0x1c4] sm:$0xf]
        %v388 = vld [vmem:[#allocation5 + $0x1c8] sm:$0xff]
        %v389 = vld [vmem:[#allocation5 + $0x1d0] sm:$0xf]
        %v390 = vld [vmem:[#allocation5 + $0x1d4] sm:$0xff]
        %v391 = vld [vmem:[#allocation5 + $0x1dc] sm:$0xf]
        %v392 = vld [vmem:[#allocation5 + $0x1e0] sm:$0xff]
        %v393 = vld [vmem:[#allocation5 + $0x1e8] sm:$0xf]
        %v394 = vld [vmem:[#allocation5 + $0x1ec] sm:$0xff]
        %v395 = vld [vmem:[#allocation5 + $0x1f4] sm:$0xf]
        %v396 = vld [vmem:[#allocation5 + $0x1f8] sm:$0xff]
        %v397 = vld [vmem:[#allocation5 + $0x200] sm:$0xf]
        %v398 = vld [vmem:[#allocation5 + $0x204] sm:$0xff]
        %v399 = vld [vmem:[#allocation5 + $0x20c] sm:$0xf]
        %v400 = vld [vmem:[#allocation5 + $0x210] sm:$0xff]
        %v401 = vld [vmem:[#allocation5 + $0x218] sm:$0xf]
        %v402 = vld [vmem:[#allocation5 + $0x21c] sm:$0xff]
        %v403 = vld [vmem:[#allocation5 + $0x224] sm:$0xf]
        %v404 = vld [vmem:[#allocation5 + $0x228] sm:$0xff]
        %v405 = vld [vmem:[#allocation5 + $0x230] sm:$0xf]
        %v406 = vld [vmem:[#allocation5 + $0x234] sm:$0xff]
        %v407 = vld [vmem:[#allocation5 + $0x23c] sm:$0xf]
        %v408 = vld [vmem:[#allocation5 + $0x240] sm:$0xff]
        %v409 = vld [vmem:[#allocation5 + $0x248] sm:$0xf]
        %v410 = vld [vmem:[#allocation5 + $0x24c] sm:$0xff]
        %v411 = vld [vmem:[#allocation5 + $0x254] sm:$0xf]
        %v412 = vld [vmem:[#allocation5 + $0x258] sm:$0xff]
        %v413 = vld [vmem:[#allocation5 + $0x260] sm:$0xf]
        %v414 = vld [vmem:[#allocation5 + $0x264] sm:$0xff]
        %v415 = vld [vmem:[#allocation5 + $0x26c] sm:$0xf]
        %v416 = vld [vmem:[#allocation5 + $0x270] sm:$0xff]
        %v417 = vld [vmem:[#allocation5 + $0x278] sm:$0xf]
        %v418 = vld [vmem:[#allocation5 + $0x27c] sm:$0xff]
        %v419 = vld [vmem:[#allocation5 + $0x284] sm:$0xf]
        %v420 = vld [vmem:[#allocation5 + $0x288] sm:$0xff]
        %v421 = vld [vmem:[#allocation5 + $0x290] sm:$0xf]
        %v422 = vld [vmem:[#allocation5 + $0x294] sm:$0xff]
        %v423 = vld [vmem:[#allocation5 + $0x29c] sm:$0xf]
        %v424 = vld [vmem:[#allocation5 + $0x2a0] sm:$0xff]
        %v425 = vld [vmem:[#allocation5 + $0x2a8] sm:$0xf]
        %v426 = vld [vmem:[#allocation5 + $0x2ac] sm:$0xff]
        %v427 = vld [vmem:[#allocation5 + $0x2b4] sm:$0xf]
        %v428 = vld [vmem:[#allocation5 + $0x2b8] sm:$0xff]
        %v429 = vld [vmem:[#allocation5 + $0x2c0] sm:$0xf]
        %v430 = vld [vmem:[#allocation5 + $0x2c4] sm:$0xff]
        %v431 = vld [vmem:[#allocation5 + $0x2cc] sm:$0xf]
        %v432 = vld [vmem:[#allocation5 + $0x2d0] sm:$0xff]
        %v433 = vld [vmem:[#allocation5 + $0x2d8] sm:$0xf]
        %v434 = vld [vmem:[#allocation5 + $0x2dc] sm:$0xff]
        %v435 = vld [vmem:[#allocation5 + $0x2e4] sm:$0xf]
        %v436 = vld [vmem:[#allocation5 + $0x2e8] sm:$0xff]
        %v437 = vld [vmem:[#allocation5 + $0x2f0] sm:$0xf]
        %v438 = vld [vmem:[#allocation5 + $0x2f4] sm:$0xff]
        %v439 = vld [vmem:[#allocation5 + $0x2fc] sm:$0xf]
        %v440 = vld [vmem:[#allocation5 + $0x300] sm:$0xff]
        %v441 = vld [vmem:[#allocation5 + $0x308] sm:$0xf]
        %v442 = vld [vmem:[#allocation5 + $0x30c] sm:$0xff]
        %v443 = vld [vmem:[#allocation5 + $0x314] sm:$0xf]
        %v444 = vld [vmem:[#allocation5 + $0x318] sm:$0xff]
        %v445 = vld [vmem:[#allocation5 + $0x320] sm:$0xf]
        %v446 = vld [vmem:[#allocation5 + $0x324] sm:$0xff]
        %v447 = vld [vmem:[#allocation5 + $0x32c] sm:$0xf]
        %v448 = vld [vmem:[#allocation5 + $0x330] sm:$0xff]
        %v449 = vld [vmem:[#allocation5 + $0x338] sm:$0xf]
        %v450 = vld [vmem:[#allocation5 + $0x33c] sm:$0xff]
        %v451 = vld [vmem:[#allocation5 + $0x344] sm:$0xf]
        %v452 = vld [vmem:[#allocation5 + $0x348] sm:$0xff]
        %v453 = vld [vmem:[#allocation5 + $0x350] sm:$0xf]
        %v454 = vld [vmem:[#allocation5 + $0x354] sm:$0xff]
        %v455 = vld [vmem:[#allocation5 + $0x35c] sm:$0xf]
        %v456 = vld [vmem:[#allocation5 + $0x360] sm:$0xff]
        %v457 = vld [vmem:[#allocation5 + $0x368] sm:$0xf]
        %v458 = vld [vmem:[#allocation5 + $0x36c] sm:$0xff]
        %v459 = vld [vmem:[#allocation5 + $0x374] sm:$0xf]
        %v460 = vld [vmem:[#allocation5 + $0x378] sm:$0xff]
        %v461 = vld [vmem:[#allocation5 + $0x380] sm:$0xf]
        %v462 = vld [vmem:[#allocation5 + $0x384] sm:$0xff]
        %v463 = vld [vmem:[#allocation5 + $0x38c] sm:$0xf]
        %v464 = vld [vmem:[#allocation5 + $0x390] sm:$0xff]
        %v465 = vld [vmem:[#allocation5 + $0x398] sm:$0xf]
        %v466 = vld [vmem:[#allocation5 + $0x39c] sm:$0xff]
        %v467 = vld [vmem:[#allocation5 + $0x3a4] sm:$0xf]
        %v468 = vld [vmem:[#allocation5 + $0x3a8] sm:$0xff]
        %v469 = vld [vmem:[#allocation5 + $0x3b0] sm:$0xf]
        %v470 = vld [vmem:[#allocation5 + $0x3b4] sm:$0xff]
        %v471 = vld [vmem:[#allocation5 + $0x3bc] sm:$0xf]
        %v472 = vld [vmem:[#allocation5 + $0x3c0] sm:$0xff]
        %v473 = vld [vmem:[#allocation5 + $0x3c8] sm:$0xf]
        %v474 = vld [vmem:[#allocation5 + $0x3cc] sm:$0xff]
        %v475 = vld [vmem:[#allocation5 + $0x3d4] sm:$0xf]
        %v476 = vld [vmem:[#allocation5 + $0x3d8] sm:$0xff]
        %v477 = vld [vmem:[#allocation5 + $0x3e0] sm:$0xf]
        %v478 = vld [vmem:[#allocation5 + $0x3e4] sm:$0xff]
        %v479 = vld [vmem:[#allocation5 + $0x3ec] sm:$0xf]
        %v480 = vld [vmem:[#allocation5 + $0x3f0] sm:$0xff]
        %v481 = vld [vmem:[#allocation5 + $0x3f8] sm:$0xf]
        %v482 = vld [vmem:[#allocation5 + $0x3fc] sm:$0xff]
        %v483 = vld [vmem:[#allocation5 + $0x404] sm:$0xf]
        %v484 = vld [vmem:[#allocation5 + $0x408] sm:$0xff]
        %v485 = vld [vmem:[#allocation5 + $0x410] sm:$0xf]
        %v486 = vld [vmem:[#allocation5 + $0x414] sm:$0xff]
        %v487 = vld [vmem:[#allocation5 + $0x41c] sm:$0xf]
        %v488 = vld [vmem:[#allocation5 + $0x420] sm:$0xff]
        %v489 = vld [vmem:[#allocation5 + $0x428] sm:$0xf]
        %v490 = vld [vmem:[#allocation5 + $0x42c] sm:$0xff]
        %v491 = vld [vmem:[#allocation5 + $0x434] sm:$0xf]
        %v492 = vld [vmem:[#allocation5 + $0x438] sm:$0xff]
        %v493 = vld [vmem:[#allocation5 + $0x440] sm:$0xf]
        %v494 = vld [vmem:[#allocation5 + $0x444] sm:$0xff]
        %v495 = vld [vmem:[#allocation5 + $0x44c] sm:$0xf]
        %v496 = vld [vmem:[#allocation5 + $0x450] sm:$0xff]
        %v497 = vld [vmem:[#allocation5 + $0x458] sm:$0xf]
        %v498 = vld [vmem:[#allocation5 + $0x45c] sm:$0xff]
        %v499 = vld [vmem:[#allocation5 + $0x464] sm:$0xf]
        %v500 = vld [vmem:[#allocation5 + $0x468] sm:$0xff]
        %v501 = vld [vmem:[#allocation5 + $0x470] sm:$0xf]
        %v502 = vld [vmem:[#allocation5 + $0x474] sm:$0xff]
        %v503 = vld [vmem:[#allocation5 + $0x47c] sm:$0xf]
        %v504 = vld [vmem:[#allocation8] ss:$8 sm:$0x7]
        %v506 = vlaneseq
        %v507 = vshrl.u32 %v506, 7
        %v508 = vsub.s32 0, %v507
        %v509 = vrot.slane %v504, %v508
        %v510 = vlaneseq
        %v511 = vshrl.u32 %v510, 7
        %v512 = vsub.s32 1, %v511
        %v513 = vrot.slane %v504, %v512
        %v514 = vlaneseq
        %v515 = vshrl.u32 %v514, 7
        %v516 = vsub.s32 2, %v515
        %v517 = vrot.slane %v504, %v516
        %v569 = vunpack.c.l.b16 %v264
        %v570 = vunpack.c.h.b16 %v264
        %v571 = vunpack.c.l.b16 %v265
        %v572 = vunpack.c.h.b16 %v265
        %v573 = vunpack.c.l.b16 %v266
        %v574 = vunpack.c.h.b16 %v266
        %v575 = vunpack.c.l.b16 %v267
        %v576 = vunpack.c.h.b16 %v267
        %v577 = vunpack.c.l.b16 %v268
        %v578 = vunpack.c.h.b16 %v268
        %v579 = vunpack.c.l.b16 %v269
        %v580 = vunpack.c.h.b16 %v269
        %v581 = vunpack.c.l.b16 %v270
        %v582 = vunpack.c.h.b16 %v270
        %v583 = vunpack.c.l.b16 %v271
        %v584 = vunpack.c.h.b16 %v271
        %v585 = vunpack.c.l.b16 %v272
        %v586 = vunpack.c.h.b16 %v272
        %v587 = vunpack.c.l.b16 %v273
        %v588 = vunpack.c.h.b16 %v273
        %v589 = vunpack.c.l.b16 %v274
        %v590 = vunpack.c.h.b16 %v274
        %v591 = vunpack.c.l.b16 %v275
        %v592 = vunpack.c.h.b16 %v275
        %v593 = vunpack.c.l.b16 %v276
        %v594 = vunpack.c.h.b16 %v276
        %v595 = vunpack.c.l.b16 %v277
        %v596 = vunpack.c.h.b16 %v277
        %v597 = vunpack.c.l.b16 %v278
        %v598 = vunpack.c.h.b16 %v278
        %v599 = vunpack.c.l.b16 %v279
        %v600 = vunpack.c.h.b16 %v279
        %v601 = vunpack.c.l.b16 %v280
        %v602 = vunpack.c.h.b16 %v280
        %v603 = vunpack.c.l.b16 %v281
        %v604 = vunpack.c.h.b16 %v281
        %v605 = vunpack.c.l.b16 %v282
        %v606 = vunpack.c.h.b16 %v282
        %v607 = vunpack.c.l.b16 %v283
        %v608 = vunpack.c.h.b16 %v283
        %v609 = vunpack.c.l.b16 %v284
        %v610 = vunpack.c.h.b16 %v284
        %v611 = vunpack.c.l.b16 %v285
        %v612 = vunpack.c.h.b16 %v285
        %v613 = vunpack.c.l.b16 %v286
        %v614 = vunpack.c.h.b16 %v286
        %v615 = vunpack.c.l.b16 %v287
        %v616 = vunpack.c.h.b16 %v287
        %v617 = vunpack.c.l.b16 %v288
        %v618 = vunpack.c.h.b16 %v288
        %v619 = vunpack.c.l.b16 %v289
        %v620 = vunpack.c.h.b16 %v289
        %v621 = vunpack.c.l.b16 %v290
        %v622 = vunpack.c.h.b16 %v290
        %v623 = vunpack.c.l.b16 %v291
        %v624 = vunpack.c.h.b16 %v291
        %v625 = vunpack.c.l.b16 %v292
        %v626 = vunpack.c.h.b16 %v292
        %v627 = vunpack.c.l.b16 %v293
        %v628 = vunpack.c.h.b16 %v293
        %v629 = vunpack.c.l.b16 %v294
        %v630 = vunpack.c.h.b16 %v294
        %v631 = vunpack.c.l.b16 %v295
        %v632 = vunpack.c.h.b16 %v295
        %v633 = vunpack.c.l.b16 %v296
        %v634 = vunpack.c.h.b16 %v296
        %v635 = vunpack.c.l.b16 %v297
        %v636 = vunpack.c.h.b16 %v297
        %v637 = vunpack.c.l.b16 %v298
        %v638 = vunpack.c.h.b16 %v298
        %v639 = vunpack.c.l.b16 %v299
        %v640 = vunpack.c.h.b16 %v299
        %v641 = vunpack.c.l.b16 %v300
        %v642 = vunpack.c.h.b16 %v300
        %v643 = vunpack.c.l.b16 %v301
        %v644 = vunpack.c.h.b16 %v301
        %v645 = vunpack.c.l.b16 %v302
        %v646 = vunpack.c.h.b16 %v302
        %v647 = vunpack.c.l.b16 %v303
        %v648 = vunpack.c.h.b16 %v303
        %v649 = vunpack.c.l.b16 %v304
        %v650 = vunpack.c.h.b16 %v304
        %v651 = vunpack.c.l.b16 %v305
        %v652 = vunpack.c.h.b16 %v305
        %v653 = vunpack.c.l.b16 %v306
        %v654 = vunpack.c.h.b16 %v306
        %v655 = vunpack.c.l.b16 %v307
        %v656 = vunpack.c.h.b16 %v307
        %v657 = vunpack.c.l.b16 %v308
        %v658 = vunpack.c.h.b16 %v308
        %v659 = vunpack.c.l.b16 %v309
        %v660 = vunpack.c.h.b16 %v309
        %v661 = vunpack.c.l.b16 %v310
        %v662 = vunpack.c.h.b16 %v310
        %v663 = vunpack.c.l.b16 %v311
        %v664 = vunpack.c.h.b16 %v311
        %v665 = vpack.c.b16 %v575, %v569
        %v666 = vpack.c.b16 %v576, %v570
        %v667 = vpack.c.b16 %v577, %v571
        %v668 = vpack.c.b16 %v578, %v572
        %v669 = vpack.c.b16 %v579, %v573
        %v670 = vpack.c.b16 %v580, %v574
        %v671 = vpack.c.b16 %v587, %v581
        %v672 = vpack.c.b16 %v588, %v582
        %v673 = vpack.c.b16 %v589, %v583
        %v674 = vpack.c.b16 %v590, %v584
        %v675 = vpack.c.b16 %v591, %v585
        %v676 = vpack.c.b16 %v592, %v586
        %v677 = vpack.c.b16 %v599, %v593
        %v678 = vpack.c.b16 %v600, %v594
        %v679 = vpack.c.b16 %v601, %v595
        %v680 = vpack.c.b16 %v602, %v596
        %v681 = vpack.c.b16 %v603, %v597
        %v682 = vpack.c.b16 %v604, %v598
        %v683 = vpack.c.b16 %v611, %v605
        %v684 = vpack.c.b16 %v612, %v606
        %v685 = vpack.c.b16 %v613, %v607
        %v686 = vpack.c.b16 %v614, %v608
        %v687 = vpack.c.b16 %v615, %v609
        %v688 = vpack.c.b16 %v616, %v610
        %v689 = vpack.c.b16 %v623, %v617
        %v690 = vpack.c.b16 %v624, %v618
        %v691 = vpack.c.b16 %v625, %v619
        %v692 = vpack.c.b16 %v626, %v620
        %v693 = vpack.c.b16 %v627, %v621
        %v694 = vpack.c.b16 %v628, %v622
        %v695 = vpack.c.b16 %v635, %v629
        %v696 = vpack.c.b16 %v636, %v630
        %v697 = vpack.c.b16 %v637, %v631
        %v698 = vpack.c.b16 %v638, %v632
        %v699 = vpack.c.b16 %v639, %v633
        %v700 = vpack.c.b16 %v640, %v634
        %v701 = vpack.c.b16 %v647, %v641
        %v702 = vpack.c.b16 %v648, %v642
        %v703 = vpack.c.b16 %v649, %v643
        %v704 = vpack.c.b16 %v650, %v644
        %v705 = vpack.c.b16 %v651, %v645
        %v706 = vpack.c.b16 %v652, %v646
        %v707 = vpack.c.b16 %v659, %v653
        %v708 = vpack.c.b16 %v660, %v654
        %v709 = vpack.c.b16 %v661, %v655
        %v710 = vpack.c.b16 %v662, %v656
        %v711 = vpack.c.b16 %v663, %v657
        %v712 = vpack.c.b16 %v664, %v658
        %v953 = vunpack.c.l.b16 %v312
        %v954 = vunpack.c.h.b16 %v312
        %v955 = vunpack.c.l.b16 %v313
        %v956 = vunpack.c.l.b16 %v314
        %v957 = vunpack.c.h.b16 %v314
        %v958 = vunpack.c.l.b16 %v315
        %v959 = vunpack.c.l.b16 %v316
        %v960 = vunpack.c.h.b16 %v316
        %v961 = vunpack.c.l.b16 %v317
        %v962 = vunpack.c.l.b16 %v318
        %v963 = vunpack.c.h.b16 %v318
        %v964 = vunpack.c.l.b16 %v319
        %v965 = vunpack.c.l.b16 %v320
        %v966 = vunpack.c.h.b16 %v320
        %v967 = vunpack.c.l.b16 %v321
        %v968 = vunpack.c.l.b16 %v322
        %v969 = vunpack.c.h.b16 %v322
        %v970 = vunpack.c.l.b16 %v323
        %v971 = vunpack.c.l.b16 %v324
        %v972 = vunpack.c.h.b16 %v324
        %v973 = vunpack.c.l.b16 %v325
        %v974 = vunpack.c.l.b16 %v326
        %v975 = vunpack.c.h.b16 %v326
        %v976 = vunpack.c.l.b16 %v327
        %v977 = vunpack.c.l.b16 %v328
        %v978 = vunpack.c.h.b16 %v328
        %v979 = vunpack.c.l.b16 %v329
        %v980 = vunpack.c.l.b16 %v330
        %v981 = vunpack.c.h.b16 %v330
        %v982 = vunpack.c.l.b16 %v331
        %v983 = vunpack.c.l.b16 %v332
        %v984 = vunpack.c.h.b16 %v332
        %v985 = vunpack.c.l.b16 %v333
        %v986 = vunpack.c.l.b16 %v334
        %v987 = vunpack.c.h.b16 %v334
        %v988 = vunpack.c.l.b16 %v335
        %v989 = vunpack.c.l.b16 %v336
        %v990 = vunpack.c.h.b16 %v336
        %v991 = vunpack.c.l.b16 %v337
        %v992 = vunpack.c.l.b16 %v338
        %v993 = vunpack.c.h.b16 %v338
        %v994 = vunpack.c.l.b16 %v339
        %v995 = vunpack.c.l.b16 %v340
        %v996 = vunpack.c.h.b16 %v340
        %v997 = vunpack.c.l.b16 %v341
        %v998 = vunpack.c.l.b16 %v342
        %v999 = vunpack.c.h.b16 %v342
        %v1000 = vunpack.c.l.b16 %v343
        %v1001 = vunpack.c.l.b16 %v344
        %v1002 = vunpack.c.h.b16 %v344
        %v1003 = vunpack.c.l.b16 %v345
        %v1004 = vunpack.c.l.b16 %v346
        %v1005 = vunpack.c.h.b16 %v346
        %v1006 = vunpack.c.l.b16 %v347
        %v1007 = vunpack.c.l.b16 %v348
        %v1008 = vunpack.c.h.b16 %v348
        %v1009 = vunpack.c.l.b16 %v349
        %v1010 = vunpack.c.l.b16 %v350
        %v1011 = vunpack.c.h.b16 %v350
        %v1012 = vunpack.c.l.b16 %v351
        %v1013 = vunpack.c.l.b16 %v352
        %v1014 = vunpack.c.h.b16 %v352
        %v1015 = vunpack.c.l.b16 %v353
        %v1016 = vunpack.c.l.b16 %v354
        %v1017 = vunpack.c.h.b16 %v354
        %v1018 = vunpack.c.l.b16 %v355
        %v1019 = vunpack.c.l.b16 %v356
        %v1020 = vunpack.c.h.b16 %v356
        %v1021 = vunpack.c.l.b16 %v357
        %v1022 = vunpack.c.l.b16 %v358
        %v1023 = vunpack.c.h.b16 %v358
        %v1024 = vunpack.c.l.b16 %v359
        %v1025 = vunpack.c.l.b16 %v360
        %v1026 = vunpack.c.h.b16 %v360
        %v1027 = vunpack.c.l.b16 %v361
        %v1028 = vunpack.c.l.b16 %v362
        %v1029 = vunpack.c.h.b16 %v362
        %v1030 = vunpack.c.l.b16 %v363
        %v1031 = vunpack.c.l.b16 %v364
        %v1032 = vunpack.c.h.b16 %v364
        %v1033 = vunpack.c.l.b16 %v365
        %v1034 = vunpack.c.l.b16 %v366
        %v1035 = vunpack.c.h.b16 %v366
        %v1036 = vunpack.c.l.b16 %v367
        %v1037 = vunpack.c.l.b16 %v368
        %v1038 = vunpack.c.h.b16 %v368
        %v1039 = vunpack.c.l.b16 %v369
        %v1040 = vunpack.c.l.b16 %v370
        %v1041 = vunpack.c.h.b16 %v370
        %v1042 = vunpack.c.l.b16 %v371
        %v1043 = vunpack.c.l.b16 %v372
        %v1044 = vunpack.c.h.b16 %v372
        %v1045 = vunpack.c.l.b16 %v373
        %v1046 = vunpack.c.l.b16 %v374
        %v1047 = vunpack.c.h.b16 %v374
        %v1048 = vunpack.c.l.b16 %v375
        %v1049 = vunpack.c.l.b16 %v376
        %v1050 = vunpack.c.h.b16 %v376
        %v1051 = vunpack.c.l.b16 %v377
        %v1052 = vunpack.c.l.b16 %v378
        %v1053 = vunpack.c.h.b16 %v378
        %v1054 = vunpack.c.l.b16 %v379
        %v1055 = vunpack.c.l.b16 %v380
        %v1056 = vunpack.c.h.b16 %v380
        %v1057 = vunpack.c.l.b16 %v381
        %v1058 = vunpack.c.l.b16 %v382
        %v1059 = vunpack.c.h.b16 %v382
        %v1060 = vunpack.c.l.b16 %v383
        %v1061 = vunpack.c.l.b16 %v384
        %v1062 = vunpack.c.h.b16 %v384
        %v1063 = vunpack.c.l.b16 %v385
        %v1064 = vunpack.c.l.b16 %v386
        %v1065 = vunpack.c.h.b16 %v386
        %v1066 = vunpack.c.l.b16 %v387
        %v1067 = vunpack.c.l.b16 %v388
        %v1068 = vunpack.c.h.b16 %v388
        %v1069 = vunpack.c.l.b16 %v389
        %v1070 = vunpack.c.l.b16 %v390
        %v1071 = vunpack.c.h.b16 %v390
        %v1072 = vunpack.c.l.b16 %v391
        %v1073 = vunpack.c.l.b16 %v392
        %v1074 = vunpack.c.h.b16 %v392
        %v1075 = vunpack.c.l.b16 %v393
        %v1076 = vunpack.c.l.b16 %v394
        %v1077 = vunpack.c.h.b16 %v394
        %v1078 = vunpack.c.l.b16 %v395
        %v1079 = vunpack.c.l.b16 %v396
        %v1080 = vunpack.c.h.b16 %v396
        %v1081 = vunpack.c.l.b16 %v397
        %v1082 = vunpack.c.l.b16 %v398
        %v1083 = vunpack.c.h.b16 %v398
        %v1084 = vunpack.c.l.b16 %v399
        %v1085 = vunpack.c.l.b16 %v400
        %v1086 = vunpack.c.h.b16 %v400
        %v1087 = vunpack.c.l.b16 %v401
        %v1088 = vunpack.c.l.b16 %v402
        %v1089 = vunpack.c.h.b16 %v402
        %v1090 = vunpack.c.l.b16 %v403
        %v1091 = vunpack.c.l.b16 %v404
        %v1092 = vunpack.c.h.b16 %v404
        %v1093 = vunpack.c.l.b16 %v405
        %v1094 = vunpack.c.l.b16 %v406
        %v1095 = vunpack.c.h.b16 %v406
        %v1096 = vunpack.c.l.b16 %v407
        %v1097 = vunpack.c.l.b16 %v408
        %v1098 = vunpack.c.h.b16 %v408
        %v1099 = vunpack.c.l.b16 %v409
        %v1100 = vunpack.c.l.b16 %v410
        %v1101 = vunpack.c.h.b16 %v410
        %v1102 = vunpack.c.l.b16 %v411
        %v1103 = vunpack.c.l.b16 %v412
        %v1104 = vunpack.c.h.b16 %v412
        %v1105 = vunpack.c.l.b16 %v413
        %v1106 = vunpack.c.l.b16 %v414
        %v1107 = vunpack.c.h.b16 %v414
        %v1108 = vunpack.c.l.b16 %v415
        %v1109 = vunpack.c.l.b16 %v416
        %v1110 = vunpack.c.h.b16 %v416
        %v1111 = vunpack.c.l.b16 %v417
        %v1112 = vunpack.c.l.b16 %v418
        %v1113 = vunpack.c.h.b16 %v418
        %v1114 = vunpack.c.l.b16 %v419
        %v1115 = vunpack.c.l.b16 %v420
        %v1116 = vunpack.c.h.b16 %v420
        %v1117 = vunpack.c.l.b16 %v421
        %v1118 = vunpack.c.l.b16 %v422
        %v1119 = vunpack.c.h.b16 %v422
        %v1120 = vunpack.c.l.b16 %v423
        %v1121 = vunpack.c.l.b16 %v424
        %v1122 = vunpack.c.h.b16 %v424
        %v1123 = vunpack.c.l.b16 %v425
        %v1124 = vunpack.c.l.b16 %v426
        %v1125 = vunpack.c.h.b16 %v426
        %v1126 = vunpack.c.l.b16 %v427
        %v1127 = vunpack.c.l.b16 %v428
        %v1128 = vunpack.c.h.b16 %v428
        %v1129 = vunpack.c.l.b16 %v429
        %v1130 = vunpack.c.l.b16 %v430
        %v1131 = vunpack.c.h.b16 %v430
        %v1132 = vunpack.c.l.b16 %v431
        %v1133 = vunpack.c.l.b16 %v432
        %v1134 = vunpack.c.h.b16 %v432
        %v1135 = vunpack.c.l.b16 %v433
        %v1136 = vunpack.c.l.b16 %v434
        %v1137 = vunpack.c.h.b16 %v434
        %v1138 = vunpack.c.l.b16 %v435
        %v1139 = vunpack.c.l.b16 %v436
        %v1140 = vunpack.c.h.b16 %v436
        %v1141 = vunpack.c.l.b16 %v437
        %v1142 = vunpack.c.l.b16 %v438
        %v1143 = vunpack.c.h.b16 %v438
        %v1144 = vunpack.c.l.b16 %v439
        %v1145 = vunpack.c.l.b16 %v440
        %v1146 = vunpack.c.h.b16 %v440
        %v1147 = vunpack.c.l.b16 %v441
        %v1148 = vunpack.c.l.b16 %v442
        %v1149 = vunpack.c.h.b16 %v442
        %v1150 = vunpack.c.l.b16 %v443
        %v1151 = vunpack.c.l.b16 %v444
        %v1152 = vunpack.c.h.b16 %v444
        %v1153 = vunpack.c.l.b16 %v445
        %v1154 = vunpack.c.l.b16 %v446
        %v1155 = vunpack.c.h.b16 %v446
        %v1156 = vunpack.c.l.b16 %v447
        %v1157 = vunpack.c.l.b16 %v448
        %v1158 = vunpack.c.h.b16 %v448
        %v1159 = vunpack.c.l.b16 %v449
        %v1160 = vunpack.c.l.b16 %v450
        %v1161 = vunpack.c.h.b16 %v450
        %v1162 = vunpack.c.l.b16 %v451
        %v1163 = vunpack.c.l.b16 %v452
        %v1164 = vunpack.c.h.b16 %v452
        %v1165 = vunpack.c.l.b16 %v453
        %v1166 = vunpack.c.l.b16 %v454
        %v1167 = vunpack.c.h.b16 %v454
        %v1168 = vunpack.c.l.b16 %v455
        %v1169 = vunpack.c.l.b16 %v456
        %v1170 = vunpack.c.h.b16 %v456
        %v1171 = vunpack.c.l.b16 %v457
        %v1172 = vunpack.c.l.b16 %v458
        %v1173 = vunpack.c.h.b16 %v458
        %v1174 = vunpack.c.l.b16 %v459
        %v1175 = vunpack.c.l.b16 %v460
        %v1176 = vunpack.c.h.b16 %v460
        %v1177 = vunpack.c.l.b16 %v461
        %v1178 = vunpack.c.l.b16 %v462
        %v1179 = vunpack.c.h.b16 %v462
        %v1180 = vunpack.c.l.b16 %v463
        %v1181 = vunpack.c.l.b16 %v464
        %v1182 = vunpack.c.h.b16 %v464
        %v1183 = vunpack.c.l.b16 %v465
        %v1184 = vunpack.c.l.b16 %v466
        %v1185 = vunpack.c.h.b16 %v466
        %v1186 = vunpack.c.l.b16 %v467
        %v1187 = vunpack.c.l.b16 %v468
        %v1188 = vunpack.c.h.b16 %v468
        %v1189 = vunpack.c.l.b16 %v469
        %v1190 = vunpack.c.l.b16 %v470
        %v1191 = vunpack.c.h.b16 %v470
        %v1192 = vunpack.c.l.b16 %v471
        %v1193 = vunpack.c.l.b16 %v472
        %v1194 = vunpack.c.h.b16 %v472
        %v1195 = vunpack.c.l.b16 %v473
        %v1196 = vunpack.c.l.b16 %v474
        %v1197 = vunpack.c.h.b16 %v474
        %v1198 = vunpack.c.l.b16 %v475
        %v1199 = vunpack.c.l.b16 %v476
        %v1200 = vunpack.c.h.b16 %v476
        %v1201 = vunpack.c.l.b16 %v477
        %v1202 = vunpack.c.l.b16 %v478
        %v1203 = vunpack.c.h.b16 %v478
        %v1204 = vunpack.c.l.b16 %v479
        %v1205 = vunpack.c.l.b16 %v480
        %v1206 = vunpack.c.h.b16 %v480
        %v1207 = vunpack.c.l.b16 %v481
        %v1208 = vunpack.c.l.b16 %v482
        %v1209 = vunpack.c.h.b16 %v482
        %v1210 = vunpack.c.l.b16 %v483
        %v1211 = vunpack.c.l.b16 %v484
        %v1212 = vunpack.c.h.b16 %v484
        %v1213 = vunpack.c.l.b16 %v485
        %v1214 = vunpack.c.l.b16 %v486
        %v1215 = vunpack.c.h.b16 %v486
        %v1216 = vunpack.c.l.b16 %v487
        %v1217 = vunpack.c.l.b16 %v488
        %v1218 = vunpack.c.h.b16 %v488
        %v1219 = vunpack.c.l.b16 %v489
        %v1220 = vunpack.c.l.b16 %v490
        %v1221 = vunpack.c.h.b16 %v490
        %v1222 = vunpack.c.l.b16 %v491
        %v1223 = vunpack.c.l.b16 %v492
        %v1224 = vunpack.c.h.b16 %v492
        %v1225 = vunpack.c.l.b16 %v493
        %v1226 = vunpack.c.l.b16 %v494
        %v1227 = vunpack.c.h.b16 %v494
        %v1228 = vunpack.c.l.b16 %v495
        %v1229 = vunpack.c.l.b16 %v496
        %v1230 = vunpack.c.h.b16 %v496
        %v1231 = vunpack.c.l.b16 %v497
        %v1232 = vunpack.c.l.b16 %v498
        %v1233 = vunpack.c.h.b16 %v498
        %v1234 = vunpack.c.l.b16 %v499
        %v1235 = vunpack.c.l.b16 %v500
        %v1236 = vunpack.c.h.b16 %v500
        %v1237 = vunpack.c.l.b16 %v501
        %v1238 = vunpack.c.l.b16 %v502
        %v1239 = vunpack.c.h.b16 %v502
        %v1240 = vunpack.c.l.b16 %v503
        %v1241 = vpack.c.b16 %v956, %v953
        %v1242 = vpack.c.b16 %v957, %v954
        %v1243 = vpack.c.b16 %v958, %v955
        %v1244 = vpack.c.b16 %v962, %v959
        %v1245 = vpack.c.b16 %v963, %v960
        %v1246 = vpack.c.b16 %v964, %v961
        %v1247 = vpack.c.b16 %v968, %v965
        %v1248 = vpack.c.b16 %v969, %v966
        %v1249 = vpack.c.b16 %v970, %v967
        %v1250 = vpack.c.b16 %v974, %v971
        %v1251 = vpack.c.b16 %v975, %v972
        %v1252 = vpack.c.b16 %v976, %v973
        %v1253 = vpack.c.b16 %v980, %v977
        %v1254 = vpack.c.b16 %v981, %v978
        %v1255 = vpack.c.b16 %v982, %v979
        %v1256 = vpack.c.b16 %v986, %v983
        %v1257 = vpack.c.b16 %v987, %v984
        %v1258 = vpack.c.b16 %v988, %v985
        %v1259 = vpack.c.b16 %v992, %v989
        %v1260 = vpack.c.b16 %v993, %v990
        %v1261 = vpack.c.b16 %v994, %v991
        %v1262 = vpack.c.b16 %v998, %v995
        %v1263 = vpack.c.b16 %v999, %v996
        %v1264 = vpack.c.b16 %v1000, %v997
        %v1265 = vpack.c.b16 %v1004, %v1001
        %v1266 = vpack.c.b16 %v1005, %v1002
        %v1267 = vpack.c.b16 %v1006, %v1003
        %v1268 = vpack.c.b16 %v1010, %v1007
        %v1269 = vpack.c.b16 %v1011, %v1008
        %v1270 = vpack.c.b16 %v1012, %v1009
        %v1271 = vpack.c.b16 %v1016, %v1013
        %v1272 = vpack.c.b16 %v1017, %v1014
        %v1273 = vpack.c.b16 %v1018, %v1015
        %v1274 = vpack.c.b16 %v1022, %v1019
        %v1275 = vpack.c.b16 %v1023, %v1020
        %v1276 = vpack.c.b16 %v1024, %v1021
        %v1277 = vpack.c.b16 %v1028, %v1025
        %v1278 = vpack.c.b16 %v1029, %v1026
        %v1279 = vpack.c.b16 %v1030, %v1027
        %v1280 = vpack.c.b16 %v1034, %v1031
        %v1281 = vpack.c.b16 %v1035, %v1032
        %v1282 = vpack.c.b16 %v1036, %v1033
        %v1283 = vpack.c.b16 %v1040, %v1037
        %v1284 = vpack.c.b16 %v1041, %v1038
        %v1285 = vpack.c.b16 %v1042, %v1039
        %v1286 = vpack.c.b16 %v1046, %v1043
        %v1287 = vpack.c.b16 %v1047, %v1044
        %v1288 = vpack.c.b16 %v1048, %v1045
        %v1289 = vpack.c.b16 %v1052, %v1049
        %v1290 = vpack.c.b16 %v1053, %v1050
        %v1291 = vpack.c.b16 %v1054, %v1051
        %v1292 = vpack.c.b16 %v1058, %v1055
        %v1293 = vpack.c.b16 %v1059, %v1056
        %v1294 = vpack.c.b16 %v1060, %v1057
        %v1295 = vpack.c.b16 %v1064, %v1061
        %v1296 = vpack.c.b16 %v1065, %v1062
        %v1297 = vpack.c.b16 %v1066, %v1063
        %v1298 = vpack.c.b16 %v1070, %v1067
        %v1299 = vpack.c.b16 %v1071, %v1068
        %v1300 = vpack.c.b16 %v1072, %v1069
        %v1301 = vpack.c.b16 %v1076, %v1073
        %v1302 = vpack.c.b16 %v1077, %v1074
        %v1303 = vpack.c.b16 %v1078, %v1075
        %v1304 = vpack.c.b16 %v1082, %v1079
        %v1305 = vpack.c.b16 %v1083, %v1080
        %v1306 = vpack.c.b16 %v1084, %v1081
        %v1307 = vpack.c.b16 %v1088, %v1085
        %v1308 = vpack.c.b16 %v1089, %v1086
        %v1309 = vpack.c.b16 %v1090, %v1087
        %v1310 = vpack.c.b16 %v1094, %v1091
        %v1311 = vpack.c.b16 %v1095, %v1092
        %v1312 = vpack.c.b16 %v1096, %v1093
        %v1313 = vpack.c.b16 %v1100, %v1097
        %v1314 = vpack.c.b16 %v1101, %v1098
        %v1315 = vpack.c.b16 %v1102, %v1099
        %v1316 = vpack.c.b16 %v1106, %v1103
        %v1317 = vpack.c.b16 %v1107, %v1104
        %v1318 = vpack.c.b16 %v1108, %v1105
        %v1319 = vpack.c.b16 %v1112, %v1109
        %v1320 = vpack.c.b16 %v1113, %v1110
        %v1321 = vpack.c.b16 %v1114, %v1111
        %v1322 = vpack.c.b16 %v1118, %v1115
        %v1323 = vpack.c.b16 %v1119, %v1116
        %v1324 = vpack.c.b16 %v1120, %v1117
        %v1325 = vpack.c.b16 %v1124, %v1121
        %v1326 = vpack.c.b16 %v1125, %v1122
        %v1327 = vpack.c.b16 %v1126, %v1123
        %v1328 = vpack.c.b16 %v1130, %v1127
        %v1329 = vpack.c.b16 %v1131, %v1128
        %v1330 = vpack.c.b16 %v1132, %v1129
        %v1331 = vpack.c.b16 %v1136, %v1133
        %v1332 = vpack.c.b16 %v1137, %v1134
        %v1333 = vpack.c.b16 %v1138, %v1135
        %v1334 = vpack.c.b16 %v1142, %v1139
        %v1335 = vpack.c.b16 %v1143, %v1140
        %v1336 = vpack.c.b16 %v1144, %v1141
        %v1337 = vpack.c.b16 %v1148, %v1145
        %v1338 = vpack.c.b16 %v1149, %v1146
        %v1339 = vpack.c.b16 %v1150, %v1147
        %v1340 = vpack.c.b16 %v1154, %v1151
        %v1341 = vpack.c.b16 %v1155, %v1152
        %v1342 = vpack.c.b16 %v1156, %v1153
        %v1343 = vpack.c.b16 %v1160, %v1157
        %v1344 = vpack.c.b16 %v1161, %v1158
        %v1345 = vpack.c.b16 %v1162, %v1159
        %v1346 = vpack.c.b16 %v1166, %v1163
        %v1347 = vpack.c.b16 %v1167, %v1164
        %v1348 = vpack.c.b16 %v1168, %v1165
        %v1349 = vpack.c.b16 %v1172, %v1169
        %v1350 = vpack.c.b16 %v1173, %v1170
        %v1351 = vpack.c.b16 %v1174, %v1171
        %v1352 = vpack.c.b16 %v1178, %v1175
        %v1353 = vpack.c.b16 %v1179, %v1176
        %v1354 = vpack.c.b16 %v1180, %v1177
        %v1355 = vpack.c.b16 %v1184, %v1181
        %v1356 = vpack.c.b16 %v1185, %v1182
        %v1357 = vpack.c.b16 %v1186, %v1183
        %v1358 = vpack.c.b16 %v1190, %v1187
        %v1359 = vpack.c.b16 %v1191, %v1188
        %v1360 = vpack.c.b16 %v1192, %v1189
        %v1361 = vpack.c.b16 %v1196, %v1193
        %v1362 = vpack.c.b16 %v1197, %v1194
        %v1363 = vpack.c.b16 %v1198, %v1195
        %v1364 = vpack.c.b16 %v1202, %v1199
        %v1365 = vpack.c.b16 %v1203, %v1200
        %v1366 = vpack.c.b16 %v1204, %v1201
        %v1367 = vpack.c.b16 %v1208, %v1205
        %v1368 = vpack.c.b16 %v1209, %v1206
        %v1369 = vpack.c.b16 %v1210, %v1207
        %v1370 = vpack.c.b16 %v1214, %v1211
        %v1371 = vpack.c.b16 %v1215, %v1212
        %v1372 = vpack.c.b16 %v1216, %v1213
        %v1373 = vpack.c.b16 %v1220, %v1217
        %v1374 = vpack.c.b16 %v1221, %v1218
        %v1375 = vpack.c.b16 %v1222, %v1219
        %v1376 = vpack.c.b16 %v1226, %v1223
        %v1377 = vpack.c.b16 %v1227, %v1224
        %v1378 = vpack.c.b16 %v1228, %v1225
        %v1379 = vpack.c.b16 %v1232, %v1229
        %v1380 = vpack.c.b16 %v1233, %v1230
        %v1381 = vpack.c.b16 %v1234, %v1231
        %v1382 = vpack.c.b16 %v1238, %v1235
        %v1383 = vpack.c.b16 %v1239, %v1236
        %v1384 = vpack.c.b16 %v1240, %v1237
        %1529 = vmatprep.subr.bf16.mxu0 %v1242
        %1530 = vmatpush1.bf16.msra.mxu0 %v1241
        %1531 = vmatprep.subr.bf16.mxu0 %v1245
        %1532 = vmatpush1.bf16.msra.mxu0 %v1244
        %1533 = vmatprep.subr.bf16.mxu0 %v1248
        %1534 = vmatpush1.bf16.msra.mxu0 %v1247
        %1535 = vmatprep.subr.bf16.mxu0 %v1251
        %1536 = vmatpush1.bf16.msra.mxu0 %v1250
        %1537 = vmatprep.subr.bf16.mxu0 %v1254
        %1538 = vmatpush1.bf16.msra.mxu0 %v1253
        %1539 = vmatprep.subr.bf16.mxu0 %v1257
        %1540 = vmatpush1.bf16.msra.mxu0 %v1256
        %1541 = vmatprep.subr.bf16.mxu0 %v1260
        %1542 = vmatpush1.bf16.msra.mxu0 %v1259
        %1543 = vmatprep.subr.bf16.mxu0 %v1263
        %1544 = vmatpush1.bf16.msra.mxu0 %v1262
        %1545 = vmatprep.subr.bf16.mxu0 %v1266
        %1546 = vmatpush1.bf16.msra.mxu0 %v1265
        %1547 = vmatprep.subr.bf16.mxu0 %v1269
        %1548 = vmatpush1.bf16.msra.mxu0 %v1268
        %1549 = vmatprep.subr.bf16.mxu0 %v1272
        %1550 = vmatpush1.bf16.msra.mxu0 %v1271
        %1551 = vmatprep.subr.bf16.mxu0 %v1275
        %1552 = vmatpush1.bf16.msra.mxu0 %v1274
        %1553 = vmatprep.subr.bf16.mxu0 %v1278
        %1554 = vmatpush1.bf16.msra.mxu0 %v1277
        %1555 = vmatprep.subr.bf16.mxu0 %v1281
        %1556 = vmatpush1.bf16.msra.mxu0 %v1280
        %1557 = vmatprep.subr.bf16.mxu0 %v1284
        %1558 = vmatpush1.bf16.msra.mxu0 %v1283
        %1559 = vmatprep.subr.bf16.mxu0 %v1287
        %1560 = vmatpush1.bf16.msra.mxu0 %v1286
        %1561 = vmatprep.mubr.bf16.mxu0 %v666
        %1562 = vmatmul.mubr.bf16.gmra.mrb[0].mxu0 %v665
        %v1563 = vpop.f32.mrb[0].mxu0
        %v1564 = vadd.f32 %v509, %v1563
        %v1565 = vpop.f32.mrb[0].mxu0
        %v1566 = vadd.f32 %v513, %v1565
        %v1567 = vpop.f32.mrb[0].mxu0
        %v1568 = vadd.f32 %v509, %v1567
        %v1569 = vpop.f32.mrb[0].mxu0
        %v1570 = vadd.f32 %v513, %v1569
        %1571 = vmatprep.mubr.bf16.mxu0 %v672
        %1572 = vmatmul.mubr.bf16.gmra.mrb[0].mxu0 %v671
        %v1573 = vpop.f32.mrb[0].mxu0
        %v1574 = vadd.f32 %v509, %v1573
        %v1575 = vpop.f32.mrb[0].mxu0
        %v1576 = vadd.f32 %v513, %v1575
        %v1577 = vpop.f32.mrb[0].mxu0
        %v1578 = vadd.f32 %v509, %v1577
        %v1579 = vpop.f32.mrb[0].mxu0
        %v1580 = vadd.f32 %v513, %v1579
        %1581 = vmatprep.mubr.bf16.mxu0 %v678
        %1582 = vmatmul.mubr.bf16.gmra.mrb[0].mxu0 %v677
        %v1583 = vpop.f32.mrb[0].mxu0
        %v1584 = vadd.f32 %v509, %v1583
        %v1585 = vpop.f32.mrb[0].mxu0
        %v1586 = vadd.f32 %v513, %v1585
        %v1587 = vpop.f32.mrb[0].mxu0
        %v1588 = vadd.f32 %v509, %v1587
        %v1589 = vpop.f32.mrb[0].mxu0
        %v1590 = vadd.f32 %v513, %v1589
        %1591 = vmatprep.mubr.bf16.mxu0 %v684
        %1592 = vmatmul.mubr.bf16.gmra.mrb[0].mxu0 %v683
        %v1593 = vpop.f32.mrb[0].mxu0
        %v1594 = vadd.f32 %v509, %v1593
        %v1595 = vpop.f32.mrb[0].mxu0
        %v1596 = vadd.f32 %v513, %v1595
        %v1597 = vpop.f32.mrb[0].mxu0
        %v1598 = vadd.f32 %v509, %v1597
        %v1599 = vpop.f32.mrb[0].mxu0
        %v1600 = vadd.f32 %v513, %v1599
        %1601 = vmatprep.mubr.bf16.mxu0 %v690
        %1602 = vmatmul.mubr.bf16.gmra.mrb[0].mxu0 %v689
        %v1603 = vpop.f32.mrb[0].mxu0
        %v1604 = vadd.f32 %v509, %v1603
        %v1605 = vpop.f32.mrb[0].mxu0
        %v1606 = vadd.f32 %v513, %v1605
        %v1607 = vpop.f32.mrb[0].mxu0
        %v1608 = vadd.f32 %v509, %v1607
        %v1609 = vpop.f32.mrb[0].mxu0
        %v1610 = vadd.f32 %v513, %v1609
        %1611 = vmatprep.mubr.bf16.mxu0 %v696
        %1612 = vmatmul.mubr.bf16.gmra.mrb[0].mxu0 %v695
        %v1613 = vpop.f32.mrb[0].mxu0
        %v1614 = vadd.f32 %v509, %v1613
        %v1615 = vpop.f32.mrb[0].mxu0
        %v1616 = vadd.f32 %v513, %v1615
        %v1617 = vpop.f32.mrb[0].mxu0
        %v1618 = vadd.f32 %v509, %v1617
        %v1619 = vpop.f32.mrb[0].mxu0
        %v1620 = vadd.f32 %v513, %v1619
        %1621 = vmatprep.mubr.bf16.mxu0 %v702
        %1622 = vmatmul.mubr.bf16.gmra.mrb[0].mxu0 %v701
        %v1623 = vpop.f32.mrb[0].mxu0
        %v1624 = vadd.f32 %v509, %v1623
        %v1625 = vpop.f32.mrb[0].mxu0
        %v1626 = vadd.f32 %v513, %v1625
        %v1627 = vpop.f32.mrb[0].mxu0
        %v1628 = vadd.f32 %v509, %v1627
        %v1629 = vpop.f32.mrb[0].mxu0
        %v1630 = vadd.f32 %v513, %v1629
        %1631 = vmatprep.mubr.bf16.mxu0 %v708
        %1632 = vmatmul.mubr.bf16.gmra.mrb[0].mxu0 %v707
        %v1633 = vpop.f32.mrb[0].mxu0
        %v1634 = vadd.f32 %v509, %v1633
        %v1635 = vpop.f32.mrb[0].mxu0
        %v1636 = vadd.f32 %v513, %v1635
        %v1637 = vpop.f32.mrb[0].mxu0
        %v1638 = vadd.f32 %v509, %v1637
        %v1639 = vpop.f32.mrb[0].mxu0
        %v1640 = vadd.f32 %v513, %v1639
        %1641 = vdwg.mxu0
        %1642 = vmatprep.subr.bf16.mxu0 %v1290
        %1643 = vmatpush1.bf16.msra.mxu0 %v1289
        %1644 = vmatprep.subr.bf16.mxu0 %v1293
        %1645 = vmatpush1.bf16.msra.mxu0 %v1292
        %1646 = vmatprep.subr.bf16.mxu0 %v1296
        %1647 = vmatpush1.bf16.msra.mxu0 %v1295
        %1648 = vmatprep.subr.bf16.mxu0 %v1299
        %1649 = vmatpush1.bf16.msra.mxu0 %v1298
        %1650 = vmatprep.subr.bf16.mxu0 %v1302
        %1651 = vmatpush1.bf16.msra.mxu0 %v1301
        %1652 = vmatprep.subr.bf16.mxu0 %v1305
        %1653 = vmatpush1.bf16.msra.mxu0 %v1304
        %1654 = vmatprep.subr.bf16.mxu0 %v1308
        %1655 = vmatpush1.bf16.msra.mxu0 %v1307
        %1656 = vmatprep.subr.bf16.mxu0 %v1311
        %1657 = vmatpush1.bf16.msra.mxu0 %v1310
        %1658 = vmatprep.subr.bf16.mxu0 %v1314
        %1659 = vmatpush1.bf16.msra.mxu0 %v1313
        %1660 = vmatprep.subr.bf16.mxu0 %v1317
        %1661 = vmatpush1.bf16.msra.mxu0 %v1316
        %1662 = vmatprep.subr.bf16.mxu0 %v1320
        %1663 = vmatpush1.bf16.msra.mxu0 %v1319
        %1664 = vmatprep.subr.bf16.mxu0 %v1323
        %1665 = vmatpush1.bf16.msra.mxu0 %v1322
        %1666 = vmatprep.subr.bf16.mxu0 %v1326
        %1667 = vmatpush1.bf16.msra.mxu0 %v1325
        %1668 = vmatprep.subr.bf16.mxu0 %v1329
        %1669 = vmatpush1.bf16.msra.mxu0 %v1328
        %1670 = vmatprep.subr.bf16.mxu0 %v1332
        %1671 = vmatpush1.bf16.msra.mxu0 %v1331
        %1672 = vmatprep.subr.bf16.mxu0 %v1335
        %1673 = vmatpush1.bf16.msra.mxu0 %v1334
        %1674 = vmatprep.mubr.bf16.mxu0 %v668
        %1675 = vmatmul.mubr.bf16.gmra.mrb[0].mxu0 %v667
        %v1676 = vpop.f32.mrb[0].mxu0
        %v1677 = vadd.f32 %v1564, %v1676
        %v1678 = vpop.f32.mrb[0].mxu0
        %v1679 = vadd.f32 %v1566, %v1678
        %v1680 = vpop.f32.mrb[0].mxu0
        %v1681 = vadd.f32 %v1568, %v1680
        %v1682 = vpop.f32.mrb[0].mxu0
        %v1683 = vadd.f32 %v1570, %v1682
        %1684 = vmatprep.mubr.bf16.mxu0 %v674
        %1685 = vmatmul.mubr.bf16.gmra.mrb[0].mxu0 %v673
        %v1686 = vpop.f32.mrb[0].mxu0
        %v1687 = vadd.f32 %v1574, %v1686
        %v1688 = vpop.f32.mrb[0].mxu0
        %v1689 = vadd.f32 %v1576, %v1688
        %v1690 = vpop.f32.mrb[0].mxu0
        %v1691 = vadd.f32 %v1578, %v1690
        %v1692 = vpop.f32.mrb[0].mxu0
        %v1693 = vadd.f32 %v1580, %v1692
        %1694 = vmatprep.mubr.bf16.mxu0 %v680
        %1695 = vmatmul.mubr.bf16.gmra.mrb[0].mxu0 %v679
        %v1696 = vpop.f32.mrb[0].mxu0
        %v1697 = vadd.f32 %v1584, %v1696
        %v1698 = vpop.f32.mrb[0].mxu0
        %v1699 = vadd.f32 %v1586, %v1698
        %v1700 = vpop.f32.mrb[0].mxu0
        %v1701 = vadd.f32 %v1588, %v1700
        %v1702 = vpop.f32.mrb[0].mxu0
        %v1703 = vadd.f32 %v1590, %v1702
        %1704 = vmatprep.mubr.bf16.mxu0 %v686
        %1705 = vmatmul.mubr.bf16.gmra.mrb[0].mxu0 %v685
        %v1706 = vpop.f32.mrb[0].mxu0
        %v1707 = vadd.f32 %v1594, %v1706
        %v1708 = vpop.f32.mrb[0].mxu0
        %v1709 = vadd.f32 %v1596, %v1708
        %v1710 = vpop.f32.mrb[0].mxu0
        %v1711 = vadd.f32 %v1598, %v1710
        %v1712 = vpop.f32.mrb[0].mxu0
        %v1713 = vadd.f32 %v1600, %v1712
        %1714 = vmatprep.mubr.bf16.mxu0 %v692
        %1715 = vmatmul.mubr.bf16.gmra.mrb[0].mxu0 %v691
        %v1716 = vpop.f32.mrb[0].mxu0
        %v1717 = vadd.f32 %v1604, %v1716
        %v1718 = vpop.f32.mrb[0].mxu0
        %v1719 = vadd.f32 %v1606, %v1718
        %v1720 = vpop.f32.mrb[0].mxu0
        %v1721 = vadd.f32 %v1608, %v1720
        %v1722 = vpop.f32.mrb[0].mxu0
        %v1723 = vadd.f32 %v1610, %v1722
        %1724 = vmatprep.mubr.bf16.mxu0 %v698
        %1725 = vmatmul.mubr.bf16.gmra.mrb[0].mxu0 %v697
        %v1726 = vpop.f32.mrb[0].mxu0
        %v1727 = vadd.f32 %v1614, %v1726
        %v1728 = vpop.f32.mrb[0].mxu0
        %v1729 = vadd.f32 %v1616, %v1728
        %v1730 = vpop.f32.mrb[0].mxu0
        %v1731 = vadd.f32 %v1618, %v1730
        %v1732 = vpop.f32.mrb[0].mxu0
        %v1733 = vadd.f32 %v1620, %v1732
        %1734 = vmatprep.mubr.bf16.mxu0 %v704
        %1735 = vmatmul.mubr.bf16.gmra.mrb[0].mxu0 %v703
        %v1736 = vpop.f32.mrb[0].mxu0
        %v1737 = vadd.f32 %v1624, %v1736
        %v1738 = vpop.f32.mrb[0].mxu0
        %v1739 = vadd.f32 %v1626, %v1738
        %v1740 = vpop.f32.mrb[0].mxu0
        %v1741 = vadd.f32 %v1628, %v1740
        %v1742 = vpop.f32.mrb[0].mxu0
        %v1743 = vadd.f32 %v1630, %v1742
        %1744 = vmatprep.mubr.bf16.mxu0 %v710
        %1745 = vmatmul.mubr.bf16.gmra.mrb[0].mxu0 %v709
        %v1746 = vpop.f32.mrb[0].mxu0
        %v1747 = vadd.f32 %v1634, %v1746
        %v1748 = vpop.f32.mrb[0].mxu0
        %v1749 = vadd.f32 %v1636, %v1748
        %v1750 = vpop.f32.mrb[0].mxu0
        %v1751 = vadd.f32 %v1638, %v1750
        %v1752 = vpop.f32.mrb[0].mxu0
        %v1753 = vadd.f32 %v1640, %v1752
        %1754 = vdwg.mxu0
        %1755 = vmatprep.subr.bf16.mxu0 %v1338
        %1756 = vmatpush1.bf16.msra.mxu0 %v1337
        %1757 = vmatprep.subr.bf16.mxu0 %v1341
        %1758 = vmatpush1.bf16.msra.mxu0 %v1340
        %1759 = vmatprep.subr.bf16.mxu0 %v1344
        %1760 = vmatpush1.bf16.msra.mxu0 %v1343
        %1761 = vmatprep.subr.bf16.mxu0 %v1347
        %1762 = vmatpush1.bf16.msra.mxu0 %v1346
        %1763 = vmatprep.subr.bf16.mxu0 %v1350
        %1764 = vmatpush1.bf16.msra.mxu0 %v1349
        %1765 = vmatprep.subr.bf16.mxu0 %v1353
        %1766 = vmatpush1.bf16.msra.mxu0 %v1352
        %1767 = vmatprep.subr.bf16.mxu0 %v1356
        %1768 = vmatpush1.bf16.msra.mxu0 %v1355
        %1769 = vmatprep.subr.bf16.mxu0 %v1359
        %1770 = vmatpush1.bf16.msra.mxu0 %v1358
        %1771 = vmatprep.subr.bf16.mxu0 %v1362
        %1772 = vmatpush1.bf16.msra.mxu0 %v1361
        %1773 = vmatprep.subr.bf16.mxu0 %v1365
        %1774 = vmatpush1.bf16.msra.mxu0 %v1364
        %1775 = vmatprep.subr.bf16.mxu0 %v1368
        %1776 = vmatpush1.bf16.msra.mxu0 %v1367
        %1777 = vmatprep.subr.bf16.mxu0 %v1371
        %1778 = vmatpush1.bf16.msra.mxu0 %v1370
        %1779 = vmatprep.subr.bf16.mxu0 %v1374
        %1780 = vmatpush1.bf16.msra.mxu0 %v1373
        %1781 = vmatprep.subr.bf16.mxu0 %v1377
        %1782 = vmatpush1.bf16.msra.mxu0 %v1376
        %1783 = vmatprep.subr.bf16.mxu0 %v1380
        %1784 = vmatpush1.bf16.msra.mxu0 %v1379
        %1785 = vmatprep.subr.bf16.mxu0 %v1383
        %1786 = vmatpush1.bf16.msra.mxu0 %v1382
        %1787 = vmatprep.mubr.bf16.mxu0 %v670
        %1788 = vmatmul.mubr.bf16.gmra.mrb[0].mxu0 %v669
        %v1789 = vpop.f32.mrb[0].mxu0
        %v1790 = vadd.f32 %v1677, %v1789
        %v1791 = vpop.f32.mrb[0].mxu0
        %v1792 = vadd.f32 %v1679, %v1791
        %v1793 = vpop.f32.mrb[0].mxu0
        %v1794 = vadd.f32 %v1681, %v1793
        %v1795 = vpop.f32.mrb[0].mxu0
        %v1796 = vadd.f32 %v1683, %v1795
        %1797 = vmatprep.mubr.bf16.mxu0 %v676
        %1798 = vmatmul.mubr.bf16.gmra.mrb[0].mxu0 %v675
        %v1799 = vpop.f32.mrb[0].mxu0
        %v1800 = vadd.f32 %v1687, %v1799
        %v1801 = vpop.f32.mrb[0].mxu0
        %v1802 = vadd.f32 %v1689, %v1801
        %v1803 = vpop.f32.mrb[0].mxu0
        %v1804 = vadd.f32 %v1691, %v1803
        %v1805 = vpop.f32.mrb[0].mxu0
        %v1806 = vadd.f32 %v1693, %v1805
        %1807 = vmatprep.mubr.bf16.mxu0 %v682
        %1808 = vmatmul.mubr.bf16.gmra.mrb[0].mxu0 %v681
        %v1809 = vpop.f32.mrb[0].mxu0
        %v1810 = vadd.f32 %v1697, %v1809
        %v1811 = vpop.f32.mrb[0].mxu0
        %v1812 = vadd.f32 %v1699, %v1811
        %v1813 = vpop.f32.mrb[0].mxu0
        %v1814 = vadd.f32 %v1701, %v1813
        %v1815 = vpop.f32.mrb[0].mxu0
        %v1816 = vadd.f32 %v1703, %v1815
        %1817 = vmatprep.mubr.bf16.mxu0 %v688
        %1818 = vmatmul.mubr.bf16.gmra.mrb[0].mxu0 %v687
        %v1819 = vpop.f32.mrb[0].mxu0
        %v1820 = vadd.f32 %v1707, %v1819
        %v1821 = vpop.f32.mrb[0].mxu0
        %v1822 = vadd.f32 %v1709, %v1821
        %v1823 = vpop.f32.mrb[0].mxu0
        %v1824 = vadd.f32 %v1711, %v1823
        %v1825 = vpop.f32.mrb[0].mxu0
        %v1826 = vadd.f32 %v1713, %v1825
        %1827 = vmatprep.mubr.bf16.mxu0 %v694
        %1828 = vmatmul.mubr.bf16.gmra.mrb[0].mxu0 %v693
        %v1829 = vpop.f32.mrb[0].mxu0
        %v1830 = vadd.f32 %v1717, %v1829
        %v1831 = vpop.f32.mrb[0].mxu0
        %v1832 = vadd.f32 %v1719, %v1831
        %v1833 = vpop.f32.mrb[0].mxu0
        %v1834 = vadd.f32 %v1721, %v1833
        %v1835 = vpop.f32.mrb[0].mxu0
        %v1836 = vadd.f32 %v1723, %v1835
        %1837 = vmatprep.mubr.bf16.mxu0 %v700
        %1838 = vmatmul.mubr.bf16.gmra.mrb[0].mxu0 %v699
        %v1839 = vpop.f32.mrb[0].mxu0
        %v1840 = vadd.f32 %v1727, %v1839
        %v1841 = vpop.f32.mrb[0].mxu0
        %v1842 = vadd.f32 %v1729, %v1841
        %v1843 = vpop.f32.mrb[0].mxu0
        %v1844 = vadd.f32 %v1731, %v1843
        %v1845 = vpop.f32.mrb[0].mxu0
        %v1846 = vadd.f32 %v1733, %v1845
        %1847 = vmatprep.mubr.bf16.mxu0 %v706
        %1848 = vmatmul.mubr.bf16.gmra.mrb[0].mxu0 %v705
        %v1849 = vpop.f32.mrb[0].mxu0
        %v1850 = vadd.f32 %v1737, %v1849
        %v1851 = vpop.f32.mrb[0].mxu0
        %v1852 = vadd.f32 %v1739, %v1851
        %v1853 = vpop.f32.mrb[0].mxu0
        %v1854 = vadd.f32 %v1741, %v1853
        %v1855 = vpop.f32.mrb[0].mxu0
        %v1856 = vadd.f32 %v1743, %v1855
        %1857 = vmatprep.mubr.bf16.mxu0 %v712
        %1858 = vmatmul.mubr.bf16.gmra.mrb[0].mxu0 %v711
        %v1859 = vpop.f32.mrb[0].mxu0
        %v1860 = vadd.f32 %v1747, %v1859
        %v1861 = vpop.f32.mrb[0].mxu0
        %v1862 = vadd.f32 %v1749, %v1861
        %v1863 = vpop.f32.mrb[0].mxu0
        %v1864 = vadd.f32 %v1751, %v1863
        %v1865 = vpop.f32.mrb[0].mxu0
        %v1866 = vadd.f32 %v1753, %v1865
        %1867 = vdwg.mxu0
        %1868 = vmatprep.subr.bf16.mxu0 0
        %1869 = vmatpush1.bf16.msra.mxu0 %v1243
        %1870 = vmatprep.subr.bf16.mxu0 0
        %1871 = vmatpush1.bf16.msra.mxu0 %v1246
        %1872 = vmatprep.subr.bf16.mxu0 0
        %1873 = vmatpush1.bf16.msra.mxu0 %v1249
        %1874 = vmatprep.subr.bf16.mxu0 0
        %1875 = vmatpush1.bf16.msra.mxu0 %v1252
        %1876 = vmatprep.subr.bf16.mxu0 0
        %1877 = vmatpush1.bf16.msra.mxu0 %v1255
        %1878 = vmatprep.subr.bf16.mxu0 0
        %1879 = vmatpush1.bf16.msra.mxu0 %v1258
        %1880 = vmatprep.subr.bf16.mxu0 0
        %1881 = vmatpush1.bf16.msra.mxu0 %v1261
        %1882 = vmatprep.subr.bf16.mxu0 0
        %1883 = vmatpush1.bf16.msra.mxu0 %v1264
        %1884 = vmatprep.subr.bf16.mxu0 0
        %1885 = vmatpush1.bf16.msra.mxu0 %v1267
        %1886 = vmatprep.subr.bf16.mxu0 0
        %1887 = vmatpush1.bf16.msra.mxu0 %v1270
        %1888 = vmatprep.subr.bf16.mxu0 0
        %1889 = vmatpush1.bf16.msra.mxu0 %v1273
        %1890 = vmatprep.subr.bf16.mxu0 0
        %1891 = vmatpush1.bf16.msra.mxu0 %v1276
        %1892 = vmatprep.subr.bf16.mxu0 0
        %1893 = vmatpush1.bf16.msra.mxu0 %v1279
        %1894 = vmatprep.subr.bf16.mxu0 0
        %1895 = vmatpush1.bf16.msra.mxu0 %v1282
        %1896 = vmatprep.subr.bf16.mxu0 0
        %1897 = vmatpush1.bf16.msra.mxu0 %v1285
        %1898 = vmatprep.subr.bf16.mxu0 0
        %1899 = vmatpush1.bf16.msra.mxu0 %v1288
        %1900 = vmatprep.mubr.bf16.mxu0 %v666
        %1901 = vmatmul.mubr.bf16.gmra.mrb[0].mxu0 %v665
        %v1902 = vpop.f32.mrb[0].mxu0
        %v1903 = vadd.f32 %v517, %v1902
        %v1904 = vpop.f32.mrb[0].mxu0
        %v1905 = vpop.f32.mrb[0].mxu0
        %v1906 = vadd.f32 %v517, %v1905
        %v1907 = vpop.f32.mrb[0].mxu0
        %1908 = vmatprep.mubr.bf16.mxu0 %v672
        %1909 = vmatmul.mubr.bf16.gmra.mrb[0].mxu0 %v671
        %v1910 = vpop.f32.mrb[0].mxu0
        %v1911 = vadd.f32 %v517, %v1910
        %v1912 = vpop.f32.mrb[0].mxu0
        %v1913 = vpop.f32.mrb[0].mxu0
        %v1914 = vadd.f32 %v517, %v1913
        %v1915 = vpop.f32.mrb[0].mxu0
        %1916 = vmatprep.mubr.bf16.mxu0 %v678
        %1917 = vmatmul.mubr.bf16.gmra.mrb[0].mxu0 %v677
        %v1918 = vpop.f32.mrb[0].mxu0
        %v1919 = vadd.f32 %v517, %v1918
        %v1920 = vpop.f32.mrb[0].mxu0
        %v1921 = vpop.f32.mrb[0].mxu0
        %v1922 = vadd.f32 %v517, %v1921
        %v1923 = vpop.f32.mrb[0].mxu0
        %1924 = vmatprep.mubr.bf16.mxu0 %v684
        %1925 = vmatmul.mubr.bf16.gmra.mrb[0].mxu0 %v683
        %v1926 = vpop.f32.mrb[0].mxu0
        %v1927 = vadd.f32 %v517, %v1926
        %v1928 = vpop.f32.mrb[0].mxu0
        %v1929 = vpop.f32.mrb[0].mxu0
        %v1930 = vadd.f32 %v517, %v1929
        %v1931 = vpop.f32.mrb[0].mxu0
        %1932 = vmatprep.mubr.bf16.mxu0 %v690
        %1933 = vmatmul.mubr.bf16.gmra.mrb[0].mxu0 %v689
        %v1934 = vpop.f32.mrb[0].mxu0
        %v1935 = vadd.f32 %v517, %v1934
        %v1936 = vpop.f32.mrb[0].mxu0
        %v1937 = vpop.f32.mrb[0].mxu0
        %v1938 = vadd.f32 %v517, %v1937
        %v1939 = vpop.f32.mrb[0].mxu0
        %1940 = vmatprep.mubr.bf16.mxu0 %v696
        %1941 = vmatmul.mubr.bf16.gmra.mrb[0].mxu0 %v695
        %v1942 = vpop.f32.mrb[0].mxu0
        %v1943 = vadd.f32 %v517, %v1942
        %v1944 = vpop.f32.mrb[0].mxu0
        %v1945 = vpop.f32.mrb[0].mxu0
        %v1946 = vadd.f32 %v517, %v1945
        %v1947 = vpop.f32.mrb[0].mxu0
        %1948 = vmatprep.mubr.bf16.mxu0 %v702
        %1949 = vmatmul.mubr.bf16.gmra.mrb[0].mxu0 %v701
        %v1950 = vpop.f32.mrb[0].mxu0
        %v1951 = vadd.f32 %v517, %v1950
        %v1952 = vpop.f32.mrb[0].mxu0
        %v1953 = vpop.f32.mrb[0].mxu0
        %v1954 = vadd.f32 %v517, %v1953
        %v1955 = vpop.f32.mrb[0].mxu0
        %1956 = vmatprep.mubr.bf16.mxu0 %v708
        %1957 = vmatmul.mubr.bf16.gmra.mrb[0].mxu0 %v707
        %v1958 = vpop.f32.mrb[0].mxu0
        %v1959 = vadd.f32 %v517, %v1958
        %v1960 = vpop.f32.mrb[0].mxu0
        %v1961 = vpop.f32.mrb[0].mxu0
        %v1962 = vadd.f32 %v517, %v1961
        %v1963 = vpop.f32.mrb[0].mxu0
        %1964 = vdwg.mxu0
        %1965 = vmatprep.subr.bf16.mxu0 0
        %1966 = vmatpush1.bf16.msra.mxu0 %v1291
        %1967 = vmatprep.subr.bf16.mxu0 0
        %1968 = vmatpush1.bf16.msra.mxu0 %v1294
        %1969 = vmatprep.subr.bf16.mxu0 0
        %1970 = vmatpush1.bf16.msra.mxu0 %v1297
        %1971 = vmatprep.subr.bf16.mxu0 0
        %1972 = vmatpush1.bf16.msra.mxu0 %v1300
        %1973 = vmatprep.subr.bf16.mxu0 0
        %1974 = vmatpush1.bf16.msra.mxu0 %v1303
        %1975 = vmatprep.subr.bf16.mxu0 0
        %1976 = vmatpush1.bf16.msra.mxu0 %v1306
        %1977 = vmatprep.subr.bf16.mxu0 0
        %1978 = vmatpush1.bf16.msra.mxu0 %v1309
        %1979 = vmatprep.subr.bf16.mxu0 0
        %1980 = vmatpush1.bf16.msra.mxu0 %v1312
        %1981 = vmatprep.subr.bf16.mxu0 0
        %1982 = vmatpush1.bf16.msra.mxu0 %v1315
        %1983 = vmatprep.subr.bf16.mxu0 0
        %1984 = vmatpush1.bf16.msra.mxu0 %v1318
        %1985 = vmatprep.subr.bf16.mxu0 0
        %1986 = vmatpush1.bf16.msra.mxu0 %v1321
        %1987 = vmatprep.subr.bf16.mxu0 0
        %1988 = vmatpush1.bf16.msra.mxu0 %v1324
        %1989 = vmatprep.subr.bf16.mxu0 0
        %1990 = vmatpush1.bf16.msra.mxu0 %v1327
        %1991 = vmatprep.subr.bf16.mxu0 0
        %1992 = vmatpush1.bf16.msra.mxu0 %v1330
        %1993 = vmatprep.subr.bf16.mxu0 0
        %1994 = vmatpush1.bf16.msra.mxu0 %v1333
        %1995 = vmatprep.subr.bf16.mxu0 0
        %1996 = vmatpush1.bf16.msra.mxu0 %v1336
        %1997 = vmatprep.mubr.bf16.mxu0 %v668
        %1998 = vmatmul.mubr.bf16.gmra.mrb[0].mxu0 %v667
        %v1999 = vpop.f32.mrb[0].mxu0
        %v2000 = vadd.f32 %v1903, %v1999
        %v2001 = vpop.f32.mrb[0].mxu0
        %v2002 = vpop.f32.mrb[0].mxu0
        %v2003 = vadd.f32 %v1906, %v2002
        %v2004 = vpop.f32.mrb[0].mxu0
        %2005 = vmatprep.mubr.bf16.mxu0 %v674
        %2006 = vmatmul.mubr.bf16.gmra.mrb[0].mxu0 %v673
        %v2007 = vpop.f32.mrb[0].mxu0
        %v2008 = vadd.f32 %v1911, %v2007
        %v2009 = vpop.f32.mrb[0].mxu0
        %v2010 = vpop.f32.mrb[0].mxu0
        %v2011 = vadd.f32 %v1914, %v2010
        %v2012 = vpop.f32.mrb[0].mxu0
        %2013 = vmatprep.mubr.bf16.mxu0 %v680
        %2014 = vmatmul.mubr.bf16.gmra.mrb[0].mxu0 %v679
        %v2015 = vpop.f32.mrb[0].mxu0
        %v2016 = vadd.f32 %v1919, %v2015
        %v2017 = vpop.f32.mrb[0].mxu0
        %v2018 = vpop.f32.mrb[0].mxu0
        %v2019 = vadd.f32 %v1922, %v2018
        %v2020 = vpop.f32.mrb[0].mxu0
        %2021 = vmatprep.mubr.bf16.mxu0 %v686
        %2022 = vmatmul.mubr.bf16.gmra.mrb[0].mxu0 %v685
        %v2023 = vpop.f32.mrb[0].mxu0
        %v2024 = vadd.f32 %v1927, %v2023
        %v2025 = vpop.f32.mrb[0].mxu0
        %v2026 = vpop.f32.mrb[0].mxu0
        %v2027 = vadd.f32 %v1930, %v2026
        %v2028 = vpop.f32.mrb[0].mxu0
        %2029 = vmatprep.mubr.bf16.mxu0 %v692
        %2030 = vmatmul.mubr.bf16.gmra.mrb[0].mxu0 %v691
        %v2031 = vpop.f32.mrb[0].mxu0
        %v2032 = vadd.f32 %v1935, %v2031
        %v2033 = vpop.f32.mrb[0].mxu0
        %v2034 = vpop.f32.mrb[0].mxu0
        %v2035 = vadd.f32 %v1938, %v2034
        %v2036 = vpop.f32.mrb[0].mxu0
        %2037 = vmatprep.mubr.bf16.mxu0 %v698
        %2038 = vmatmul.mubr.bf16.gmra.mrb[0].mxu0 %v697
        %v2039 = vpop.f32.mrb[0].mxu0
        %v2040 = vadd.f32 %v1943, %v2039
        %v2041 = vpop.f32.mrb[0].mxu0
        %v2042 = vpop.f32.mrb[0].mxu0
        %v2043 = vadd.f32 %v1946, %v2042
        %v2044 = vpop.f32.mrb[0].mxu0
        %2045 = vmatprep.mubr.bf16.mxu0 %v704
        %2046 = vmatmul.mubr.bf16.gmra.mrb[0].mxu0 %v703
        %v2047 = vpop.f32.mrb[0].mxu0
        %v2048 = vadd.f32 %v1951, %v2047
        %v2049 = vpop.f32.mrb[0].mxu0
        %v2050 = vpop.f32.mrb[0].mxu0
        %v2051 = vadd.f32 %v1954, %v2050
        %v2052 = vpop.f32.mrb[0].mxu0
        %2053 = vmatprep.mubr.bf16.mxu0 %v710
        %2054 = vmatmul.mubr.bf16.gmra.mrb[0].mxu0 %v709
        %v2055 = vpop.f32.mrb[0].mxu0
        %v2056 = vadd.f32 %v1959, %v2055
        %v2057 = vpop.f32.mrb[0].mxu0
        %v2058 = vpop.f32.mrb[0].mxu0
        %v2059 = vadd.f32 %v1962, %v2058
        %v2060 = vpop.f32.mrb[0].mxu0
        %2061 = vdwg.mxu0
        %2062 = vmatprep.subr.bf16.mxu0 0
        %2063 = vmatpush1.bf16.msra.mxu0 %v1339
        %2064 = vmatprep.subr.bf16.mxu0 0
        %2065 = vmatpush1.bf16.msra.mxu0 %v1342
        %2066 = vmatprep.subr.bf16.mxu0 0
        %2067 = vmatpush1.bf16.msra.mxu0 %v1345
        %2068 = vmatprep.subr.bf16.mxu0 0
        %2069 = vmatpush1.bf16.msra.mxu0 %v1348
        %2070 = vmatprep.subr.bf16.mxu0 0
        %2071 = vmatpush1.bf16.msra.mxu0 %v1351
        %2072 = vmatprep.subr.bf16.mxu0 0
        %2073 = vmatpush1.bf16.msra.mxu0 %v1354
        %2074 = vmatprep.subr.bf16.mxu0 0
        %2075 = vmatpush1.bf16.msra.mxu0 %v1357
        %2076 = vmatprep.subr.bf16.mxu0 0
        %2077 = vmatpush1.bf16.msra.mxu0 %v1360
        %2078 = vmatprep.subr.bf16.mxu0 0
        %2079 = vmatpush1.bf16.msra.mxu0 %v1363
        %2080 = vmatprep.subr.bf16.mxu0 0
        %2081 = vmatpush1.bf16.msra.mxu0 %v1366
        %2082 = vmatprep.subr.bf16.mxu0 0
        %2083 = vmatpush1.bf16.msra.mxu0 %v1369
        %2084 = vmatprep.subr.bf16.mxu0 0
        %2085 = vmatpush1.bf16.msra.mxu0 %v1372
        %2086 = vmatprep.subr.bf16.mxu0 0
        %2087 = vmatpush1.bf16.msra.mxu0 %v1375
        %2088 = vmatprep.subr.bf16.mxu0 0
        %2089 = vmatpush1.bf16.msra.mxu0 %v1378
        %2090 = vmatprep.subr.bf16.mxu0 0
        %2091 = vmatpush1.bf16.msra.mxu0 %v1381
        %2092 = vmatprep.subr.bf16.mxu0 0
        %2093 = vmatpush1.bf16.msra.mxu0 %v1384
        %2094 = vmatprep.mubr.bf16.mxu0 %v670
        %2095 = vmatmul.mubr.bf16.gmra.mrb[0].mxu0 %v669
        %v2096 = vpop.f32.mrb[0].mxu0
        %v2097 = vadd.f32 %v2000, %v2096
        %v2098 = vpop.f32.mrb[0].mxu0
        %v2099 = vpop.f32.mrb[0].mxu0
        %v2100 = vadd.f32 %v2003, %v2099
        %v2101 = vpop.f32.mrb[0].mxu0
        %2102 = vmatprep.mubr.bf16.mxu0 %v676
        %2103 = vmatmul.mubr.bf16.gmra.mrb[0].mxu0 %v675
        %v2104 = vpop.f32.mrb[0].mxu0
        %v2105 = vadd.f32 %v2008, %v2104
        %v2106 = vpop.f32.mrb[0].mxu0
        %v2107 = vpop.f32.mrb[0].mxu0
        %v2108 = vadd.f32 %v2011, %v2107
        %v2109 = vpop.f32.mrb[0].mxu0
        %2110 = vmatprep.mubr.bf16.mxu0 %v682
        %2111 = vmatmul.mubr.bf16.gmra.mrb[0].mxu0 %v681
        %v2112 = vpop.f32.mrb[0].mxu0
        %v2113 = vadd.f32 %v2016, %v2112
        %v2114 = vpop.f32.mrb[0].mxu0
        %v2115 = vpop.f32.mrb[0].mxu0
        %v2116 = vadd.f32 %v2019, %v2115
        %v2117 = vpop.f32.mrb[0].mxu0
        %2118 = vmatprep.mubr.bf16.mxu0 %v688
        %2119 = vmatmul.mubr.bf16.gmra.mrb[0].mxu0 %v687
        %v2120 = vpop.f32.mrb[0].mxu0
        %v2121 = vadd.f32 %v2024, %v2120
        %v2122 = vpop.f32.mrb[0].mxu0
        %v2123 = vpop.f32.mrb[0].mxu0
        %v2124 = vadd.f32 %v2027, %v2123
        %v2125 = vpop.f32.mrb[0].mxu0
        %2126 = vmatprep.mubr.bf16.mxu0 %v694
        %2127 = vmatmul.mubr.bf16.gmra.mrb[0].mxu0 %v693
        %v2128 = vpop.f32.mrb[0].mxu0
        %v2129 = vadd.f32 %v2032, %v2128
        %v2130 = vpop.f32.mrb[0].mxu0
        %v2131 = vpop.f32.mrb[0].mxu0
        %v2132 = vadd.f32 %v2035, %v2131
        %v2133 = vpop.f32.mrb[0].mxu0
        %2134 = vmatprep.mubr.bf16.mxu0 %v700
        %2135 = vmatmul.mubr.bf16.gmra.mrb[0].mxu0 %v699
        %v2136 = vpop.f32.mrb[0].mxu0
        %v2137 = vadd.f32 %v2040, %v2136
        %v2138 = vpop.f32.mrb[0].mxu0
        %v2139 = vpop.f32.mrb[0].mxu0
        %v2140 = vadd.f32 %v2043, %v2139
        %v2141 = vpop.f32.mrb[0].mxu0
        %2142 = vmatprep.mubr.bf16.mxu0 %v706
        %2143 = vmatmul.mubr.bf16.gmra.mrb[0].mxu0 %v705
        %v2144 = vpop.f32.mrb[0].mxu0
        %v2145 = vadd.f32 %v2048, %v2144
        %v2146 = vpop.f32.mrb[0].mxu0
        %v2147 = vpop.f32.mrb[0].mxu0
        %v2148 = vadd.f32 %v2051, %v2147
        %v2149 = vpop.f32.mrb[0].mxu0
        %2150 = vmatprep.mubr.bf16.mxu0 %v712
        %2151 = vmatmul.mubr.bf16.gmra.mrb[0].mxu0 %v711
        %v2152 = vpop.f32.mrb[0].mxu0
        %v2153 = vadd.f32 %v2056, %v2152
        %v2154 = vpop.f32.mrb[0].mxu0
        %v2155 = vpop.f32.mrb[0].mxu0
        %v2156 = vadd.f32 %v2059, %v2155
        %v2157 = vpop.f32.mrb[0].mxu0
        %2158 = vdwg.mxu0
        %v2159 = vmax.f32 %v1790, 0.0
        %v2160 = vmax.f32 %v1792, 0.0
        %v2161 = vmax.f32 %v2097, 0.0
        %v2162 = vmax.f32 %v1794, 0.0
        %v2163 = vmax.f32 %v1796, 0.0
        %v2164 = vmax.f32 %v2100, 0.0
        %v2165 = vmax.f32 %v1800, 0.0
        %v2166 = vmax.f32 %v1802, 0.0
        %v2167 = vmax.f32 %v2105, 0.0
        %v2168 = vmax.f32 %v1804, 0.0
        %v2169 = vmax.f32 %v1806, 0.0
        %v2170 = vmax.f32 %v2108, 0.0
        %v2171 = vmax.f32 %v1810, 0.0
        %v2172 = vmax.f32 %v1812, 0.0
        %v2173 = vmax.f32 %v2113, 0.0
        %v2174 = vmax.f32 %v1814, 0.0
        %v2175 = vmax.f32 %v1816, 0.0
        %v2176 = vmax.f32 %v2116, 0.0
        %v2177 = vmax.f32 %v1820, 0.0
        %v2178 = vmax.f32 %v1822, 0.0
        %v2179 = vmax.f32 %v2121, 0.0
        %v2180 = vmax.f32 %v1824, 0.0
        %v2181 = vmax.f32 %v1826, 0.0
        %v2182 = vmax.f32 %v2124, 0.0
        %v2183 = vmax.f32 %v1830, 0.0
        %v2184 = vmax.f32 %v1832, 0.0
        %v2185 = vmax.f32 %v2129, 0.0
        %v2186 = vmax.f32 %v1834, 0.0
        %v2187 = vmax.f32 %v1836, 0.0
        %v2188 = vmax.f32 %v2132, 0.0
        %v2189 = vmax.f32 %v1840, 0.0
        %v2190 = vmax.f32 %v1842, 0.0
        %v2191 = vmax.f32 %v2137, 0.0
        %v2192 = vmax.f32 %v1844, 0.0
        %v2193 = vmax.f32 %v1846, 0.0
        %v2194 = vmax.f32 %v2140, 0.0
        %v2195 = vmax.f32 %v1850, 0.0
        %v2196 = vmax.f32 %v1852, 0.0
        %v2197 = vmax.f32 %v2145, 0.0
        %v2198 = vmax.f32 %v1854, 0.0
        %v2199 = vmax.f32 %v1856, 0.0
        %v2200 = vmax.f32 %v2148, 0.0
        %v2201 = vmax.f32 %v1860, 0.0
        %v2202 = vmax.f32 %v1862, 0.0
        %v2203 = vmax.f32 %v2153, 0.0
        %v2204 = vmax.f32 %v1864, 0.0
        %v2205 = vmax.f32 %v1866, 0.0
        %v2206 = vmax.f32 %v2156, 0.0
        %v2207 = vpack.c.bf16 %v2162, %v2159
        %v2208 = vpack.c.bf16 %v2163, %v2160
        %v2209 = vpack.c.bf16 %v2164, %v2161
        %v2210 = vpack.c.bf16 %v2168, %v2165
        %v2211 = vpack.c.bf16 %v2169, %v2166
        %v2212 = vpack.c.bf16 %v2170, %v2167
        %v2213 = vpack.c.bf16 %v2174, %v2171
        %v2214 = vpack.c.bf16 %v2175, %v2172
        %v2215 = vpack.c.bf16 %v2176, %v2173
        %v2216 = vpack.c.bf16 %v2180, %v2177
        %v2217 = vpack.c.bf16 %v2181, %v2178
        %v2218 = vpack.c.bf16 %v2182, %v2179
        %v2219 = vpack.c.bf16 %v2186, %v2183
        %v2220 = vpack.c.bf16 %v2187, %v2184
        %v2221 = vpack.c.bf16 %v2188, %v2185
        %v2222 = vpack.c.bf16 %v2192, %v2189
        %v2223 = vpack.c.bf16 %v2193, %v2190
        %v2224 = vpack.c.bf16 %v2194, %v2191
        %v2225 = vpack.c.bf16 %v2198, %v2195
        %v2226 = vpack.c.bf16 %v2199, %v2196
        %v2227 = vpack.c.bf16 %v2200, %v2197
        %v2228 = vpack.c.bf16 %v2204, %v2201
        %v2229 = vpack.c.bf16 %v2205, %v2202
        %v2230 = vpack.c.bf16 %v2206, %v2203
        %v2231 = vld [vmem:[#allocation5 + $0x480] sm:$0xff]
        %v2232 = vld [vmem:[#allocation5 + $0x48c] sm:$0xff]
        %v2233 = vld [vmem:[#allocation5 + $0x498] sm:$0xff]
        %v2234 = vld [vmem:[#allocation5 + $0x4a4] sm:$0xff]
        %v2235 = vld [vmem:[#allocation5 + $0x4b0] sm:$0xff]
        %v2236 = vld [vmem:[#allocation5 + $0x4bc] sm:$0xff]
        %v2237 = vld [vmem:[#allocation5 + $0x4c8] sm:$0xff]
        %v2238 = vld [vmem:[#allocation5 + $0x4d4] sm:$0xff]
        %v2239 = vld [vmem:[#allocation5 + $0x4e0] sm:$0xff]
        %v2240 = vld [vmem:[#allocation5 + $0x4ec] sm:$0xff]
        %v2241 = vld [vmem:[#allocation5 + $0x4f8] sm:$0xff]
        %v2242 = vld [vmem:[#allocation5 + $0x504] sm:$0xff]
        %v2243 = vld [vmem:[#allocation5 + $0x510] sm:$0xff]
        %v2244 = vld [vmem:[#allocation5 + $0x51c] sm:$0xff]
        %v2245 = vld [vmem:[#allocation5 + $0x528] sm:$0xff]
        %v2246 = vld [vmem:[#allocation5 + $0x534] sm:$0xff]
        %v2247 = vld [vmem:[#allocation5 + $0x540] sm:$0xff]
        %v2248 = vld [vmem:[#allocation5 + $0x54c] sm:$0xff]
        %v2249 = vld [vmem:[#allocation5 + $0x558] sm:$0xff]
        %v2250 = vld [vmem:[#allocation5 + $0x564] sm:$0xff]
        %v2251 = vld [vmem:[#allocation5 + $0x570] sm:$0xff]
        %v2252 = vld [vmem:[#allocation5 + $0x57c] sm:$0xff]
        %v2253 = vld [vmem:[#allocation5 + $0x588] sm:$0xff]
        %v2254 = vld [vmem:[#allocation5 + $0x594] sm:$0xff]
        %v2255 = vld [vmem:[#allocation5 + $0x5a0] sm:$0xff]
        %v2256 = vld [vmem:[#allocation5 + $0x5ac] sm:$0xff]
        %v2257 = vld [vmem:[#allocation5 + $0x5b8] sm:$0xff]
        %v2258 = vld [vmem:[#allocation5 + $0x5c4] sm:$0xff]
        %v2259 = vld [vmem:[#allocation5 + $0x5d0] sm:$0xff]
        %v2260 = vld [vmem:[#allocation5 + $0x5dc] sm:$0xff]
        %v2261 = vld [vmem:[#allocation5 + $0x5e8] sm:$0xff]
        %v2262 = vld [vmem:[#allocation5 + $0x5f4] sm:$0xff]
        %v2263 = vld [vmem:[#allocation5 + $0x600] sm:$0xff]
        %v2264 = vld [vmem:[#allocation5 + $0x60c] sm:$0xff]
        %v2265 = vld [vmem:[#allocation5 + $0x618] sm:$0xff]
        %v2266 = vld [vmem:[#allocation5 + $0x624] sm:$0xff]
        %v2267 = vld [vmem:[#allocation5 + $0x630] sm:$0xff]
        %v2268 = vld [vmem:[#allocation5 + $0x63c] sm:$0xff]
        %v2269 = vld [vmem:[#allocation5 + $0x648] sm:$0xff]
        %v2270 = vld [vmem:[#allocation5 + $0x654] sm:$0xff]
        %v2271 = vld [vmem:[#allocation5 + $0x660] sm:$0xff]
        %v2272 = vld [vmem:[#allocation5 + $0x66c] sm:$0xff]
        %v2273 = vld [vmem:[#allocation5 + $0x678] sm:$0xff]
        %v2274 = vld [vmem:[#allocation5 + $0x684] sm:$0xff]
        %v2275 = vld [vmem:[#allocation5 + $0x690] sm:$0xff]
        %v2276 = vld [vmem:[#allocation5 + $0x69c] sm:$0xff]
        %v2277 = vld [vmem:[#allocation5 + $0x6a8] sm:$0xff]
        %v2278 = vld [vmem:[#allocation5 + $0x6b4] sm:$0xff]
        %s2279 = scalar_lea.vmem [#allocation8], 1
        %v2280 = vld [vmem:[%s2279] ss:$8 sm:$0x3]
        %v2282 = vlaneseq
        %v2283 = vshrl.u32 %v2282, 7
        %v2284 = vsub.s32 0, %v2283
        %v2285 = vrot.slane %v2280, %v2284
        %v2286 = vlaneseq
        %v2287 = vshrl.u32 %v2286, 7
        %v2288 = vsub.s32 1, %v2287
        %v2289 = vrot.slane %v2280, %v2288
        %v2340 = vunpack.c.l.b16 %v2231
        %v2341 = vunpack.c.h.b16 %v2231
        %v2342 = vunpack.c.l.b16 %v2232
        %v2343 = vunpack.c.h.b16 %v2232
        %v2344 = vunpack.c.l.b16 %v2233
        %v2345 = vunpack.c.h.b16 %v2233
        %v2346 = vunpack.c.l.b16 %v2234
        %v2347 = vunpack.c.h.b16 %v2234
        %v2348 = vunpack.c.l.b16 %v2235
        %v2349 = vunpack.c.h.b16 %v2235
        %v2350 = vunpack.c.l.b16 %v2236
        %v2351 = vunpack.c.h.b16 %v2236
        %v2352 = vunpack.c.l.b16 %v2237
        %v2353 = vunpack.c.h.b16 %v2237
        %v2354 = vunpack.c.l.b16 %v2238
        %v2355 = vunpack.c.h.b16 %v2238
        %v2356 = vunpack.c.l.b16 %v2239
        %v2357 = vunpack.c.h.b16 %v2239
        %v2358 = vunpack.c.l.b16 %v2240
        %v2359 = vunpack.c.h.b16 %v2240
        %v2360 = vunpack.c.l.b16 %v2241
        %v2361 = vunpack.c.h.b16 %v2241
        %v2362 = vunpack.c.l.b16 %v2242
        %v2363 = vunpack.c.h.b16 %v2242
        %v2364 = vunpack.c.l.b16 %v2243
        %v2365 = vunpack.c.h.b16 %v2243
        %v2366 = vunpack.c.l.b16 %v2244
        %v2367 = vunpack.c.h.b16 %v2244
        %v2368 = vunpack.c.l.b16 %v2245
        %v2369 = vunpack.c.h.b16 %v2245
        %v2370 = vunpack.c.l.b16 %v2246
        %v2371 = vunpack.c.h.b16 %v2246
        %v2372 = vunpack.c.l.b16 %v2247
        %v2373 = vunpack.c.h.b16 %v2247
        %v2374 = vunpack.c.l.b16 %v2248
        %v2375 = vunpack.c.h.b16 %v2248
        %v2376 = vunpack.c.l.b16 %v2249
        %v2377 = vunpack.c.h.b16 %v2249
        %v2378 = vunpack.c.l.b16 %v2250
        %v2379 = vunpack.c.h.b16 %v2250
        %v2380 = vunpack.c.l.b16 %v2251
        %v2381 = vunpack.c.h.b16 %v2251
        %v2382 = vunpack.c.l.b16 %v2252
        %v2383 = vunpack.c.h.b16 %v2252
        %v2384 = vunpack.c.l.b16 %v2253
        %v2385 = vunpack.c.h.b16 %v2253
        %v2386 = vunpack.c.l.b16 %v2254
        %v2387 = vunpack.c.h.b16 %v2254
        %v2388 = vunpack.c.l.b16 %v2255
        %v2389 = vunpack.c.h.b16 %v2255
        %v2390 = vunpack.c.l.b16 %v2256
        %v2391 = vunpack.c.h.b16 %v2256
        %v2392 = vunpack.c.l.b16 %v2257
        %v2393 = vunpack.c.h.b16 %v2257
        %v2394 = vunpack.c.l.b16 %v2258
        %v2395 = vunpack.c.h.b16 %v2258
        %v2396 = vunpack.c.l.b16 %v2259
        %v2397 = vunpack.c.h.b16 %v2259
        %v2398 = vunpack.c.l.b16 %v2260
        %v2399 = vunpack.c.h.b16 %v2260
        %v2400 = vunpack.c.l.b16 %v2261
        %v2401 = vunpack.c.h.b16 %v2261
        %v2402 = vunpack.c.l.b16 %v2262
        %v2403 = vunpack.c.h.b16 %v2262
        %v2404 = vunpack.c.l.b16 %v2263
        %v2405 = vunpack.c.h.b16 %v2263
        %v2406 = vunpack.c.l.b16 %v2264
        %v2407 = vunpack.c.h.b16 %v2264
        %v2408 = vunpack.c.l.b16 %v2265
        %v2409 = vunpack.c.h.b16 %v2265
        %v2410 = vunpack.c.l.b16 %v2266
        %v2411 = vunpack.c.h.b16 %v2266
        %v2412 = vunpack.c.l.b16 %v2267
        %v2413 = vunpack.c.h.b16 %v2267
        %v2414 = vunpack.c.l.b16 %v2268
        %v2415 = vunpack.c.h.b16 %v2268
        %v2416 = vunpack.c.l.b16 %v2269
        %v2417 = vunpack.c.h.b16 %v2269
        %v2418 = vunpack.c.l.b16 %v2270
        %v2419 = vunpack.c.h.b16 %v2270
        %v2420 = vunpack.c.l.b16 %v2271
        %v2421 = vunpack.c.h.b16 %v2271
        %v2422 = vunpack.c.l.b16 %v2272
        %v2423 = vunpack.c.h.b16 %v2272
        %v2424 = vunpack.c.l.b16 %v2273
        %v2425 = vunpack.c.h.b16 %v2273
        %v2426 = vunpack.c.l.b16 %v2274
        %v2427 = vunpack.c.h.b16 %v2274
        %v2428 = vunpack.c.l.b16 %v2275
        %v2429 = vunpack.c.h.b16 %v2275
        %v2430 = vunpack.c.l.b16 %v2276
        %v2431 = vunpack.c.h.b16 %v2276
        %v2432 = vunpack.c.l.b16 %v2277
        %v2433 = vunpack.c.h.b16 %v2277
        %v2434 = vunpack.c.l.b16 %v2278
        %v2435 = vunpack.c.h.b16 %v2278
        %v2436 = vpack.c.b16 %v2342, %v2340
        %v2437 = vpack.c.b16 %v2343, %v2341
        %v2438 = vpack.c.b16 %v2346, %v2344
        %v2439 = vpack.c.b16 %v2347, %v2345
        %v2440 = vpack.c.b16 %v2350, %v2348
        %v2441 = vpack.c.b16 %v2351, %v2349
        %v2442 = vpack.c.b16 %v2354, %v2352
        %v2443 = vpack.c.b16 %v2355, %v2353
        %v2444 = vpack.c.b16 %v2358, %v2356
        %v2445 = vpack.c.b16 %v2359, %v2357
        %v2446 = vpack.c.b16 %v2362, %v2360
        %v2447 = vpack.c.b16 %v2363, %v2361
        %v2448 = vpack.c.b16 %v2366, %v2364
        %v2449 = vpack.c.b16 %v2367, %v2365
        %v2450 = vpack.c.b16 %v2370, %v2368
        %v2451 = vpack.c.b16 %v2371, %v2369
        %v2452 = vpack.c.b16 %v2374, %v2372
        %v2453 = vpack.c.b16 %v2375, %v2373
        %v2454 = vpack.c.b16 %v2378, %v2376
        %v2455 = vpack.c.b16 %v2379, %v2377
        %v2456 = vpack.c.b16 %v2382, %v2380
        %v2457 = vpack.c.b16 %v2383, %v2381
        %v2458 = vpack.c.b16 %v2386, %v2384
        %v2459 = vpack.c.b16 %v2387, %v2385
        %v2460 = vpack.c.b16 %v2390, %v2388
        %v2461 = vpack.c.b16 %v2391, %v2389
        %v2462 = vpack.c.b16 %v2394, %v2392
        %v2463 = vpack.c.b16 %v2395, %v2393
        %v2464 = vpack.c.b16 %v2398, %v2396
        %v2465 = vpack.c.b16 %v2399, %v2397
        %v2466 = vpack.c.b16 %v2402, %v2400
        %v2467 = vpack.c.b16 %v2403, %v2401
        %v2468 = vpack.c.b16 %v2406, %v2404
        %v2469 = vpack.c.b16 %v2407, %v2405
        %v2470 = vpack.c.b16 %v2410, %v2408
        %v2471 = vpack.c.b16 %v2411, %v2409
        %v2472 = vpack.c.b16 %v2414, %v2412
        %v2473 = vpack.c.b16 %v2415, %v2413
        %v2474 = vpack.c.b16 %v2418, %v2416
        %v2475 = vpack.c.b16 %v2419, %v2417
        %v2476 = vpack.c.b16 %v2422, %v2420
        %v2477 = vpack.c.b16 %v2423, %v2421
        %v2478 = vpack.c.b16 %v2426, %v2424
        %v2479 = vpack.c.b16 %v2427, %v2425
        %v2480 = vpack.c.b16 %v2430, %v2428
        %v2481 = vpack.c.b16 %v2431, %v2429
        %v2482 = vpack.c.b16 %v2434, %v2432
        %v2483 = vpack.c.b16 %v2435, %v2433
        %2532 = vmatprep.subr.bf16.mxu0 %v2437
        %2533 = vmatpush1.bf16.msra.mxu0 %v2436
        %2534 = vmatprep.subr.bf16.mxu0 %v2439
        %2535 = vmatpush1.bf16.msra.mxu0 %v2438
        %2536 = vmatprep.subr.bf16.mxu0 %v2441
        %2537 = vmatpush1.bf16.msra.mxu0 %v2440
        %2538 = vmatprep.subr.bf16.mxu0 %v2443
        %2539 = vmatpush1.bf16.msra.mxu0 %v2442
        %2540 = vmatprep.subr.bf16.mxu0 %v2445
        %2541 = vmatpush1.bf16.msra.mxu0 %v2444
        %2542 = vmatprep.subr.bf16.mxu0 %v2447
        %2543 = vmatpush1.bf16.msra.mxu0 %v2446
        %2544 = vmatprep.subr.bf16.mxu0 %v2449
        %2545 = vmatpush1.bf16.msra.mxu0 %v2448
        %2546 = vmatprep.subr.bf16.mxu0 %v2451
        %2547 = vmatpush1.bf16.msra.mxu0 %v2450
        %2548 = vmatprep.subr.bf16.mxu0 %v2453
        %2549 = vmatpush1.bf16.msra.mxu0 %v2452
        %2550 = vmatprep.subr.bf16.mxu0 %v2455
        %2551 = vmatpush1.bf16.msra.mxu0 %v2454
        %2552 = vmatprep.subr.bf16.mxu0 %v2457
        %2553 = vmatpush1.bf16.msra.mxu0 %v2456
        %2554 = vmatprep.subr.bf16.mxu0 %v2459
        %2555 = vmatpush1.bf16.msra.mxu0 %v2458
        %2556 = vmatprep.subr.bf16.mxu0 %v2461
        %2557 = vmatpush1.bf16.msra.mxu0 %v2460
        %2558 = vmatprep.subr.bf16.mxu0 %v2463
        %2559 = vmatpush1.bf16.msra.mxu0 %v2462
        %2560 = vmatprep.subr.bf16.mxu0 %v2465
        %2561 = vmatpush1.bf16.msra.mxu0 %v2464
        %2562 = vmatprep.subr.bf16.mxu0 %v2467
        %2563 = vmatpush1.bf16.msra.mxu0 %v2466
        %2564 = vmatprep.mubr.bf16.mxu0 %v2208
        %2565 = vmatmul.mubr.bf16.gmra.mrb[0].mxu0 %v2207
        %v2566 = vpop.f32.mrb[0].mxu0
        %v2567 = vadd.f32 %v2285, %v2566
        %v2568 = vpop.f32.mrb[0].mxu0
        %v2569 = vadd.f32 %v2289, %v2568
        %v2570 = vpop.f32.mrb[0].mxu0
        %v2571 = vadd.f32 %v2285, %v2570
        %v2572 = vpop.f32.mrb[0].mxu0
        %v2573 = vadd.f32 %v2289, %v2572
        %2574 = vmatprep.mubr.bf16.mxu0 %v2211
        %2575 = vmatmul.mubr.bf16.gmra.mrb[0].mxu0 %v2210
        %v2576 = vpop.f32.mrb[0].mxu0
        %v2577 = vadd.f32 %v2285, %v2576
        %v2578 = vpop.f32.mrb[0].mxu0
        %v2579 = vadd.f32 %v2289, %v2578
        %v2580 = vpop.f32.mrb[0].mxu0
        %v2581 = vadd.f32 %v2285, %v2580
        %v2582 = vpop.f32.mrb[0].mxu0
        %v2583 = vadd.f32 %v2289, %v2582
        %2584 = vmatprep.mubr.bf16.mxu0 %v2214
        %2585 = vmatmul.mubr.bf16.gmra.mrb[0].mxu0 %v2213
        %v2586 = vpop.f32.mrb[0].mxu0
        %v2587 = vadd.f32 %v2285, %v2586
        %v2588 = vpop.f32.mrb[0].mxu0
        %v2589 = vadd.f32 %v2289, %v2588
        %v2590 = vpop.f32.mrb[0].mxu0
        %v2591 = vadd.f32 %v2285, %v2590
        %v2592 = vpop.f32.mrb[0].mxu0
        %v2593 = vadd.f32 %v2289, %v2592
        %2594 = vmatprep.mubr.bf16.mxu0 %v2217
        %2595 = vmatmul.mubr.bf16.gmra.mrb[0].mxu0 %v2216
        %v2596 = vpop.f32.mrb[0].mxu0
        %v2597 = vadd.f32 %v2285, %v2596
        %v2598 = vpop.f32.mrb[0].mxu0
        %v2599 = vadd.f32 %v2289, %v2598
        %v2600 = vpop.f32.mrb[0].mxu0
        %v2601 = vadd.f32 %v2285, %v2600
        %v2602 = vpop.f32.mrb[0].mxu0
        %v2603 = vadd.f32 %v2289, %v2602
        %2604 = vmatprep.mubr.bf16.mxu0 %v2220
        %2605 = vmatmul.mubr.bf16.gmra.mrb[0].mxu0 %v2219
        %v2606 = vpop.f32.mrb[0].mxu0
        %v2607 = vadd.f32 %v2285, %v2606
        %v2608 = vpop.f32.mrb[0].mxu0
        %v2609 = vadd.f32 %v2289, %v2608
        %v2610 = vpop.f32.mrb[0].mxu0
        %v2611 = vadd.f32 %v2285, %v2610
        %v2612 = vpop.f32.mrb[0].mxu0
        %v2613 = vadd.f32 %v2289, %v2612
        %2614 = vmatprep.mubr.bf16.mxu0 %v2223
        %2615 = vmatmul.mubr.bf16.gmra.mrb[0].mxu0 %v2222
        %v2616 = vpop.f32.mrb[0].mxu0
        %v2617 = vadd.f32 %v2285, %v2616
        %v2618 = vpop.f32.mrb[0].mxu0
        %v2619 = vadd.f32 %v2289, %v2618
        %v2620 = vpop.f32.mrb[0].mxu0
        %v2621 = vadd.f32 %v2285, %v2620
        %v2622 = vpop.f32.mrb[0].mxu0
        %v2623 = vadd.f32 %v2289, %v2622
        %2624 = vmatprep.mubr.bf16.mxu0 %v2226
        %2625 = vmatmul.mubr.bf16.gmra.mrb[0].mxu0 %v2225
        %v2626 = vpop.f32.mrb[0].mxu0
        %v2627 = vadd.f32 %v2285, %v2626
        %v2628 = vpop.f32.mrb[0].mxu0
        %v2629 = vadd.f32 %v2289, %v2628
        %v2630 = vpop.f32.mrb[0].mxu0
        %v2631 = vadd.f32 %v2285, %v2630
        %v2632 = vpop.f32.mrb[0].mxu0
        %v2633 = vadd.f32 %v2289, %v2632
        %2634 = vmatprep.mubr.bf16.mxu0 %v2229
        %2635 = vmatmul.mubr.bf16.gmra.mrb[0].mxu0 %v2228
        %v2636 = vpop.f32.mrb[0].mxu0
        %v2637 = vadd.f32 %v2285, %v2636
        %v2638 = vpop.f32.mrb[0].mxu0
        %v2639 = vadd.f32 %v2289, %v2638
        %v2640 = vpop.f32.mrb[0].mxu0
        %v2641 = vadd.f32 %v2285, %v2640
        %v2642 = vpop.f32.mrb[0].mxu0
        %v2643 = vadd.f32 %v2289, %v2642
        %2644 = vdwg.mxu0
        %2645 = vmatprep.subr.bf16.mxu0 %v2469
        %2646 = vmatpush1.bf16.msra.mxu0 %v2468
        %2647 = vmatprep.subr.bf16.mxu0 %v2471
        %2648 = vmatpush1.bf16.msra.mxu0 %v2470
        %2649 = vmatprep.subr.bf16.mxu0 %v2473
        %2650 = vmatpush1.bf16.msra.mxu0 %v2472
        %2651 = vmatprep.subr.bf16.mxu0 %v2475
        %2652 = vmatpush1.bf16.msra.mxu0 %v2474
        %2653 = vmatprep.subr.bf16.mxu0 %v2477
        %2654 = vmatpush1.bf16.msra.mxu0 %v2476
        %2655 = vmatprep.subr.bf16.mxu0 %v2479
        %2656 = vmatpush1.bf16.msra.mxu0 %v2478
        %2657 = vmatprep.subr.bf16.mxu0 %v2481
        %2658 = vmatpush1.bf16.msra.mxu0 %v2480
        %2659 = vmatprep.subr.bf16.mxu0 %v2483
        %2660 = vmatpush1.bf16.msra.mxu0 %v2482
        %2661 = vmatprep.subr.bf16.mxu0 0
        %2662 = vmatpush1.bf16.msra.mxu0 0
        %2663 = vmatprep.subr.bf16.mxu0 0
        %2664 = vmatpush1.bf16.msra.mxu0 0
        %2665 = vmatprep.subr.bf16.mxu0 0
        %2666 = vmatpush1.bf16.msra.mxu0 0
        %2667 = vmatprep.subr.bf16.mxu0 0
        %2668 = vmatpush1.bf16.msra.mxu0 0
        %2669 = vmatprep.subr.bf16.mxu0 0
        %2670 = vmatpush1.bf16.msra.mxu0 0
        %2671 = vmatprep.subr.bf16.mxu0 0
        %2672 = vmatpush1.bf16.msra.mxu0 0
        %2673 = vmatprep.subr.bf16.mxu0 0
        %2674 = vmatpush1.bf16.msra.mxu0 0
        %2675 = vmatprep.subr.bf16.mxu0 0
        %2676 = vmatpush1.bf16.msra.mxu0 0
        %2677 = vmatprep.mubr.bf16.mxu0 0
        %2678 = vmatmul.mubr.bf16.gmra.mrb[0].mxu0 %v2209
        %v2679 = vpop.f32.mrb[0].mxu0
        %v2680 = vadd.f32 %v2567, %v2679
        %v2681 = vpop.f32.mrb[0].mxu0
        %v2682 = vadd.f32 %v2569, %v2681
        %v2683 = vpop.f32.mrb[0].mxu0
        %v2684 = vadd.f32 %v2571, %v2683
        %v2685 = vpop.f32.mrb[0].mxu0
        %v2686 = vadd.f32 %v2573, %v2685
        %2687 = vmatprep.mubr.bf16.mxu0 0
        %2688 = vmatmul.mubr.bf16.gmra.mrb[0].mxu0 %v2212
        %v2689 = vpop.f32.mrb[0].mxu0
        %v2690 = vadd.f32 %v2577, %v2689
        %v2691 = vpop.f32.mrb[0].mxu0
        %v2692 = vadd.f32 %v2579, %v2691
        %v2693 = vpop.f32.mrb[0].mxu0
        %v2694 = vadd.f32 %v2581, %v2693
        %v2695 = vpop.f32.mrb[0].mxu0
        %v2696 = vadd.f32 %v2583, %v2695
        %2697 = vmatprep.mubr.bf16.mxu0 0
        %2698 = vmatmul.mubr.bf16.gmra.mrb[0].mxu0 %v2215
        %v2699 = vpop.f32.mrb[0].mxu0
        %v2700 = vadd.f32 %v2587, %v2699
        %v2701 = vpop.f32.mrb[0].mxu0
        %v2702 = vadd.f32 %v2589, %v2701
        %v2703 = vpop.f32.mrb[0].mxu0
        %v2704 = vadd.f32 %v2591, %v2703
        %v2705 = vpop.f32.mrb[0].mxu0
        %v2706 = vadd.f32 %v2593, %v2705
        %2707 = vmatprep.mubr.bf16.mxu0 0
        %2708 = vmatmul.mubr.bf16.gmra.mrb[0].mxu0 %v2218
        %v2709 = vpop.f32.mrb[0].mxu0
        %v2710 = vadd.f32 %v2597, %v2709
        %v2711 = vpop.f32.mrb[0].mxu0
        %v2712 = vadd.f32 %v2599, %v2711
        %v2713 = vpop.f32.mrb[0].mxu0
        %v2714 = vadd.f32 %v2601, %v2713
        %v2715 = vpop.f32.mrb[0].mxu0
        %v2716 = vadd.f32 %v2603, %v2715
        %2717 = vmatprep.mubr.bf16.mxu0 0
        %2718 = vmatmul.mubr.bf16.gmra.mrb[0].mxu0 %v2221
        %v2719 = vpop.f32.mrb[0].mxu0
        %v2720 = vadd.f32 %v2607, %v2719
        %v2721 = vpop.f32.mrb[0].mxu0
        %v2722 = vadd.f32 %v2609, %v2721
        %v2723 = vpop.f32.mrb[0].mxu0
        %v2724 = vadd.f32 %v2611, %v2723
        %v2725 = vpop.f32.mrb[0].mxu0
        %v2726 = vadd.f32 %v2613, %v2725
        %2727 = vmatprep.mubr.bf16.mxu0 0
        %2728 = vmatmul.mubr.bf16.gmra.mrb[0].mxu0 %v2224
        %v2729 = vpop.f32.mrb[0].mxu0
        %v2730 = vadd.f32 %v2617, %v2729
        %v2731 = vpop.f32.mrb[0].mxu0
        %v2732 = vadd.f32 %v2619, %v2731
        %v2733 = vpop.f32.mrb[0].mxu0
        %v2734 = vadd.f32 %v2621, %v2733
        %v2735 = vpop.f32.mrb[0].mxu0
        %v2736 = vadd.f32 %v2623, %v2735
        %2737 = vmatprep.mubr.bf16.mxu0 0
        %2738 = vmatmul.mubr.bf16.gmra.mrb[0].mxu0 %v2227
        %v2739 = vpop.f32.mrb[0].mxu0
        %v2740 = vadd.f32 %v2627, %v2739
        %v2741 = vpop.f32.mrb[0].mxu0
        %v2742 = vadd.f32 %v2629, %v2741
        %v2743 = vpop.f32.mrb[0].mxu0
        %v2744 = vadd.f32 %v2631, %v2743
        %v2745 = vpop.f32.mrb[0].mxu0
        %v2746 = vadd.f32 %v2633, %v2745
        %2747 = vmatprep.mubr.bf16.mxu0 0
        %2748 = vmatmul.mubr.bf16.gmra.mrb[0].mxu0 %v2230
        %v2749 = vpop.f32.mrb[0].mxu0
        %v2750 = vadd.f32 %v2637, %v2749
        %v2751 = vpop.f32.mrb[0].mxu0
        %v2752 = vadd.f32 %v2639, %v2751
        %v2753 = vpop.f32.mrb[0].mxu0
        %v2754 = vadd.f32 %v2641, %v2753
        %v2755 = vpop.f32.mrb[0].mxu0
        %v2756 = vadd.f32 %v2643, %v2755
        %2757 = vdwg.mxu0
        %v2758 = vmax.f32 %v2680, 0.0
        %v2759 = vmax.f32 %v2682, 0.0
        %v2760 = vmax.f32 %v2684, 0.0
        %v2761 = vmax.f32 %v2686, 0.0
        %v2762 = vmax.f32 %v2690, 0.0
        %v2763 = vmax.f32 %v2692, 0.0
        %v2764 = vmax.f32 %v2694, 0.0
        %v2765 = vmax.f32 %v2696, 0.0
        %v2766 = vmax.f32 %v2700, 0.0
        %v2767 = vmax.f32 %v2702, 0.0
        %v2768 = vmax.f32 %v2704, 0.0
        %v2769 = vmax.f32 %v2706, 0.0
        %v2770 = vmax.f32 %v2710, 0.0
        %v2771 = vmax.f32 %v2712, 0.0
        %v2772 = vmax.f32 %v2714, 0.0
        %v2773 = vmax.f32 %v2716, 0.0
        %v2774 = vmax.f32 %v2720, 0.0
        %v2775 = vmax.f32 %v2722, 0.0
        %v2776 = vmax.f32 %v2724, 0.0
        %v2777 = vmax.f32 %v2726, 0.0
        %v2778 = vmax.f32 %v2730, 0.0
        %v2779 = vmax.f32 %v2732, 0.0
        %v2780 = vmax.f32 %v2734, 0.0
        %v2781 = vmax.f32 %v2736, 0.0
        %v2782 = vmax.f32 %v2740, 0.0
        %v2783 = vmax.f32 %v2742, 0.0
        %v2784 = vmax.f32 %v2744, 0.0
        %v2785 = vmax.f32 %v2746, 0.0
        %v2786 = vmax.f32 %v2750, 0.0
        %v2787 = vmax.f32 %v2752, 0.0
        %v2788 = vmax.f32 %v2754, 0.0
        %v2789 = vmax.f32 %v2756, 0.0
        %v2790 = vpack.c.bf16 %v2760, %v2758
        %v2791 = vpack.c.bf16 %v2761, %v2759
        %v2792 = vpack.c.bf16 %v2764, %v2762
        %v2793 = vpack.c.bf16 %v2765, %v2763
        %v2794 = vpack.c.bf16 %v2768, %v2766
        %v2795 = vpack.c.bf16 %v2769, %v2767
        %v2796 = vpack.c.bf16 %v2772, %v2770
        %v2797 = vpack.c.bf16 %v2773, %v2771
        %v2798 = vpack.c.bf16 %v2776, %v2774
        %v2799 = vpack.c.bf16 %v2777, %v2775
        %v2800 = vpack.c.bf16 %v2780, %v2778
        %v2801 = vpack.c.bf16 %v2781, %v2779
        %v2802 = vpack.c.bf16 %v2784, %v2782
        %v2803 = vpack.c.bf16 %v2785, %v2783
        %v2804 = vpack.c.bf16 %v2788, %v2786
        %v2805 = vpack.c.bf16 %v2789, %v2787
        %v2806 = vld [vmem:[#allocation5 + $0x6c0] sm:$0xf]
        %v2807 = vld [vmem:[#allocation5 + $0x6cc] sm:$0xf]
        %v2808 = vld [vmem:[#allocation5 + $0x6d8] sm:$0xf]
        %v2809 = vld [vmem:[#allocation5 + $0x6e4] sm:$0xf]
        %v2810 = vld [vmem:[#allocation5 + $0x6f0] sm:$0xf]
        %v2811 = vld [vmem:[#allocation5 + $0x6fc] sm:$0xf]
        %v2812 = vld [vmem:[#allocation5 + $0x708] sm:$0xf]
        %v2813 = vld [vmem:[#allocation5 + $0x714] sm:$0xf]
        %v2814 = vld [vmem:[#allocation5 + $0x720] sm:$0xf]
        %v2815 = vld [vmem:[#allocation5 + $0x72c] sm:$0xf]
        %v2816 = vld [vmem:[#allocation5 + $0x738] sm:$0xf]
        %v2817 = vld [vmem:[#allocation5 + $0x744] sm:$0xf]
        %v2818 = vld [vmem:[#allocation5 + $0x750] sm:$0xf]
        %v2819 = vld [vmem:[#allocation5 + $0x75c] sm:$0xf]
        %v2820 = vld [vmem:[#allocation5 + $0x768] sm:$0xf]
        %v2821 = vld [vmem:[#allocation5 + $0x774] sm:$0xf]
        %v2822 = vld [vmem:[#allocation5 + $0x780] sm:$0xf]
        %v2823 = vld [vmem:[#allocation5 + $0x78c] sm:$0xf]
        %v2824 = vld [vmem:[#allocation5 + $0x798] sm:$0xf]
        %v2825 = vld [vmem:[#allocation5 + $0x7a4] sm:$0xf]
        %v2826 = vld [vmem:[#allocation5 + $0x7b0] sm:$0xf]
        %v2827 = vld [vmem:[#allocation5 + $0x7bc] sm:$0xf]
        %v2828 = vld [vmem:[#allocation5 + $0x7c8] sm:$0xf]
        %v2829 = vld [vmem:[#allocation5 + $0x7d4] sm:$0xf]
        %v2830 = vld [vmem:[#allocation5 + $0x7e0] sm:$0xf]
        %v2831 = vld [vmem:[#allocation5 + $0x7ec] sm:$0xf]
        %v2832 = vld [vmem:[#allocation5 + $0x7f8] sm:$0xf]
        %v2833 = vld [vmem:[#allocation5 + $0x804] sm:$0xf]
        %v2834 = vld [vmem:[#allocation5 + $0x810] sm:$0xf]
        %v2835 = vld [vmem:[#allocation5 + $0x81c] sm:$0xf]
        %v2836 = vld [vmem:[#allocation5 + $0x828] sm:$0xf]
        %v2837 = vld [vmem:[#allocation5 + $0x834] sm:$0xf]
        %v2838 = vld [vmem:[#allocation8 + $0x2] ss:$0 sm:$0xff]
        %v2871 = vunpack.c.l.b16 %v2806
        %v2872 = vunpack.c.l.b16 %v2807
        %v2873 = vunpack.c.l.b16 %v2808
        %v2874 = vunpack.c.l.b16 %v2809
        %v2875 = vunpack.c.l.b16 %v2810
        %v2876 = vunpack.c.l.b16 %v2811
        %v2877 = vunpack.c.l.b16 %v2812
        %v2878 = vunpack.c.l.b16 %v2813
        %v2879 = vunpack.c.l.b16 %v2814
        %v2880 = vunpack.c.l.b16 %v2815
        %v2881 = vunpack.c.l.b16 %v2816
        %v2882 = vunpack.c.l.b16 %v2817
        %v2883 = vunpack.c.l.b16 %v2818
        %v2884 = vunpack.c.l.b16 %v2819
        %v2885 = vunpack.c.l.b16 %v2820
        %v2886 = vunpack.c.l.b16 %v2821
        %v2887 = vunpack.c.l.b16 %v2822
        %v2888 = vunpack.c.l.b16 %v2823
        %v2889 = vunpack.c.l.b16 %v2824
        %v2890 = vunpack.c.l.b16 %v2825
        %v2891 = vunpack.c.l.b16 %v2826
        %v2892 = vunpack.c.l.b16 %v2827
        %v2893 = vunpack.c.l.b16 %v2828
        %v2894 = vunpack.c.l.b16 %v2829
        %v2895 = vunpack.c.l.b16 %v2830
        %v2896 = vunpack.c.l.b16 %v2831
        %v2897 = vunpack.c.l.b16 %v2832
        %v2898 = vunpack.c.l.b16 %v2833
        %v2899 = vunpack.c.l.b16 %v2834
        %v2900 = vunpack.c.l.b16 %v2835
        %v2901 = vunpack.c.l.b16 %v2836
        %v2902 = vunpack.c.l.b16 %v2837
        %v2903 = vpack.c.b16 %v2872, %v2871
        %v2904 = vpack.c.b16 %v2874, %v2873
        %v2905 = vpack.c.b16 %v2876, %v2875
        %v2906 = vpack.c.b16 %v2878, %v2877
        %v2907 = vpack.c.b16 %v2880, %v2879
        %v2908 = vpack.c.b16 %v2882, %v2881
        %v2909 = vpack.c.b16 %v2884, %v2883
        %v2910 = vpack.c.b16 %v2886, %v2885
        %v2911 = vpack.c.b16 %v2888, %v2887
        %v2912 = vpack.c.b16 %v2890, %v2889
        %v2913 = vpack.c.b16 %v2892, %v2891
        %v2914 = vpack.c.b16 %v2894, %v2893
        %v2915 = vpack.c.b16 %v2896, %v2895
        %v2916 = vpack.c.b16 %v2898, %v2897
        %v2917 = vpack.c.b16 %v2900, %v2899
        %v2918 = vpack.c.b16 %v2902, %v2901
        %2935 = vmatprep.subr.bf16.mxu0 0
        %2936 = vmatpush1.bf16.msra.mxu0 %v2903
        %2937 = vmatprep.subr.bf16.mxu0 0
        %2938 = vmatpush1.bf16.msra.mxu0 %v2904
        %2939 = vmatprep.subr.bf16.mxu0 0
        %2940 = vmatpush1.bf16.msra.mxu0 %v2905
        %2941 = vmatprep.subr.bf16.mxu0 0
        %2942 = vmatpush1.bf16.msra.mxu0 %v2906
        %2943 = vmatprep.subr.bf16.mxu0 0
        %2944 = vmatpush1.bf16.msra.mxu0 %v2907
        %2945 = vmatprep.subr.bf16.mxu0 0
        %2946 = vmatpush1.bf16.msra.mxu0 %v2908
        %2947 = vmatprep.subr.bf16.mxu0 0
        %2948 = vmatpush1.bf16.msra.mxu0 %v2909
        %2949 = vmatprep.subr.bf16.mxu0 0
        %2950 = vmatpush1.bf16.msra.mxu0 %v2910
        %2951 = vmatprep.subr.bf16.mxu0 0
        %2952 = vmatpush1.bf16.msra.mxu0 %v2911
        %2953 = vmatprep.subr.bf16.mxu0 0
        %2954 = vmatpush1.bf16.msra.mxu0 %v2912
        %2955 = vmatprep.subr.bf16.mxu0 0
        %2956 = vmatpush1.bf16.msra.mxu0 %v2913
        %2957 = vmatprep.subr.bf16.mxu0 0
        %2958 = vmatpush1.bf16.msra.mxu0 %v2914
        %2959 = vmatprep.subr.bf16.mxu0 0
        %2960 = vmatpush1.bf16.msra.mxu0 %v2915
        %2961 = vmatprep.subr.bf16.mxu0 0
        %2962 = vmatpush1.bf16.msra.mxu0 %v2916
        %2963 = vmatprep.subr.bf16.mxu0 0
        %2964 = vmatpush1.bf16.msra.mxu0 %v2917
        %2965 = vmatprep.subr.bf16.mxu0 0
        %2966 = vmatpush1.bf16.msra.mxu0 %v2918
        %2967 = vmatprep.mubr.bf16.mxu0 %v2791
        %2968 = vmatmul.mubr.bf16.gmra.mrb[0].mxu0 %v2790
        %v2969 = vpop.f32.mrb[0].mxu0
        %v2970 = vadd.f32 %v2838, %v2969
        %v2971 = vpop.f32.mrb[0].mxu0
        %v2972 = vpop.f32.mrb[0].mxu0
        %v2973 = vadd.f32 %v2838, %v2972
        %v2974 = vpop.f32.mrb[0].mxu0
        %2975 = vmatprep.mubr.bf16.mxu0 %v2793
        %2976 = vmatmul.mubr.bf16.gmra.mrb[0].mxu0 %v2792
        %v2977 = vpop.f32.mrb[0].mxu0
        %v2978 = vadd.f32 %v2838, %v2977
        %v2979 = vpop.f32.mrb[0].mxu0
        %v2980 = vpop.f32.mrb[0].mxu0
        %v2981 = vadd.f32 %v2838, %v2980
        %v2982 = vpop.f32.mrb[0].mxu0
        %2983 = vmatprep.mubr.bf16.mxu0 %v2795
        %2984 = vmatmul.mubr.bf16.gmra.mrb[0].mxu0 %v2794
        %v2985 = vpop.f32.mrb[0].mxu0
        %v2986 = vadd.f32 %v2838, %v2985
        %v2987 = vpop.f32.mrb[0].mxu0
        %v2988 = vpop.f32.mrb[0].mxu0
        %v2989 = vadd.f32 %v2838, %v2988
        %v2990 = vpop.f32.mrb[0].mxu0
        %2991 = vmatprep.mubr.bf16.mxu0 %v2797
        %2992 = vmatmul.mubr.bf16.gmra.mrb[0].mxu0 %v2796
        %v2993 = vpop.f32.mrb[0].mxu0
        %v2994 = vadd.f32 %v2838, %v2993
        %v2995 = vpop.f32.mrb[0].mxu0
        %v2996 = vpop.f32.mrb[0].mxu0
        %v2997 = vadd.f32 %v2838, %v2996
        %v2998 = vpop.f32.mrb[0].mxu0
        %2999 = vmatprep.mubr.bf16.mxu0 %v2799
        %3000 = vmatmul.mubr.bf16.gmra.mrb[0].mxu0 %v2798
        %v3001 = vpop.f32.mrb[0].mxu0
        %v3002 = vadd.f32 %v2838, %v3001
        %v3003 = vpop.f32.mrb[0].mxu0
        %v3004 = vpop.f32.mrb[0].mxu0
        %v3005 = vadd.f32 %v2838, %v3004
        %v3006 = vpop.f32.mrb[0].mxu0
        %3007 = vmatprep.mubr.bf16.mxu0 %v2801
        %3008 = vmatmul.mubr.bf16.gmra.mrb[0].mxu0 %v2800
        %v3009 = vpop.f32.mrb[0].mxu0
        %v3010 = vadd.f32 %v2838, %v3009
        %v3011 = vpop.f32.mrb[0].mxu0
        %v3012 = vpop.f32.mrb[0].mxu0
        %v3013 = vadd.f32 %v2838, %v3012
        %v3014 = vpop.f32.mrb[0].mxu0
        %3015 = vmatprep.mubr.bf16.mxu0 %v2803
        %3016 = vmatmul.mubr.bf16.gmra.mrb[0].mxu0 %v2802
        %v3017 = vpop.f32.mrb[0].mxu0
        %v3018 = vadd.f32 %v2838, %v3017
        %v3019 = vpop.f32.mrb[0].mxu0
        %v3020 = vpop.f32.mrb[0].mxu0
        %v3021 = vadd.f32 %v2838, %v3020
        %v3022 = vpop.f32.mrb[0].mxu0
        %3023 = vmatprep.mubr.bf16.mxu0 %v2805
        %3024 = vmatmul.mubr.bf16.gmra.mrb[0].mxu0 %v2804
        %v3025 = vpop.f32.mrb[0].mxu0
        %v3026 = vadd.f32 %v2838, %v3025
        %v3027 = vpop.f32.mrb[0].mxu0
        %v3028 = vpop.f32.mrb[0].mxu0
        %v3029 = vadd.f32 %v2838, %v3028
        %v3030 = vpop.f32.mrb[0].mxu0
        %3031 = vdwg.mxu0
        %v3032 = vmax.f32 %v2970, 0.0
        %v3033 = vmax.f32 %v2973, 0.0
        %v3034 = vmax.f32 %v2978, 0.0
        %v3035 = vmax.f32 %v2981, 0.0
        %v3036 = vmax.f32 %v2986, 0.0
        %v3037 = vmax.f32 %v2989, 0.0
        %v3038 = vmax.f32 %v2994, 0.0
        %v3039 = vmax.f32 %v2997, 0.0
        %v3040 = vmax.f32 %v3002, 0.0
        %v3041 = vmax.f32 %v3005, 0.0
        %v3042 = vmax.f32 %v3010, 0.0
        %v3043 = vmax.f32 %v3013, 0.0
        %v3044 = vmax.f32 %v3018, 0.0
        %v3045 = vmax.f32 %v3021, 0.0
        %v3046 = vmax.f32 %v3026, 0.0
        %v3047 = vmax.f32 %v3029, 0.0
        %v3048 = vpack.c.bf16 %v3033, %v3032
        %v3049 = vpack.c.bf16 %v3035, %v3034
        %v3050 = vpack.c.bf16 %v3037, %v3036
        %v3051 = vpack.c.bf16 %v3039, %v3038
        %v3052 = vpack.c.bf16 %v3041, %v3040
        %v3053 = vpack.c.bf16 %v3043, %v3042
        %v3054 = vpack.c.bf16 %v3045, %v3044
        %v3055 = vpack.c.bf16 %v3047, %v3046
        %v3056 = vld [vmem:[#allocation5 + $0x840] sm:$0xf]
        %v3057 = vld [vmem:[#allocation5 + $0x84c] sm:$0xf]
        %v3058 = vld [vmem:[#allocation5 + $0x858] sm:$0xf]
        %v3059 = vld [vmem:[#allocation5 + $0x864] sm:$0xf]
        %v3060 = vld [vmem:[#allocation5 + $0x870] sm:$0xf]
        %v3061 = vld [vmem:[#allocation5 + $0x87c] sm:$0xf]
        %v3062 = vld [vmem:[#allocation5 + $0x888] sm:$0xf]
        %v3063 = vld [vmem:[#allocation5 + $0x894] sm:$0xf]
        %v3064 = vld [vmem:[#allocation5 + $0x8a0] sm:$0xf]
        %v3065 = vld [vmem:[#allocation5 + $0x8ac] sm:$0xf]
        %v3066 = vld [vmem:[#allocation5 + $0x8b8] sm:$0xf]
        %v3067 = vld [vmem:[#allocation5 + $0x8c4] sm:$0xf]
        %v3068 = vld [vmem:[#allocation5 + $0x8d0] sm:$0xf]
        %v3069 = vld [vmem:[#allocation5 + $0x8dc] sm:$0xf]
        %v3070 = vld [vmem:[#allocation5 + $0x8e8] sm:$0xf]
        %v3071 = vld [vmem:[#allocation5 + $0x8f4] sm:$0xf]
        %v3072 = vld [vmem:[#allocation8 + $0x3] ss:$0 sm:$0xff]
        %v3089 = vunpack.c.l.b16 %v3056
        %v3090 = vunpack.c.l.b16 %v3057
        %v3091 = vunpack.c.l.b16 %v3058
        %v3092 = vunpack.c.l.b16 %v3059
        %v3093 = vunpack.c.l.b16 %v3060
        %v3094 = vunpack.c.l.b16 %v3061
        %v3095 = vunpack.c.l.b16 %v3062
        %v3096 = vunpack.c.l.b16 %v3063
        %v3097 = vunpack.c.l.b16 %v3064
        %v3098 = vunpack.c.l.b16 %v3065
        %v3099 = vunpack.c.l.b16 %v3066
        %v3100 = vunpack.c.l.b16 %v3067
        %v3101 = vunpack.c.l.b16 %v3068
        %v3102 = vunpack.c.l.b16 %v3069
        %v3103 = vunpack.c.l.b16 %v3070
        %v3104 = vunpack.c.l.b16 %v3071
        %v3105 = vpack.c.b16 %v3090, %v3089
        %v3106 = vpack.c.b16 %v3092, %v3091
        %v3107 = vpack.c.b16 %v3094, %v3093
        %v3108 = vpack.c.b16 %v3096, %v3095
        %v3109 = vpack.c.b16 %v3098, %v3097
        %v3110 = vpack.c.b16 %v3100, %v3099
        %v3111 = vpack.c.b16 %v3102, %v3101
        %v3112 = vpack.c.b16 %v3104, %v3103
        %3121 = vmatprep.subr.bf16.mxu0 0
        %3122 = vmatpush1.bf16.msra.mxu0 %v3105
        %3123 = vmatprep.subr.bf16.mxu0 0
        %3124 = vmatpush1.bf16.msra.mxu0 %v3106
        %3125 = vmatprep.subr.bf16.mxu0 0
        %3126 = vmatpush1.bf16.msra.mxu0 %v3107
        %3127 = vmatprep.subr.bf16.mxu0 0
        %3128 = vmatpush1.bf16.msra.mxu0 %v3108
        %3129 = vmatprep.subr.bf16.mxu0 0
        %3130 = vmatpush1.bf16.msra.mxu0 %v3109
        %3131 = vmatprep.subr.bf16.mxu0 0
        %3132 = vmatpush1.bf16.msra.mxu0 %v3110
        %3133 = vmatprep.subr.bf16.mxu0 0
        %3134 = vmatpush1.bf16.msra.mxu0 %v3111
        %3135 = vmatprep.subr.bf16.mxu0 0
        %3136 = vmatpush1.bf16.msra.mxu0 %v3112
        %3137 = vmatprep.subr.bf16.mxu0 0
        %3138 = vmatpush1.bf16.msra.mxu0 0
        %3139 = vmatprep.subr.bf16.mxu0 0
        %3140 = vmatpush1.bf16.msra.mxu0 0
        %3141 = vmatprep.subr.bf16.mxu0 0
        %3142 = vmatpush1.bf16.msra.mxu0 0
        %3143 = vmatprep.subr.bf16.mxu0 0
        %3144 = vmatpush1.bf16.msra.mxu0 0
        %3145 = vmatprep.subr.bf16.mxu0 0
        %3146 = vmatpush1.bf16.msra.mxu0 0
        %3147 = vmatprep.subr.bf16.mxu0 0
        %3148 = vmatpush1.bf16.msra.mxu0 0
        %3149 = vmatprep.subr.bf16.mxu0 0
        %3150 = vmatpush1.bf16.msra.mxu0 0
        %3151 = vmatprep.subr.bf16.mxu0 0
        %3152 = vmatpush1.bf16.msra.mxu0 0
        %3153 = vmatprep.mubr.bf16.mxu0 0
        %3154 = vmatmul.mubr.bf16.gmra.mrb[0].mxu0 %v3048
        %v3155 = vpop.f32.mrb[0].mxu0
        %v3156 = vadd.f32 %v3072, %v3155
        %v3157 = vpop.f32.mrb[0].mxu0
        %v3158 = vpop.f32.mrb[0].mxu0
        %v3159 = vadd.f32 %v3072, %v3158
        %v3160 = vpop.f32.mrb[0].mxu0
        %3161 = vmatprep.mubr.bf16.mxu0 0
        %3162 = vmatmul.mubr.bf16.gmra.mrb[0].mxu0 %v3049
        %v3163 = vpop.f32.mrb[0].mxu0
        %v3164 = vadd.f32 %v3072, %v3163
        %v3165 = vpop.f32.mrb[0].mxu0
        %v3166 = vpop.f32.mrb[0].mxu0
        %v3167 = vadd.f32 %v3072, %v3166
        %v3168 = vpop.f32.mrb[0].mxu0
        %3169 = vmatprep.mubr.bf16.mxu0 0
        %3170 = vmatmul.mubr.bf16.gmra.mrb[0].mxu0 %v3050
        %v3171 = vpop.f32.mrb[0].mxu0
        %v3172 = vadd.f32 %v3072, %v3171
        %v3173 = vpop.f32.mrb[0].mxu0
        %v3174 = vpop.f32.mrb[0].mxu0
        %v3175 = vadd.f32 %v3072, %v3174
        %v3176 = vpop.f32.mrb[0].mxu0
        %3177 = vmatprep.mubr.bf16.mxu0 0
        %3178 = vmatmul.mubr.bf16.gmra.mrb[0].mxu0 %v3051
        %v3179 = vpop.f32.mrb[0].mxu0
        %v3180 = vadd.f32 %v3072, %v3179
        %v3181 = vpop.f32.mrb[0].mxu0
        %v3182 = vpop.f32.mrb[0].mxu0
        %v3183 = vadd.f32 %v3072, %v3182
        %v3184 = vpop.f32.mrb[0].mxu0
        %3185 = vmatprep.mubr.bf16.mxu0 0
        %3186 = vmatmul.mubr.bf16.gmra.mrb[0].mxu0 %v3052
        %v3187 = vpop.f32.mrb[0].mxu0
        %v3188 = vadd.f32 %v3072, %v3187
        %v3189 = vpop.f32.mrb[0].mxu0
        %v3190 = vpop.f32.mrb[0].mxu0
        %v3191 = vadd.f32 %v3072, %v3190
        %v3192 = vpop.f32.mrb[0].mxu0
        %3193 = vmatprep.mubr.bf16.mxu0 0
        %3194 = vmatmul.mubr.bf16.gmra.mrb[0].mxu0 %v3053
        %v3195 = vpop.f32.mrb[0].mxu0
        %v3196 = vadd.f32 %v3072, %v3195
        %v3197 = vpop.f32.mrb[0].mxu0
        %v3198 = vpop.f32.mrb[0].mxu0
        %v3199 = vadd.f32 %v3072, %v3198
        %v3200 = vpop.f32.mrb[0].mxu0
        %3201 = vmatprep.mubr.bf16.mxu0 0
        %3202 = vmatmul.mubr.bf16.gmra.mrb[0].mxu0 %v3054
        %v3203 = vpop.f32.mrb[0].mxu0
        %v3204 = vadd.f32 %v3072, %v3203
        %v3205 = vpop.f32.mrb[0].mxu0
        %v3206 = vpop.f32.mrb[0].mxu0
        %v3207 = vadd.f32 %v3072, %v3206
        %v3208 = vpop.f32.mrb[0].mxu0
        %3209 = vmatprep.mubr.bf16.mxu0 0
        %3210 = vmatmul.mubr.bf16.gmra.mrb[0].mxu0 %v3055
        %v3211 = vpop.f32.mrb[0].mxu0
        %v3212 = vadd.f32 %v3072, %v3211
        %v3213 = vpop.f32.mrb[0].mxu0
        %v3214 = vpop.f32.mrb[0].mxu0
        %v3215 = vadd.f32 %v3072, %v3214
        %v3216 = vpop.f32.mrb[0].mxu0
        %3217 = vdwg.mxu0
        %v3218 = vmax.f32 %v3156, 0.0
        %v3219 = vmax.f32 %v3159, 0.0
        %v3220 = vmax.f32 %v3164, 0.0
        %v3221 = vmax.f32 %v3167, 0.0
        %v3222 = vmax.f32 %v3172, 0.0
        %v3223 = vmax.f32 %v3175, 0.0
        %v3224 = vmax.f32 %v3180, 0.0
        %v3225 = vmax.f32 %v3183, 0.0
        %v3226 = vmax.f32 %v3188, 0.0
        %v3227 = vmax.f32 %v3191, 0.0
        %v3228 = vmax.f32 %v3196, 0.0
        %v3229 = vmax.f32 %v3199, 0.0
        %v3230 = vmax.f32 %v3204, 0.0
        %v3231 = vmax.f32 %v3207, 0.0
        %v3232 = vmax.f32 %v3212, 0.0
        %v3233 = vmax.f32 %v3215, 0.0
        %v3234 = vpack.c.bf16 %v3219, %v3218
        %v3235 = vpack.c.bf16 %v3221, %v3220
        %v3236 = vpack.c.bf16 %v3223, %v3222
        %v3237 = vpack.c.bf16 %v3225, %v3224
        %v3238 = vpack.c.bf16 %v3227, %v3226
        %v3239 = vpack.c.bf16 %v3229, %v3228
        %v3240 = vpack.c.bf16 %v3231, %v3230
        %v3241 = vpack.c.bf16 %v3233, %v3232
        %v3242 = vld [vmem:[#allocation5 + $0x900] sm:$0xf]
        %v3243 = vld [vmem:[#allocation5 + $0x90c] sm:$0xf]
        %v3244 = vld [vmem:[#allocation5 + $0x918] sm:$0xf]
        %v3245 = vld [vmem:[#allocation5 + $0x924] sm:$0xf]
        %v3246 = vld [vmem:[#allocation5 + $0x930] sm:$0xf]
        %v3247 = vld [vmem:[#allocation5 + $0x93c] sm:$0xf]
        %v3248 = vld [vmem:[#allocation5 + $0x948] sm:$0xf]
        %v3249 = vld [vmem:[#allocation5 + $0x954] sm:$0xf]
        %v3250 = vld [vmem:[#allocation5 + $0x960] sm:$0xf]
        %v3251 = vld [vmem:[#allocation5 + $0x96c] sm:$0xf]
        %v3252 = vld [vmem:[#allocation5 + $0x978] sm:$0xf]
        %v3253 = vld [vmem:[#allocation5 + $0x984] sm:$0xf]
        %v3254 = vld [vmem:[#allocation5 + $0x990] sm:$0xf]
        %v3255 = vld [vmem:[#allocation5 + $0x99c] sm:$0xf]
        %v3256 = vld [vmem:[#allocation5 + $0x9a8] sm:$0xf]
        %v3257 = vld [vmem:[#allocation5 + $0x9b4] sm:$0xf]
        %v3258 = vld [vmem:[#allocation8 + $0x4] ss:$0 sm:$0xff]
        %v3275 = vunpack.c.l.b16 %v3242
        %v3276 = vunpack.c.l.b16 %v3243
        %v3277 = vunpack.c.l.b16 %v3244
        %v3278 = vunpack.c.l.b16 %v3245
        %v3279 = vunpack.c.l.b16 %v3246
        %v3280 = vunpack.c.l.b16 %v3247
        %v3281 = vunpack.c.l.b16 %v3248
        %v3282 = vunpack.c.l.b16 %v3249
        %v3283 = vunpack.c.l.b16 %v3250
        %v3284 = vunpack.c.l.b16 %v3251
        %v3285 = vunpack.c.l.b16 %v3252
        %v3286 = vunpack.c.l.b16 %v3253
        %v3287 = vunpack.c.l.b16 %v3254
        %v3288 = vunpack.c.l.b16 %v3255
        %v3289 = vunpack.c.l.b16 %v3256
        %v3290 = vunpack.c.l.b16 %v3257
        %v3291 = vpack.c.b16 %v3276, %v3275
        %v3292 = vpack.c.b16 %v3278, %v3277
        %v3293 = vpack.c.b16 %v3280, %v3279
        %v3294 = vpack.c.b16 %v3282, %v3281
        %v3295 = vpack.c.b16 %v3284, %v3283
        %v3296 = vpack.c.b16 %v3286, %v3285
        %v3297 = vpack.c.b16 %v3288, %v3287
        %v3298 = vpack.c.b16 %v3290, %v3289
        %3307 = vmatprep.subr.bf16.mxu0 0
        %3308 = vmatpush1.bf16.msra.mxu0 %v3291
        %3309 = vmatprep.subr.bf16.mxu0 0
        %3310 = vmatpush1.bf16.msra.mxu0 %v3292
        %3311 = vmatprep.subr.bf16.mxu0 0
        %3312 = vmatpush1.bf16.msra.mxu0 %v3293
        %3313 = vmatprep.subr.bf16.mxu0 0
        %3314 = vmatpush1.bf16.msra.mxu0 %v3294
        %3315 = vmatprep.subr.bf16.mxu0 0
        %3316 = vmatpush1.bf16.msra.mxu0 %v3295
        %3317 = vmatprep.subr.bf16.mxu0 0
        %3318 = vmatpush1.bf16.msra.mxu0 %v3296
        %3319 = vmatprep.subr.bf16.mxu0 0
        %3320 = vmatpush1.bf16.msra.mxu0 %v3297
        %3321 = vmatprep.subr.bf16.mxu0 0
        %3322 = vmatpush1.bf16.msra.mxu0 %v3298
        %3323 = vmatprep.subr.bf16.mxu0 0
        %3324 = vmatpush1.bf16.msra.mxu0 0
        %3325 = vmatprep.subr.bf16.mxu0 0
        %3326 = vmatpush1.bf16.msra.mxu0 0
        %3327 = vmatprep.subr.bf16.mxu0 0
        %3328 = vmatpush1.bf16.msra.mxu0 0
        %3329 = vmatprep.subr.bf16.mxu0 0
        %3330 = vmatpush1.bf16.msra.mxu0 0
        %3331 = vmatprep.subr.bf16.mxu0 0
        %3332 = vmatpush1.bf16.msra.mxu0 0
        %3333 = vmatprep.subr.bf16.mxu0 0
        %3334 = vmatpush1.bf16.msra.mxu0 0
        %3335 = vmatprep.subr.bf16.mxu0 0
        %3336 = vmatpush1.bf16.msra.mxu0 0
        %3337 = vmatprep.subr.bf16.mxu0 0
        %3338 = vmatpush1.bf16.msra.mxu0 0
        %3339 = vmatprep.mubr.bf16.mxu0 0
        %3340 = vmatmul.mubr.bf16.gmra.mrb[0].mxu0 %v3234
        %v3341 = vpop.f32.mrb[0].mxu0
        %v3342 = vadd.f32 %v3258, %v3341
        %v3343 = vpop.f32.mrb[0].mxu0
        %v3344 = vpop.f32.mrb[0].mxu0
        %v3345 = vadd.f32 %v3258, %v3344
        %v3346 = vpop.f32.mrb[0].mxu0
        %3347 = vmatprep.mubr.bf16.mxu0 0
        %3348 = vmatmul.mubr.bf16.gmra.mrb[0].mxu0 %v3235
        %v3349 = vpop.f32.mrb[0].mxu0
        %v3350 = vadd.f32 %v3258, %v3349
        %v3351 = vpop.f32.mrb[0].mxu0
        %v3352 = vpop.f32.mrb[0].mxu0
        %v3353 = vadd.f32 %v3258, %v3352
        %v3354 = vpop.f32.mrb[0].mxu0
        %3355 = vmatprep.mubr.bf16.mxu0 0
        %3356 = vmatmul.mubr.bf16.gmra.mrb[0].mxu0 %v3236
        %v3357 = vpop.f32.mrb[0].mxu0
        %v3358 = vadd.f32 %v3258, %v3357
        %v3359 = vpop.f32.mrb[0].mxu0
        %v3360 = vpop.f32.mrb[0].mxu0
        %v3361 = vadd.f32 %v3258, %v3360
        %v3362 = vpop.f32.mrb[0].mxu0
        %3363 = vmatprep.mubr.bf16.mxu0 0
        %3364 = vmatmul.mubr.bf16.gmra.mrb[0].mxu0 %v3237
        %v3365 = vpop.f32.mrb[0].mxu0
        %v3366 = vadd.f32 %v3258, %v3365
        %v3367 = vpop.f32.mrb[0].mxu0
        %v3368 = vpop.f32.mrb[0].mxu0
        %v3369 = vadd.f32 %v3258, %v3368
        %v3370 = vpop.f32.mrb[0].mxu0
        %3371 = vmatprep.mubr.bf16.mxu0 0
        %3372 = vmatmul.mubr.bf16.gmra.mrb[0].mxu0 %v3238
        %v3373 = vpop.f32.mrb[0].mxu0
        %v3374 = vadd.f32 %v3258, %v3373
        %v3375 = vpop.f32.mrb[0].mxu0
        %v3376 = vpop.f32.mrb[0].mxu0
        %v3377 = vadd.f32 %v3258, %v3376
        %v3378 = vpop.f32.mrb[0].mxu0
        %3379 = vmatprep.mubr.bf16.mxu0 0
        %3380 = vmatmul.mubr.bf16.gmra.mrb[0].mxu0 %v3239
        %v3381 = vpop.f32.mrb[0].mxu0
        %v3382 = vadd.f32 %v3258, %v3381
        %v3383 = vpop.f32.mrb[0].mxu0
        %v3384 = vpop.f32.mrb[0].mxu0
        %v3385 = vadd.f32 %v3258, %v3384
        %v3386 = vpop.f32.mrb[0].mxu0
        %3387 = vmatprep.mubr.bf16.mxu0 0
        %3388 = vmatmul.mubr.bf16.gmra.mrb[0].mxu0 %v3240
        %v3389 = vpop.f32.mrb[0].mxu0
        %v3390 = vadd.f32 %v3258, %v3389
        %v3391 = vpop.f32.mrb[0].mxu0
        %v3392 = vpop.f32.mrb[0].mxu0
        %v3393 = vadd.f32 %v3258, %v3392
        %v3394 = vpop.f32.mrb[0].mxu0
        %3395 = vmatprep.mubr.bf16.mxu0 0
        %3396 = vmatmul.mubr.bf16.gmra.mrb[0].mxu0 %v3241
        %v3397 = vpop.f32.mrb[0].mxu0
        %v3398 = vadd.f32 %v3258, %v3397
        %v3399 = vpop.f32.mrb[0].mxu0
        %v3400 = vpop.f32.mrb[0].mxu0
        %v3401 = vadd.f32 %v3258, %v3400
        %v3402 = vpop.f32.mrb[0].mxu0
        %3403 = vdwg.mxu0
        %v3404 = vmax.f32 %v3342, 0.0
        %v3405 = vmax.f32 %v3345, 0.0
        %v3406 = vmax.f32 %v3350, 0.0
        %v3407 = vmax.f32 %v3353, 0.0
        %v3408 = vmax.f32 %v3358, 0.0
        %v3409 = vmax.f32 %v3361, 0.0
        %v3410 = vmax.f32 %v3366, 0.0
        %v3411 = vmax.f32 %v3369, 0.0
        %v3412 = vmax.f32 %v3374, 0.0
        %v3413 = vmax.f32 %v3377, 0.0
        %v3414 = vmax.f32 %v3382, 0.0
        %v3415 = vmax.f32 %v3385, 0.0
        %v3416 = vmax.f32 %v3390, 0.0
        %v3417 = vmax.f32 %v3393, 0.0
        %v3418 = vmax.f32 %v3398, 0.0
        %v3419 = vmax.f32 %v3401, 0.0
        %v3420 = vpack.c.bf16 %v3405, %v3404
        %v3421 = vpack.c.bf16 %v3407, %v3406
        %v3422 = vpack.c.bf16 %v3409, %v3408
        %v3423 = vpack.c.bf16 %v3411, %v3410
        %v3424 = vpack.c.bf16 %v3413, %v3412
        %v3425 = vpack.c.bf16 %v3415, %v3414
        %v3426 = vpack.c.bf16 %v3417, %v3416
        %v3427 = vpack.c.bf16 %v3419, %v3418
        %v3428 = vld [vmem:[#allocation5 + $0x9c0] sm:$0xf]
        %v3429 = vld [vmem:[#allocation5 + $0x9cc] sm:$0xf]
        %v3430 = vld [vmem:[#allocation5 + $0x9d8] sm:$0xf]
        %v3431 = vld [vmem:[#allocation5 + $0x9e4] sm:$0xf]
        %v3432 = vld [vmem:[#allocation5 + $0x9f0] sm:$0xf]
        %v3433 = vld [vmem:[#allocation5 + $0x9fc] sm:$0xf]
        %v3434 = vld [vmem:[#allocation5 + $0xa08] sm:$0xf]
        %v3435 = vld [vmem:[#allocation5 + $0xa14] sm:$0xf]
        %v3436 = vld [vmem:[#allocation5 + $0xa20] sm:$0xf]
        %v3437 = vld [vmem:[#allocation5 + $0xa2c] sm:$0xf]
        %v3438 = vld [vmem:[#allocation5 + $0xa38] sm:$0xf]
        %v3439 = vld [vmem:[#allocation5 + $0xa44] sm:$0xf]
        %v3440 = vld [vmem:[#allocation5 + $0xa50] sm:$0xf]
        %v3441 = vld [vmem:[#allocation5 + $0xa5c] sm:$0xf]
        %v3442 = vld [vmem:[#allocation5 + $0xa68] sm:$0xf]
        %v3443 = vld [vmem:[#allocation5 + $0xa74] sm:$0xf]
        %v3444 = vld [vmem:[#allocation8 + $0x5] ss:$0 sm:$0xff]
        %v3461 = vunpack.c.l.b16 %v3428
        %v3462 = vunpack.c.l.b16 %v3429
        %v3463 = vunpack.c.l.b16 %v3430
        %v3464 = vunpack.c.l.b16 %v3431
        %v3465 = vunpack.c.l.b16 %v3432
        %v3466 = vunpack.c.l.b16 %v3433
        %v3467 = vunpack.c.l.b16 %v3434
        %v3468 = vunpack.c.l.b16 %v3435
        %v3469 = vunpack.c.l.b16 %v3436
        %v3470 = vunpack.c.l.b16 %v3437
        %v3471 = vunpack.c.l.b16 %v3438
        %v3472 = vunpack.c.l.b16 %v3439
        %v3473 = vunpack.c.l.b16 %v3440
        %v3474 = vunpack.c.l.b16 %v3441
        %v3475 = vunpack.c.l.b16 %v3442
        %v3476 = vunpack.c.l.b16 %v3443
        %v3477 = vpack.c.b16 %v3462, %v3461
        %v3478 = vpack.c.b16 %v3464, %v3463
        %v3479 = vpack.c.b16 %v3466, %v3465
        %v3480 = vpack.c.b16 %v3468, %v3467
        %v3481 = vpack.c.b16 %v3470, %v3469
        %v3482 = vpack.c.b16 %v3472, %v3471
        %v3483 = vpack.c.b16 %v3474, %v3473
        %v3484 = vpack.c.b16 %v3476, %v3475
        %3493 = vmatprep.subr.bf16.mxu0 0
        %3494 = vmatpush1.bf16.msra.mxu0 %v3477
        %3495 = vmatprep.subr.bf16.mxu0 0
        %3496 = vmatpush1.bf16.msra.mxu0 %v3478
        %3497 = vmatprep.subr.bf16.mxu0 0
        %3498 = vmatpush1.bf16.msra.mxu0 %v3479
        %3499 = vmatprep.subr.bf16.mxu0 0
        %3500 = vmatpush1.bf16.msra.mxu0 %v3480
        %3501 = vmatprep.subr.bf16.mxu0 0
        %3502 = vmatpush1.bf16.msra.mxu0 %v3481
        %3503 = vmatprep.subr.bf16.mxu0 0
        %3504 = vmatpush1.bf16.msra.mxu0 %v3482
        %3505 = vmatprep.subr.bf16.mxu0 0
        %3506 = vmatpush1.bf16.msra.mxu0 %v3483
        %3507 = vmatprep.subr.bf16.mxu0 0
        %3508 = vmatpush1.bf16.msra.mxu0 %v3484
        %3509 = vmatprep.subr.bf16.mxu0 0
        %3510 = vmatpush1.bf16.msra.mxu0 0
        %3511 = vmatprep.subr.bf16.mxu0 0
        %3512 = vmatpush1.bf16.msra.mxu0 0
        %3513 = vmatprep.subr.bf16.mxu0 0
        %3514 = vmatpush1.bf16.msra.mxu0 0
        %3515 = vmatprep.subr.bf16.mxu0 0
        %3516 = vmatpush1.bf16.msra.mxu0 0
        %3517 = vmatprep.subr.bf16.mxu0 0
        %3518 = vmatpush1.bf16.msra.mxu0 0
        %3519 = vmatprep.subr.bf16.mxu0 0
        %3520 = vmatpush1.bf16.msra.mxu0 0
        %3521 = vmatprep.subr.bf16.mxu0 0
        %3522 = vmatpush1.bf16.msra.mxu0 0
        %3523 = vmatprep.subr.bf16.mxu0 0
        %3524 = vmatpush1.bf16.msra.mxu0 0
        %3525 = vmatprep.mubr.bf16.mxu0 0
        %3526 = vmatmul.mubr.bf16.gmra.mrb[0].mxu0 %v3420
        %v3527 = vpop.f32.mrb[0].mxu0
        %v3528 = vadd.f32 %v3444, %v3527
        %v3529 = vpop.f32.mrb[0].mxu0
        %v3530 = vpop.f32.mrb[0].mxu0
        %v3531 = vadd.f32 %v3444, %v3530
        %v3532 = vpop.f32.mrb[0].mxu0
        %3533 = vmatprep.mubr.bf16.mxu0 0
        %3534 = vmatmul.mubr.bf16.gmra.mrb[0].mxu0 %v3421
        %v3535 = vpop.f32.mrb[0].mxu0
        %v3536 = vadd.f32 %v3444, %v3535
        %v3537 = vpop.f32.mrb[0].mxu0
        %v3538 = vpop.f32.mrb[0].mxu0
        %v3539 = vadd.f32 %v3444, %v3538
        %v3540 = vpop.f32.mrb[0].mxu0
        %3541 = vmatprep.mubr.bf16.mxu0 0
        %3542 = vmatmul.mubr.bf16.gmra.mrb[0].mxu0 %v3422
        %v3543 = vpop.f32.mrb[0].mxu0
        %v3544 = vadd.f32 %v3444, %v3543
        %v3545 = vpop.f32.mrb[0].mxu0
        %v3546 = vpop.f32.mrb[0].mxu0
        %v3547 = vadd.f32 %v3444, %v3546
        %v3548 = vpop.f32.mrb[0].mxu0
        %3549 = vmatprep.mubr.bf16.mxu0 0
        %3550 = vmatmul.mubr.bf16.gmra.mrb[0].mxu0 %v3423
        %v3551 = vpop.f32.mrb[0].mxu0
        %v3552 = vadd.f32 %v3444, %v3551
        %v3553 = vpop.f32.mrb[0].mxu0
        %v3554 = vpop.f32.mrb[0].mxu0
        %v3555 = vadd.f32 %v3444, %v3554
        %v3556 = vpop.f32.mrb[0].mxu0
        %3557 = vmatprep.mubr.bf16.mxu0 0
        %3558 = vmatmul.mubr.bf16.gmra.mrb[0].mxu0 %v3424
        %v3559 = vpop.f32.mrb[0].mxu0
        %v3560 = vadd.f32 %v3444, %v3559
        %v3561 = vpop.f32.mrb[0].mxu0
        %v3562 = vpop.f32.mrb[0].mxu0
        %v3563 = vadd.f32 %v3444, %v3562
        %v3564 = vpop.f32.mrb[0].mxu0
        %3565 = vmatprep.mubr.bf16.mxu0 0
        %3566 = vmatmul.mubr.bf16.gmra.mrb[0].mxu0 %v3425
        %v3567 = vpop.f32.mrb[0].mxu0
        %v3568 = vadd.f32 %v3444, %v3567
        %v3569 = vpop.f32.mrb[0].mxu0
        %v3570 = vpop.f32.mrb[0].mxu0
        %v3571 = vadd.f32 %v3444, %v3570
        %v3572 = vpop.f32.mrb[0].mxu0
        %3573 = vmatprep.mubr.bf16.mxu0 0
        %3574 = vmatmul.mubr.bf16.gmra.mrb[0].mxu0 %v3426
        %v3575 = vpop.f32.mrb[0].mxu0
        %v3576 = vadd.f32 %v3444, %v3575
        %v3577 = vpop.f32.mrb[0].mxu0
        %v3578 = vpop.f32.mrb[0].mxu0
        %v3579 = vadd.f32 %v3444, %v3578
        %v3580 = vpop.f32.mrb[0].mxu0
        %3581 = vmatprep.mubr.bf16.mxu0 0
        %3582 = vmatmul.mubr.bf16.gmra.mrb[0].mxu0 %v3427
        %v3583 = vpop.f32.mrb[0].mxu0
        %v3584 = vadd.f32 %v3444, %v3583
        %v3585 = vpop.f32.mrb[0].mxu0
        %v3586 = vpop.f32.mrb[0].mxu0
        %v3587 = vadd.f32 %v3444, %v3586
        %v3588 = vpop.f32.mrb[0].mxu0
        %3589 = vdwg.mxu0
        %v3590 = vmax.f32 %v3528, 0.0
        %v3591 = vmax.f32 %v3531, 0.0
        %v3592 = vmax.f32 %v3536, 0.0
        %v3593 = vmax.f32 %v3539, 0.0
        %v3594 = vmax.f32 %v3544, 0.0
        %v3595 = vmax.f32 %v3547, 0.0
        %v3596 = vmax.f32 %v3552, 0.0
        %v3597 = vmax.f32 %v3555, 0.0
        %v3598 = vmax.f32 %v3560, 0.0
        %v3599 = vmax.f32 %v3563, 0.0
        %v3600 = vmax.f32 %v3568, 0.0
        %v3601 = vmax.f32 %v3571, 0.0
        %v3602 = vmax.f32 %v3576, 0.0
        %v3603 = vmax.f32 %v3579, 0.0
        %v3604 = vmax.f32 %v3584, 0.0
        %v3605 = vmax.f32 %v3587, 0.0
        %v3606 = vpack.c.bf16 %v3591, %v3590
        %v3607 = vpack.c.bf16 %v3593, %v3592
        %v3608 = vpack.c.bf16 %v3595, %v3594
        %v3609 = vpack.c.bf16 %v3597, %v3596
        %v3610 = vpack.c.bf16 %v3599, %v3598
        %v3611 = vpack.c.bf16 %v3601, %v3600
        %v3612 = vpack.c.bf16 %v3603, %v3602
        %v3613 = vpack.c.bf16 %v3605, %v3604
        %v3614 = vld [vmem:[#allocation5 + $0xa80] sm:$0xff]
        %v3615 = vld [vmem:[#allocation5 + $0xa8c] sm:$0xff]
        %v3616 = vld [vmem:[#allocation5 + $0xa98] sm:$0xff]
        %v3617 = vld [vmem:[#allocation5 + $0xaa4] sm:$0xff]
        %v3618 = vld [vmem:[#allocation5 + $0xab0] sm:$0xff]
        %v3619 = vld [vmem:[#allocation5 + $0xabc] sm:$0xff]
        %v3620 = vld [vmem:[#allocation5 + $0xac8] sm:$0xff]
        %v3621 = vld [vmem:[#allocation5 + $0xad4] sm:$0xff]
        %v3622 = vld [vmem:[#allocation5 + $0xae0] sm:$0xff]
        %v3623 = vld [vmem:[#allocation5 + $0xaec] sm:$0xff]
        %v3624 = vld [vmem:[#allocation5 + $0xaf8] sm:$0xff]
        %v3625 = vld [vmem:[#allocation5 + $0xb04] sm:$0xff]
        %v3626 = vld [vmem:[#allocation5 + $0xb10] sm:$0xff]
        %v3627 = vld [vmem:[#allocation5 + $0xb1c] sm:$0xff]
        %v3628 = vld [vmem:[#allocation5 + $0xb28] sm:$0xff]
        %v3629 = vld [vmem:[#allocation5 + $0xb34] sm:$0xff]
        %s3630 = scalar_lea.vmem [#allocation8], 6
        %v3631 = vld [vmem:[%s3630] ss:$8 sm:$0x3]
        %v3633 = vlaneseq
        %v3634 = vshrl.u32 %v3633, 7
        %v3635 = vsub.s32 0, %v3634
        %v3636 = vrot.slane %v3631, %v3635
        %v3637 = vlaneseq
        %v3638 = vshrl.u32 %v3637, 7
        %v3639 = vsub.s32 1, %v3638
        %v3640 = vrot.slane %v3631, %v3639
        %v3659 = vunpack.c.l.b16 %v3614
        %v3660 = vunpack.c.h.b16 %v3614
        %v3661 = vunpack.c.l.b16 %v3615
        %v3662 = vunpack.c.h.b16 %v3615
        %v3663 = vunpack.c.l.b16 %v3616
        %v3664 = vunpack.c.h.b16 %v3616
        %v3665 = vunpack.c.l.b16 %v3617
        %v3666 = vunpack.c.h.b16 %v3617
        %v3667 = vunpack.c.l.b16 %v3618
        %v3668 = vunpack.c.h.b16 %v3618
        %v3669 = vunpack.c.l.b16 %v3619
        %v3670 = vunpack.c.h.b16 %v3619
        %v3671 = vunpack.c.l.b16 %v3620
        %v3672 = vunpack.c.h.b16 %v3620
        %v3673 = vunpack.c.l.b16 %v3621
        %v3674 = vunpack.c.h.b16 %v3621
        %v3675 = vunpack.c.l.b16 %v3622
        %v3676 = vunpack.c.h.b16 %v3622
        %v3677 = vunpack.c.l.b16 %v3623
        %v3678 = vunpack.c.h.b16 %v3623
        %v3679 = vunpack.c.l.b16 %v3624
        %v3680 = vunpack.c.h.b16 %v3624
        %v3681 = vunpack.c.l.b16 %v3625
        %v3682 = vunpack.c.h.b16 %v3625
        %v3683 = vunpack.c.l.b16 %v3626
        %v3684 = vunpack.c.h.b16 %v3626
        %v3685 = vunpack.c.l.b16 %v3627
        %v3686 = vunpack.c.h.b16 %v3627
        %v3687 = vunpack.c.l.b16 %v3628
        %v3688 = vunpack.c.h.b16 %v3628
        %v3689 = vunpack.c.l.b16 %v3629
        %v3690 = vunpack.c.h.b16 %v3629
        %v3691 = vpack.c.b16 %v3661, %v3659
        %v3692 = vpack.c.b16 %v3662, %v3660
        %v3693 = vpack.c.b16 %v3665, %v3663
        %v3694 = vpack.c.b16 %v3666, %v3664
        %v3695 = vpack.c.b16 %v3669, %v3667
        %v3696 = vpack.c.b16 %v3670, %v3668
        %v3697 = vpack.c.b16 %v3673, %v3671
        %v3698 = vpack.c.b16 %v3674, %v3672
        %v3699 = vpack.c.b16 %v3677, %v3675
        %v3700 = vpack.c.b16 %v3678, %v3676
        %v3701 = vpack.c.b16 %v3681, %v3679
        %v3702 = vpack.c.b16 %v3682, %v3680
        %v3703 = vpack.c.b16 %v3685, %v3683
        %v3704 = vpack.c.b16 %v3686, %v3684
        %v3705 = vpack.c.b16 %v3689, %v3687
        %v3706 = vpack.c.b16 %v3690, %v3688
        %3723 = vmatprep.subr.bf16.mxu0 %v3692
        %3724 = vmatpush1.bf16.msra.mxu0 %v3691
        %3725 = vmatprep.subr.bf16.mxu0 %v3694
        %3726 = vmatpush1.bf16.msra.mxu0 %v3693
        %3727 = vmatprep.subr.bf16.mxu0 %v3696
        %3728 = vmatpush1.bf16.msra.mxu0 %v3695
        %3729 = vmatprep.subr.bf16.mxu0 %v3698
        %3730 = vmatpush1.bf16.msra.mxu0 %v3697
        %3731 = vmatprep.subr.bf16.mxu0 %v3700
        %3732 = vmatpush1.bf16.msra.mxu0 %v3699
        %3733 = vmatprep.subr.bf16.mxu0 %v3702
        %3734 = vmatpush1.bf16.msra.mxu0 %v3701
        %3735 = vmatprep.subr.bf16.mxu0 %v3704
        %3736 = vmatpush1.bf16.msra.mxu0 %v3703
        %3737 = vmatprep.subr.bf16.mxu0 %v3706
        %3738 = vmatpush1.bf16.msra.mxu0 %v3705
        %3739 = vmatprep.subr.bf16.mxu0 0
        %3740 = vmatpush1.bf16.msra.mxu0 0
        %3741 = vmatprep.subr.bf16.mxu0 0
        %3742 = vmatpush1.bf16.msra.mxu0 0
        %3743 = vmatprep.subr.bf16.mxu0 0
        %3744 = vmatpush1.bf16.msra.mxu0 0
        %3745 = vmatprep.subr.bf16.mxu0 0
        %3746 = vmatpush1.bf16.msra.mxu0 0
        %3747 = vmatprep.subr.bf16.mxu0 0
        %3748 = vmatpush1.bf16.msra.mxu0 0
        %3749 = vmatprep.subr.bf16.mxu0 0
        %3750 = vmatpush1.bf16.msra.mxu0 0
        %3751 = vmatprep.subr.bf16.mxu0 0
        %3752 = vmatpush1.bf16.msra.mxu0 0
        %3753 = vmatprep.subr.bf16.mxu0 0
        %3754 = vmatpush1.bf16.msra.mxu0 0
        %3755 = vmatprep.mubr.bf16.mxu0 0
        %3756 = vmatmul.mubr.bf16.gmra.mrb[0].mxu0 %v3606
        %v3757 = vpop.f32.mrb[0].mxu0
        %v3758 = vadd.f32 %v3636, %v3757
        %v3759 = vpop.f32.mrb[0].mxu0
        %v3760 = vadd.f32 %v3640, %v3759
        %v3761 = vpop.f32.mrb[0].mxu0
        %v3762 = vadd.f32 %v3636, %v3761
        %v3763 = vpop.f32.mrb[0].mxu0
        %v3764 = vadd.f32 %v3640, %v3763
        %3765 = vmatprep.mubr.bf16.mxu0 0
        %3766 = vmatmul.mubr.bf16.gmra.mrb[0].mxu0 %v3607
        %v3767 = vpop.f32.mrb[0].mxu0
        %v3768 = vadd.f32 %v3636, %v3767
        %v3769 = vpop.f32.mrb[0].mxu0
        %v3770 = vadd.f32 %v3640, %v3769
        %v3771 = vpop.f32.mrb[0].mxu0
        %v3772 = vadd.f32 %v3636, %v3771
        %v3773 = vpop.f32.mrb[0].mxu0
        %v3774 = vadd.f32 %v3640, %v3773
        %3775 = vmatprep.mubr.bf16.mxu0 0
        %3776 = vmatmul.mubr.bf16.gmra.mrb[0].mxu0 %v3608
        %v3777 = vpop.f32.mrb[0].mxu0
        %v3778 = vadd.f32 %v3636, %v3777
        %v3779 = vpop.f32.mrb[0].mxu0
        %v3780 = vadd.f32 %v3640, %v3779
        %v3781 = vpop.f32.mrb[0].mxu0
        %v3782 = vadd.f32 %v3636, %v3781
        %v3783 = vpop.f32.mrb[0].mxu0
        %v3784 = vadd.f32 %v3640, %v3783
        %3785 = vmatprep.mubr.bf16.mxu0 0
        %3786 = vmatmul.mubr.bf16.gmra.mrb[0].mxu0 %v3609
        %v3787 = vpop.f32.mrb[0].mxu0
        %v3788 = vadd.f32 %v3636, %v3787
        %v3789 = vpop.f32.mrb[0].mxu0
        %v3790 = vadd.f32 %v3640, %v3789
        %v3791 = vpop.f32.mrb[0].mxu0
        %v3792 = vadd.f32 %v3636, %v3791
        %v3793 = vpop.f32.mrb[0].mxu0
        %v3794 = vadd.f32 %v3640, %v3793
        %3795 = vmatprep.mubr.bf16.mxu0 0
        %3796 = vmatmul.mubr.bf16.gmra.mrb[0].mxu0 %v3610
        %v3797 = vpop.f32.mrb[0].mxu0
        %v3798 = vadd.f32 %v3636, %v3797
        %v3799 = vpop.f32.mrb[0].mxu0
        %v3800 = vadd.f32 %v3640, %v3799
        %v3801 = vpop.f32.mrb[0].mxu0
        %v3802 = vadd.f32 %v3636, %v3801
        %v3803 = vpop.f32.mrb[0].mxu0
        %v3804 = vadd.f32 %v3640, %v3803
        %3805 = vmatprep.mubr.bf16.mxu0 0
        %3806 = vmatmul.mubr.bf16.gmra.mrb[0].mxu0 %v3611
        %v3807 = vpop.f32.mrb[0].mxu0
        %v3808 = vadd.f32 %v3636, %v3807
        %v3809 = vpop.f32.mrb[0].mxu0
        %v3810 = vadd.f32 %v3640, %v3809
        %v3811 = vpop.f32.mrb[0].mxu0
        %v3812 = vadd.f32 %v3636, %v3811
        %v3813 = vpop.f32.mrb[0].mxu0
        %v3814 = vadd.f32 %v3640, %v3813
        %3815 = vmatprep.mubr.bf16.mxu0 0
        %3816 = vmatmul.mubr.bf16.gmra.mrb[0].mxu0 %v3612
        %v3817 = vpop.f32.mrb[0].mxu0
        %v3818 = vadd.f32 %v3636, %v3817
        %v3819 = vpop.f32.mrb[0].mxu0
        %v3820 = vadd.f32 %v3640, %v3819
        %v3821 = vpop.f32.mrb[0].mxu0
        %v3822 = vadd.f32 %v3636, %v3821
        %v3823 = vpop.f32.mrb[0].mxu0
        %v3824 = vadd.f32 %v3640, %v3823
        %3825 = vmatprep.mubr.bf16.mxu0 0
        %3826 = vmatmul.mubr.bf16.gmra.mrb[0].mxu0 %v3613
        %v3827 = vpop.f32.mrb[0].mxu0
        %v3828 = vadd.f32 %v3636, %v3827
        %v3829 = vpop.f32.mrb[0].mxu0
        %v3830 = vadd.f32 %v3640, %v3829
        %v3831 = vpop.f32.mrb[0].mxu0
        %v3832 = vadd.f32 %v3636, %v3831
        %v3833 = vpop.f32.mrb[0].mxu0
        %v3834 = vadd.f32 %v3640, %v3833
        %3835 = vdwg.mxu0
        %v3836 = vmax.f32 %v3758, 0.0
        %v3837 = vmax.f32 %v3760, 0.0
        %v3838 = vmax.f32 %v3762, 0.0
        %v3839 = vmax.f32 %v3764, 0.0
        %v3840 = vmax.f32 %v3768, 0.0
        %v3841 = vmax.f32 %v3770, 0.0
        %v3842 = vmax.f32 %v3772, 0.0
        %v3843 = vmax.f32 %v3774, 0.0
        %v3844 = vmax.f32 %v3778, 0.0
        %v3845 = vmax.f32 %v3780, 0.0
        %v3846 = vmax.f32 %v3782, 0.0
        %v3847 = vmax.f32 %v3784, 0.0
        %v3848 = vmax.f32 %v3788, 0.0
        %v3849 = vmax.f32 %v3790, 0.0
        %v3850 = vmax.f32 %v3792, 0.0
        %v3851 = vmax.f32 %v3794, 0.0
        %v3852 = vmax.f32 %v3798, 0.0
        %v3853 = vmax.f32 %v3800, 0.0
        %v3854 = vmax.f32 %v3802, 0.0
        %v3855 = vmax.f32 %v3804, 0.0
        %v3856 = vmax.f32 %v3808, 0.0
        %v3857 = vmax.f32 %v3810, 0.0
        %v3858 = vmax.f32 %v3812, 0.0
        %v3859 = vmax.f32 %v3814, 0.0
        %v3860 = vmax.f32 %v3818, 0.0
        %v3861 = vmax.f32 %v3820, 0.0
        %v3862 = vmax.f32 %v3822, 0.0
        %v3863 = vmax.f32 %v3824, 0.0
        %v3864 = vmax.f32 %v3828, 0.0
        %v3865 = vmax.f32 %v3830, 0.0
        %v3866 = vmax.f32 %v3832, 0.0
        %v3867 = vmax.f32 %v3834, 0.0
        %v3868 = vpack.c.bf16 %v3838, %v3836
        %v3869 = vpack.c.bf16 %v3839, %v3837
        %v3870 = vpack.c.bf16 %v3842, %v3840
        %v3871 = vpack.c.bf16 %v3843, %v3841
        %v3872 = vpack.c.bf16 %v3846, %v3844
        %v3873 = vpack.c.bf16 %v3847, %v3845
        %v3874 = vpack.c.bf16 %v3850, %v3848
        %v3875 = vpack.c.bf16 %v3851, %v3849
        %v3876 = vpack.c.bf16 %v3854, %v3852
        %v3877 = vpack.c.bf16 %v3855, %v3853
        %v3878 = vpack.c.bf16 %v3858, %v3856
        %v3879 = vpack.c.bf16 %v3859, %v3857
        %v3880 = vpack.c.bf16 %v3862, %v3860
        %v3881 = vpack.c.bf16 %v3863, %v3861
        %v3882 = vpack.c.bf16 %v3866, %v3864
        %v3883 = vpack.c.bf16 %v3867, %v3865
        %v3884 = vld [vmem:[#allocation5 + $0xb40] sm:$0xff]
        %v3885 = vld [vmem:[#allocation5 + $0xb48] sm:$0xf]
        %v3886 = vld [vmem:[#allocation5 + $0xb4c] sm:$0xff]
        %v3887 = vld [vmem:[#allocation5 + $0xb54] sm:$0xf]
        %v3888 = vld [vmem:[#allocation5 + $0xb58] sm:$0xff]
        %v3889 = vld [vmem:[#allocation5 + $0xb60] sm:$0xf]
        %v3890 = vld [vmem:[#allocation5 + $0xb64] sm:$0xff]
        %v3891 = vld [vmem:[#allocation5 + $0xb6c] sm:$0xf]
        %v3892 = vld [vmem:[#allocation5 + $0xb70] sm:$0xff]
        %v3893 = vld [vmem:[#allocation5 + $0xb78] sm:$0xf]
        %v3894 = vld [vmem:[#allocation5 + $0xb7c] sm:$0xff]
        %v3895 = vld [vmem:[#allocation5 + $0xb84] sm:$0xf]
        %v3896 = vld [vmem:[#allocation5 + $0xb88] sm:$0xff]
        %v3897 = vld [vmem:[#allocation5 + $0xb90] sm:$0xf]
        %v3898 = vld [vmem:[#allocation5 + $0xb94] sm:$0xff]
        %v3899 = vld [vmem:[#allocation5 + $0xb9c] sm:$0xf]
        %v3900 = vld [vmem:[#allocation5 + $0xba0] sm:$0xff]
        %v3901 = vld [vmem:[#allocation5 + $0xba8] sm:$0xf]
        %v3902 = vld [vmem:[#allocation5 + $0xbac] sm:$0xff]
        %v3903 = vld [vmem:[#allocation5 + $0xbb4] sm:$0xf]
        %v3904 = vld [vmem:[#allocation5 + $0xbb8] sm:$0xff]
        %v3905 = vld [vmem:[#allocation5 + $0xbc0] sm:$0xf]
        %v3906 = vld [vmem:[#allocation5 + $0xbc4] sm:$0xff]
        %v3907 = vld [vmem:[#allocation5 + $0xbcc] sm:$0xf]
        %v3908 = vld [vmem:[#allocation5 + $0xbd0] sm:$0xff]
        %v3909 = vld [vmem:[#allocation5 + $0xbd8] sm:$0xf]
        %v3910 = vld [vmem:[#allocation5 + $0xbdc] sm:$0xff]
        %v3911 = vld [vmem:[#allocation5 + $0xbe4] sm:$0xf]
        %v3912 = vld [vmem:[#allocation5 + $0xbe8] sm:$0xff]
        %v3913 = vld [vmem:[#allocation5 + $0xbf0] sm:$0xf]
        %v3914 = vld [vmem:[#allocation5 + $0xbf4] sm:$0xff]
        %v3915 = vld [vmem:[#allocation5 + $0xbfc] sm:$0xf]
        %v3916 = vld [vmem:[#allocation5 + $0xc00] sm:$0xff]
        %v3917 = vld [vmem:[#allocation5 + $0xc08] sm:$0xf]
        %v3918 = vld [vmem:[#allocation5 + $0xc0c] sm:$0xff]
        %v3919 = vld [vmem:[#allocation5 + $0xc14] sm:$0xf]
        %v3920 = vld [vmem:[#allocation5 + $0xc18] sm:$0xff]
        %v3921 = vld [vmem:[#allocation5 + $0xc20] sm:$0xf]
        %v3922 = vld [vmem:[#allocation5 + $0xc24] sm:$0xff]
        %v3923 = vld [vmem:[#allocation5 + $0xc2c] sm:$0xf]
        %v3924 = vld [vmem:[#allocation5 + $0xc30] sm:$0xff]
        %v3925 = vld [vmem:[#allocation5 + $0xc38] sm:$0xf]
        %v3926 = vld [vmem:[#allocation5 + $0xc3c] sm:$0xff]
        %v3927 = vld [vmem:[#allocation5 + $0xc44] sm:$0xf]
        %v3928 = vld [vmem:[#allocation5 + $0xc48] sm:$0xff]
        %v3929 = vld [vmem:[#allocation5 + $0xc50] sm:$0xf]
        %v3930 = vld [vmem:[#allocation5 + $0xc54] sm:$0xff]
        %v3931 = vld [vmem:[#allocation5 + $0xc5c] sm:$0xf]
        %v3932 = vld [vmem:[#allocation5 + $0xc60] sm:$0xff]
        %v3933 = vld [vmem:[#allocation5 + $0xc68] sm:$0xf]
        %v3934 = vld [vmem:[#allocation5 + $0xc6c] sm:$0xff]
        %v3935 = vld [vmem:[#allocation5 + $0xc74] sm:$0xf]
        %v3936 = vld [vmem:[#allocation5 + $0xc78] sm:$0xff]
        %v3937 = vld [vmem:[#allocation5 + $0xc80] sm:$0xf]
        %v3938 = vld [vmem:[#allocation5 + $0xc84] sm:$0xff]
        %v3939 = vld [vmem:[#allocation5 + $0xc8c] sm:$0xf]
        %v3940 = vld [vmem:[#allocation5 + $0xc90] sm:$0xff]
        %v3941 = vld [vmem:[#allocation5 + $0xc98] sm:$0xf]
        %v3942 = vld [vmem:[#allocation5 + $0xc9c] sm:$0xff]
        %v3943 = vld [vmem:[#allocation5 + $0xca4] sm:$0xf]
        %v3944 = vld [vmem:[#allocation5 + $0xca8] sm:$0xff]
        %v3945 = vld [vmem:[#allocation5 + $0xcb0] sm:$0xf]
        %v3946 = vld [vmem:[#allocation5 + $0xcb4] sm:$0xff]
        %v3947 = vld [vmem:[#allocation5 + $0xcbc] sm:$0xf]
        %s3948 = scalar_lea.vmem [#allocation8], 7
        %v3949 = vld [vmem:[%s3948] ss:$8 sm:$0x7]
        %v3951 = vlaneseq
        %v3952 = vshrl.u32 %v3951, 7
        %v3953 = vsub.s32 0, %v3952
        %v3954 = vrot.slane %v3949, %v3953
        %v3955 = vlaneseq
        %v3956 = vshrl.u32 %v3955, 7
        %v3957 = vsub.s32 1, %v3956
        %v3958 = vrot.slane %v3949, %v3957
        %v3959 = vlaneseq
        %v3960 = vshrl.u32 %v3959, 7
        %v3961 = vsub.s32 2, %v3960
        %v3962 = vrot.slane %v3949, %v3961
        %v4030 = vunpack.c.l.b16 %v3884
        %v4031 = vunpack.c.h.b16 %v3884
        %v4032 = vunpack.c.l.b16 %v3885
        %v4033 = vunpack.c.l.b16 %v3886
        %v4034 = vunpack.c.h.b16 %v3886
        %v4035 = vunpack.c.l.b16 %v3887
        %v4036 = vunpack.c.l.b16 %v3888
        %v4037 = vunpack.c.h.b16 %v3888
        %v4038 = vunpack.c.l.b16 %v3889
        %v4039 = vunpack.c.l.b16 %v3890
        %v4040 = vunpack.c.h.b16 %v3890
        %v4041 = vunpack.c.l.b16 %v3891
        %v4042 = vunpack.c.l.b16 %v3892
        %v4043 = vunpack.c.h.b16 %v3892
        %v4044 = vunpack.c.l.b16 %v3893
        %v4045 = vunpack.c.l.b16 %v3894
        %v4046 = vunpack.c.h.b16 %v3894
        %v4047 = vunpack.c.l.b16 %v3895
        %v4048 = vunpack.c.l.b16 %v3896
        %v4049 = vunpack.c.h.b16 %v3896
        %v4050 = vunpack.c.l.b16 %v3897
        %v4051 = vunpack.c.l.b16 %v3898
        %v4052 = vunpack.c.h.b16 %v3898
        %v4053 = vunpack.c.l.b16 %v3899
        %v4054 = vunpack.c.l.b16 %v3900
        %v4055 = vunpack.c.h.b16 %v3900
        %v4056 = vunpack.c.l.b16 %v3901
        %v4057 = vunpack.c.l.b16 %v3902
        %v4058 = vunpack.c.h.b16 %v3902
        %v4059 = vunpack.c.l.b16 %v3903
        %v4060 = vunpack.c.l.b16 %v3904
        %v4061 = vunpack.c.h.b16 %v3904
        %v4062 = vunpack.c.l.b16 %v3905
        %v4063 = vunpack.c.l.b16 %v3906
        %v4064 = vunpack.c.h.b16 %v3906
        %v4065 = vunpack.c.l.b16 %v3907
        %v4066 = vunpack.c.l.b16 %v3908
        %v4067 = vunpack.c.h.b16 %v3908
        %v4068 = vunpack.c.l.b16 %v3909
        %v4069 = vunpack.c.l.b16 %v3910
        %v4070 = vunpack.c.h.b16 %v3910
        %v4071 = vunpack.c.l.b16 %v3911
        %v4072 = vunpack.c.l.b16 %v3912
        %v4073 = vunpack.c.h.b16 %v3912
        %v4074 = vunpack.c.l.b16 %v3913
        %v4075 = vunpack.c.l.b16 %v3914
        %v4076 = vunpack.c.h.b16 %v3914
        %v4077 = vunpack.c.l.b16 %v3915
        %v4078 = vunpack.c.l.b16 %v3916
        %v4079 = vunpack.c.h.b16 %v3916
        %v4080 = vunpack.c.l.b16 %v3917
        %v4081 = vunpack.c.l.b16 %v3918
        %v4082 = vunpack.c.h.b16 %v3918
        %v4083 = vunpack.c.l.b16 %v3919
        %v4084 = vunpack.c.l.b16 %v3920
        %v4085 = vunpack.c.h.b16 %v3920
        %v4086 = vunpack.c.l.b16 %v3921
        %v4087 = vunpack.c.l.b16 %v3922
        %v4088 = vunpack.c.h.b16 %v3922
        %v4089 = vunpack.c.l.b16 %v3923
        %v4090 = vunpack.c.l.b16 %v3924
        %v4091 = vunpack.c.h.b16 %v3924
        %v4092 = vunpack.c.l.b16 %v3925
        %v4093 = vunpack.c.l.b16 %v3926
        %v4094 = vunpack.c.h.b16 %v3926
        %v4095 = vunpack.c.l.b16 %v3927
        %v4096 = vunpack.c.l.b16 %v3928
        %v4097 = vunpack.c.h.b16 %v3928
        %v4098 = vunpack.c.l.b16 %v3929
        %v4099 = vunpack.c.l.b16 %v3930
        %v4100 = vunpack.c.h.b16 %v3930
        %v4101 = vunpack.c.l.b16 %v3931
        %v4102 = vunpack.c.l.b16 %v3932
        %v4103 = vunpack.c.h.b16 %v3932
        %v4104 = vunpack.c.l.b16 %v3933
        %v4105 = vunpack.c.l.b16 %v3934
        %v4106 = vunpack.c.h.b16 %v3934
        %v4107 = vunpack.c.l.b16 %v3935
        %v4108 = vunpack.c.l.b16 %v3936
        %v4109 = vunpack.c.h.b16 %v3936
        %v4110 = vunpack.c.l.b16 %v3937
        %v4111 = vunpack.c.l.b16 %v3938
        %v4112 = vunpack.c.h.b16 %v3938
        %v4113 = vunpack.c.l.b16 %v3939
        %v4114 = vunpack.c.l.b16 %v3940
        %v4115 = vunpack.c.h.b16 %v3940
        %v4116 = vunpack.c.l.b16 %v3941
        %v4117 = vunpack.c.l.b16 %v3942
        %v4118 = vunpack.c.h.b16 %v3942
        %v4119 = vunpack.c.l.b16 %v3943
        %v4120 = vunpack.c.l.b16 %v3944
        %v4121 = vunpack.c.h.b16 %v3944
        %v4122 = vunpack.c.l.b16 %v3945
        %v4123 = vunpack.c.l.b16 %v3946
        %v4124 = vunpack.c.h.b16 %v3946
        %v4125 = vunpack.c.l.b16 %v3947
        %v4126 = vpack.c.b16 %v4033, %v4030
        %v4127 = vpack.c.b16 %v4034, %v4031
        %v4128 = vpack.c.b16 %v4035, %v4032
        %v4129 = vpack.c.b16 %v4039, %v4036
        %v4130 = vpack.c.b16 %v4040, %v4037
        %v4131 = vpack.c.b16 %v4041, %v4038
        %v4132 = vpack.c.b16 %v4045, %v4042
        %v4133 = vpack.c.b16 %v4046, %v4043
        %v4134 = vpack.c.b16 %v4047, %v4044
        %v4135 = vpack.c.b16 %v4051, %v4048
        %v4136 = vpack.c.b16 %v4052, %v4049
        %v4137 = vpack.c.b16 %v4053, %v4050
        %v4138 = vpack.c.b16 %v4057, %v4054
        %v4139 = vpack.c.b16 %v4058, %v4055
        %v4140 = vpack.c.b16 %v4059, %v4056
        %v4141 = vpack.c.b16 %v4063, %v4060
        %v4142 = vpack.c.b16 %v4064, %v4061
        %v4143 = vpack.c.b16 %v4065, %v4062
        %v4144 = vpack.c.b16 %v4069, %v4066
        %v4145 = vpack.c.b16 %v4070, %v4067
        %v4146 = vpack.c.b16 %v4071, %v4068
        %v4147 = vpack.c.b16 %v4075, %v4072
        %v4148 = vpack.c.b16 %v4076, %v4073
        %v4149 = vpack.c.b16 %v4077, %v4074
        %v4150 = vpack.c.b16 %v4081, %v4078
        %v4151 = vpack.c.b16 %v4082, %v4079
        %v4152 = vpack.c.b16 %v4083, %v4080
        %v4153 = vpack.c.b16 %v4087, %v4084
        %v4154 = vpack.c.b16 %v4088, %v4085
        %v4155 = vpack.c.b16 %v4089, %v4086
        %v4156 = vpack.c.b16 %v4093, %v4090
        %v4157 = vpack.c.b16 %v4094, %v4091
        %v4158 = vpack.c.b16 %v4095, %v4092
        %v4159 = vpack.c.b16 %v4099, %v4096
        %v4160 = vpack.c.b16 %v4100, %v4097
        %v4161 = vpack.c.b16 %v4101, %v4098
        %v4162 = vpack.c.b16 %v4105, %v4102
        %v4163 = vpack.c.b16 %v4106, %v4103
        %v4164 = vpack.c.b16 %v4107, %v4104
        %v4165 = vpack.c.b16 %v4111, %v4108
        %v4166 = vpack.c.b16 %v4112, %v4109
        %v4167 = vpack.c.b16 %v4113, %v4110
        %v4168 = vpack.c.b16 %v4117, %v4114
        %v4169 = vpack.c.b16 %v4118, %v4115
        %v4170 = vpack.c.b16 %v4119, %v4116
        %v4171 = vpack.c.b16 %v4123, %v4120
        %v4172 = vpack.c.b16 %v4124, %v4121
        %v4173 = vpack.c.b16 %v4125, %v4122
        %4222 = vmatprep.subr.bf16.mxu0 %v4127
        %4223 = vmatpush1.bf16.msra.mxu0 %v4126
        %4224 = vmatprep.subr.bf16.mxu0 %v4130
        %4225 = vmatpush1.bf16.msra.mxu0 %v4129
        %4226 = vmatprep.subr.bf16.mxu0 %v4133
        %4227 = vmatpush1.bf16.msra.mxu0 %v4132
        %4228 = vmatprep.subr.bf16.mxu0 %v4136
        %4229 = vmatpush1.bf16.msra.mxu0 %v4135
        %4230 = vmatprep.subr.bf16.mxu0 %v4139
        %4231 = vmatpush1.bf16.msra.mxu0 %v4138
        %4232 = vmatprep.subr.bf16.mxu0 %v4142
        %4233 = vmatpush1.bf16.msra.mxu0 %v4141
        %4234 = vmatprep.subr.bf16.mxu0 %v4145
        %4235 = vmatpush1.bf16.msra.mxu0 %v4144
        %4236 = vmatprep.subr.bf16.mxu0 %v4148
        %4237 = vmatpush1.bf16.msra.mxu0 %v4147
        %4238 = vmatprep.subr.bf16.mxu0 %v4151
        %4239 = vmatpush1.bf16.msra.mxu0 %v4150
        %4240 = vmatprep.subr.bf16.mxu0 %v4154
        %4241 = vmatpush1.bf16.msra.mxu0 %v4153
        %4242 = vmatprep.subr.bf16.mxu0 %v4157
        %4243 = vmatpush1.bf16.msra.mxu0 %v4156
        %4244 = vmatprep.subr.bf16.mxu0 %v4160
        %4245 = vmatpush1.bf16.msra.mxu0 %v4159
        %4246 = vmatprep.subr.bf16.mxu0 %v4163
        %4247 = vmatpush1.bf16.msra.mxu0 %v4162
        %4248 = vmatprep.subr.bf16.mxu0 %v4166
        %4249 = vmatpush1.bf16.msra.mxu0 %v4165
        %4250 = vmatprep.subr.bf16.mxu0 %v4169
        %4251 = vmatpush1.bf16.msra.mxu0 %v4168
        %4252 = vmatprep.subr.bf16.mxu0 %v4172
        %4253 = vmatpush1.bf16.msra.mxu0 %v4171
        %4254 = vmatprep.mubr.bf16.mxu0 %v3869
        %4255 = vmatmul.mubr.bf16.gmra.mrb[0].mxu0 %v3868
        %v4256 = vpop.f32.mrb[0].mxu0
        %v4257 = vadd.f32 %v3954, %v4256
        %v4258 = vpop.f32.mrb[0].mxu0
        %v4259 = vadd.f32 %v3958, %v4258
        %v4260 = vpop.f32.mrb[0].mxu0
        %v4261 = vadd.f32 %v3954, %v4260
        %v4262 = vpop.f32.mrb[0].mxu0
        %v4263 = vadd.f32 %v3958, %v4262
        %4264 = vmatprep.mubr.bf16.mxu0 %v3871
        %4265 = vmatmul.mubr.bf16.gmra.mrb[0].mxu0 %v3870
        %v4266 = vpop.f32.mrb[0].mxu0
        %v4267 = vadd.f32 %v3954, %v4266
        %v4268 = vpop.f32.mrb[0].mxu0
        %v4269 = vadd.f32 %v3958, %v4268
        %v4270 = vpop.f32.mrb[0].mxu0
        %v4271 = vadd.f32 %v3954, %v4270
        %v4272 = vpop.f32.mrb[0].mxu0
        %v4273 = vadd.f32 %v3958, %v4272
        %4274 = vmatprep.mubr.bf16.mxu0 %v3873
        %4275 = vmatmul.mubr.bf16.gmra.mrb[0].mxu0 %v3872
        %v4276 = vpop.f32.mrb[0].mxu0
        %v4277 = vadd.f32 %v3954, %v4276
        %v4278 = vpop.f32.mrb[0].mxu0
        %v4279 = vadd.f32 %v3958, %v4278
        %v4280 = vpop.f32.mrb[0].mxu0
        %v4281 = vadd.f32 %v3954, %v4280
        %v4282 = vpop.f32.mrb[0].mxu0
        %v4283 = vadd.f32 %v3958, %v4282
        %4284 = vmatprep.mubr.bf16.mxu0 %v3875
        %4285 = vmatmul.mubr.bf16.gmra.mrb[0].mxu0 %v3874
        %v4286 = vpop.f32.mrb[0].mxu0
        %v4287 = vadd.f32 %v3954, %v4286
        %v4288 = vpop.f32.mrb[0].mxu0
        %v4289 = vadd.f32 %v3958, %v4288
        %v4290 = vpop.f32.mrb[0].mxu0
        %v4291 = vadd.f32 %v3954, %v4290
        %v4292 = vpop.f32.mrb[0].mxu0
        %v4293 = vadd.f32 %v3958, %v4292
        %4294 = vmatprep.mubr.bf16.mxu0 %v3877
        %4295 = vmatmul.mubr.bf16.gmra.mrb[0].mxu0 %v3876
        %v4296 = vpop.f32.mrb[0].mxu0
        %v4297 = vadd.f32 %v3954, %v4296
        %v4298 = vpop.f32.mrb[0].mxu0
        %v4299 = vadd.f32 %v3958, %v4298
        %v4300 = vpop.f32.mrb[0].mxu0
        %v4301 = vadd.f32 %v3954, %v4300
        %v4302 = vpop.f32.mrb[0].mxu0
        %v4303 = vadd.f32 %v3958, %v4302
        %4304 = vmatprep.mubr.bf16.mxu0 %v3879
        %4305 = vmatmul.mubr.bf16.gmra.mrb[0].mxu0 %v3878
        %v4306 = vpop.f32.mrb[0].mxu0
        %v4307 = vadd.f32 %v3954, %v4306
        %v4308 = vpop.f32.mrb[0].mxu0
        %v4309 = vadd.f32 %v3958, %v4308
        %v4310 = vpop.f32.mrb[0].mxu0
        %v4311 = vadd.f32 %v3954, %v4310
        %v4312 = vpop.f32.mrb[0].mxu0
        %v4313 = vadd.f32 %v3958, %v4312
        %4314 = vmatprep.mubr.bf16.mxu0 %v3881
        %4315 = vmatmul.mubr.bf16.gmra.mrb[0].mxu0 %v3880
        %v4316 = vpop.f32.mrb[0].mxu0
        %v4317 = vadd.f32 %v3954, %v4316
        %v4318 = vpop.f32.mrb[0].mxu0
        %v4319 = vadd.f32 %v3958, %v4318
        %v4320 = vpop.f32.mrb[0].mxu0
        %v4321 = vadd.f32 %v3954, %v4320
        %v4322 = vpop.f32.mrb[0].mxu0
        %v4323 = vadd.f32 %v3958, %v4322
        %4324 = vmatprep.mubr.bf16.mxu0 %v3883
        %4325 = vmatmul.mubr.bf16.gmra.mrb[0].mxu0 %v3882
        %v4326 = vpop.f32.mrb[0].mxu0
        %v4327 = vadd.f32 %v3954, %v4326
        %v4328 = vpop.f32.mrb[0].mxu0
        %v4329 = vadd.f32 %v3958, %v4328
        %v4330 = vpop.f32.mrb[0].mxu0
        %v4331 = vadd.f32 %v3954, %v4330
        %v4332 = vpop.f32.mrb[0].mxu0
        %v4333 = vadd.f32 %v3958, %v4332
        %4334 = vdwg.mxu0
        %4335 = vmatprep.subr.bf16.mxu0 0
        %4336 = vmatpush1.bf16.msra.mxu0 %v4128
        %4337 = vmatprep.subr.bf16.mxu0 0
        %4338 = vmatpush1.bf16.msra.mxu0 %v4131
        %4339 = vmatprep.subr.bf16.mxu0 0
        %4340 = vmatpush1.bf16.msra.mxu0 %v4134
        %4341 = vmatprep.subr.bf16.mxu0 0
        %4342 = vmatpush1.bf16.msra.mxu0 %v4137
        %4343 = vmatprep.subr.bf16.mxu0 0
        %4344 = vmatpush1.bf16.msra.mxu0 %v4140
        %4345 = vmatprep.subr.bf16.mxu0 0
        %4346 = vmatpush1.bf16.msra.mxu0 %v4143
        %4347 = vmatprep.subr.bf16.mxu0 0
        %4348 = vmatpush1.bf16.msra.mxu0 %v4146
        %4349 = vmatprep.subr.bf16.mxu0 0
        %4350 = vmatpush1.bf16.msra.mxu0 %v4149
        %4351 = vmatprep.subr.bf16.mxu0 0
        %4352 = vmatpush1.bf16.msra.mxu0 %v4152
        %4353 = vmatprep.subr.bf16.mxu0 0
        %4354 = vmatpush1.bf16.msra.mxu0 %v4155
        %4355 = vmatprep.subr.bf16.mxu0 0
        %4356 = vmatpush1.bf16.msra.mxu0 %v4158
        %4357 = vmatprep.subr.bf16.mxu0 0
        %4358 = vmatpush1.bf16.msra.mxu0 %v4161
        %4359 = vmatprep.subr.bf16.mxu0 0
        %4360 = vmatpush1.bf16.msra.mxu0 %v4164
        %4361 = vmatprep.subr.bf16.mxu0 0
        %4362 = vmatpush1.bf16.msra.mxu0 %v4167
        %4363 = vmatprep.subr.bf16.mxu0 0
        %4364 = vmatpush1.bf16.msra.mxu0 %v4170
        %4365 = vmatprep.subr.bf16.mxu0 0
        %4366 = vmatpush1.bf16.msra.mxu0 %v4173
        %4367 = vmatprep.mubr.bf16.mxu0 %v3869
        %4368 = vmatmul.mubr.bf16.gmra.mrb[0].mxu0 %v3868
        %v4369 = vpop.f32.mrb[0].mxu0
        %v4370 = vadd.f32 %v3962, %v4369
        %v4371 = vpop.f32.mrb[0].mxu0
        %v4372 = vpop.f32.mrb[0].mxu0
        %v4373 = vadd.f32 %v3962, %v4372
        %v4374 = vpop.f32.mrb[0].mxu0
        %4375 = vmatprep.mubr.bf16.mxu0 %v3871
        %4376 = vmatmul.mubr.bf16.gmra.mrb[0].mxu0 %v3870
        %v4377 = vpop.f32.mrb[0].mxu0
        %v4378 = vadd.f32 %v3962, %v4377
        %v4379 = vpop.f32.mrb[0].mxu0
        %v4380 = vpop.f32.mrb[0].mxu0
        %v4381 = vadd.f32 %v3962, %v4380
        %v4382 = vpop.f32.mrb[0].mxu0
        %4383 = vmatprep.mubr.bf16.mxu0 %v3873
        %4384 = vmatmul.mubr.bf16.gmra.mrb[0].mxu0 %v3872
        %v4385 = vpop.f32.mrb[0].mxu0
        %v4386 = vadd.f32 %v3962, %v4385
        %v4387 = vpop.f32.mrb[0].mxu0
        %v4388 = vpop.f32.mrb[0].mxu0
        %v4389 = vadd.f32 %v3962, %v4388
        %v4390 = vpop.f32.mrb[0].mxu0
        %4391 = vmatprep.mubr.bf16.mxu0 %v3875
        %4392 = vmatmul.mubr.bf16.gmra.mrb[0].mxu0 %v3874
        %v4393 = vpop.f32.mrb[0].mxu0
        %v4394 = vadd.f32 %v3962, %v4393
        %v4395 = vpop.f32.mrb[0].mxu0
        %v4396 = vpop.f32.mrb[0].mxu0
        %v4397 = vadd.f32 %v3962, %v4396
        %v4398 = vpop.f32.mrb[0].mxu0
        %4399 = vmatprep.mubr.bf16.mxu0 %v3877
        %4400 = vmatmul.mubr.bf16.gmra.mrb[0].mxu0 %v3876
        %v4401 = vpop.f32.mrb[0].mxu0
        %v4402 = vadd.f32 %v3962, %v4401
        %v4403 = vpop.f32.mrb[0].mxu0
        %v4404 = vpop.f32.mrb[0].mxu0
        %v4405 = vadd.f32 %v3962, %v4404
        %v4406 = vpop.f32.mrb[0].mxu0
        %4407 = vmatprep.mubr.bf16.mxu0 %v3879
        %4408 = vmatmul.mubr.bf16.gmra.mrb[0].mxu0 %v3878
        %v4409 = vpop.f32.mrb[0].mxu0
        %v4410 = vadd.f32 %v3962, %v4409
        %v4411 = vpop.f32.mrb[0].mxu0
        %v4412 = vpop.f32.mrb[0].mxu0
        %v4413 = vadd.f32 %v3962, %v4412
        %v4414 = vpop.f32.mrb[0].mxu0
        %4415 = vmatprep.mubr.bf16.mxu0 %v3881
        %4416 = vmatmul.mubr.bf16.gmra.mrb[0].mxu0 %v3880
        %v4417 = vpop.f32.mrb[0].mxu0
        %v4418 = vadd.f32 %v3962, %v4417
        %v4419 = vpop.f32.mrb[0].mxu0
        %v4420 = vpop.f32.mrb[0].mxu0
        %v4421 = vadd.f32 %v3962, %v4420
        %v4422 = vpop.f32.mrb[0].mxu0
        %4423 = vmatprep.mubr.bf16.mxu0 %v3883
        %4424 = vmatmul.mubr.bf16.gmra.mrb[0].mxu0 %v3882
        %v4425 = vpop.f32.mrb[0].mxu0
        %v4426 = vadd.f32 %v3962, %v4425
        %v4427 = vpop.f32.mrb[0].mxu0
        %v4428 = vpop.f32.mrb[0].mxu0
        %v4429 = vadd.f32 %v3962, %v4428
        %v4430 = vpop.f32.mrb[0].mxu0
        %4431 = vdwg.mxu0
        %v4432 = vmax.f32 %v4257, 0.0
        %v4433 = vmax.f32 %v4259, 0.0
        %v4434 = vmax.f32 %v4370, 0.0
        %v4435 = vmax.f32 %v4261, 0.0
        %v4436 = vmax.f32 %v4263, 0.0
        %v4437 = vmax.f32 %v4373, 0.0
        %v4438 = vmax.f32 %v4267, 0.0
        %v4439 = vmax.f32 %v4269, 0.0
        %v4440 = vmax.f32 %v4378, 0.0
        %v4441 = vmax.f32 %v4271, 0.0
        %v4442 = vmax.f32 %v4273, 0.0
        %v4443 = vmax.f32 %v4381, 0.0
        %v4444 = vmax.f32 %v4277, 0.0
        %v4445 = vmax.f32 %v4279, 0.0
        %v4446 = vmax.f32 %v4386, 0.0
        %v4447 = vmax.f32 %v4281, 0.0
        %v4448 = vmax.f32 %v4283, 0.0
        %v4449 = vmax.f32 %v4389, 0.0
        %v4450 = vmax.f32 %v4287, 0.0
        %v4451 = vmax.f32 %v4289, 0.0
        %v4452 = vmax.f32 %v4394, 0.0
        %v4453 = vmax.f32 %v4291, 0.0
        %v4454 = vmax.f32 %v4293, 0.0
        %v4455 = vmax.f32 %v4397, 0.0
        %v4456 = vmax.f32 %v4297, 0.0
        %v4457 = vmax.f32 %v4299, 0.0
        %v4458 = vmax.f32 %v4402, 0.0
        %v4459 = vmax.f32 %v4301, 0.0
        %v4460 = vmax.f32 %v4303, 0.0
        %v4461 = vmax.f32 %v4405, 0.0
        %v4462 = vmax.f32 %v4307, 0.0
        %v4463 = vmax.f32 %v4309, 0.0
        %v4464 = vmax.f32 %v4410, 0.0
        %v4465 = vmax.f32 %v4311, 0.0
        %v4466 = vmax.f32 %v4313, 0.0
        %v4467 = vmax.f32 %v4413, 0.0
        %v4468 = vmax.f32 %v4317, 0.0
        %v4469 = vmax.f32 %v4319, 0.0
        %v4470 = vmax.f32 %v4418, 0.0
        %v4471 = vmax.f32 %v4321, 0.0
        %v4472 = vmax.f32 %v4323, 0.0
        %v4473 = vmax.f32 %v4421, 0.0
        %v4474 = vmax.f32 %v4327, 0.0
        %v4475 = vmax.f32 %v4329, 0.0
        %v4476 = vmax.f32 %v4426, 0.0
        %v4477 = vmax.f32 %v4331, 0.0
        %v4478 = vmax.f32 %v4333, 0.0
        %v4479 = vmax.f32 %v4429, 0.0
        %v4480 = vpack.c.bf16 %v4435, %v4432
        %v4481 = vpack.c.bf16 %v4436, %v4433
        %v4482 = vpack.c.bf16 %v4437, %v4434
        %v4483 = vpack.c.bf16 %v4441, %v4438
        %v4484 = vpack.c.bf16 %v4442, %v4439
        %v4485 = vpack.c.bf16 %v4443, %v4440
        %v4486 = vpack.c.bf16 %v4447, %v4444
        %v4487 = vpack.c.bf16 %v4448, %v4445
        %v4488 = vpack.c.bf16 %v4449, %v4446
        %v4489 = vpack.c.bf16 %v4453, %v4450
        %v4490 = vpack.c.bf16 %v4454, %v4451
        %v4491 = vpack.c.bf16 %v4455, %v4452
        %v4492 = vpack.c.bf16 %v4459, %v4456
        %v4493 = vpack.c.bf16 %v4460, %v4457
        %v4494 = vpack.c.bf16 %v4461, %v4458
        %v4495 = vpack.c.bf16 %v4465, %v4462
        %v4496 = vpack.c.bf16 %v4466, %v4463
        %v4497 = vpack.c.bf16 %v4467, %v4464
        %v4498 = vpack.c.bf16 %v4471, %v4468
        %v4499 = vpack.c.bf16 %v4472, %v4469
        %v4500 = vpack.c.bf16 %v4473, %v4470
        %v4501 = vpack.c.bf16 %v4477, %v4474
        %v4502 = vpack.c.bf16 %v4478, %v4475
        %v4503 = vpack.c.bf16 %v4479, %v4476
        %v4504 = vld [vmem:[#allocation7] sm:$0xff]
        %v4505 = vld [vmem:[#allocation7 + $0x8] sm:$0xff]
        %v4506 = vld [vmem:[#allocation7 + $0x10] sm:$0xff]
        %v4507 = vld [vmem:[#allocation7 + $0x18] sm:$0xff]
        %v4508 = vld [vmem:[#allocation7 + $0x20] sm:$0xff]
        %v4509 = vld [vmem:[#allocation7 + $0x28] sm:$0xff]
        %v4510 = vld [vmem:[#allocation7 + $0x30] sm:$0xff]
        %v4511 = vld [vmem:[#allocation7 + $0x38] sm:$0xff]
        %v4512 = vld [vmem:[#allocation7 + $0x40] sm:$0xff]
        %v4513 = vld [vmem:[#allocation7 + $0x48] sm:$0xff]
        %v4514 = vld [vmem:[#allocation7 + $0x50] sm:$0xff]
        %v4515 = vld [vmem:[#allocation7 + $0x58] sm:$0xff]
        %v4516 = vld [vmem:[#allocation7 + $0x60] sm:$0xff]
        %v4517 = vld [vmem:[#allocation7 + $0x68] sm:$0xff]
        %v4518 = vld [vmem:[#allocation7 + $0x70] sm:$0xff]
        %v4519 = vld [vmem:[#allocation7 + $0x78] sm:$0xff]
        %v4520 = vld [vmem:[#allocation7 + $0x80] sm:$0xff]
        %v4521 = vld [vmem:[#allocation7 + $0x88] sm:$0xff]
        %v4522 = vld [vmem:[#allocation7 + $0x90] sm:$0xff]
        %v4523 = vld [vmem:[#allocation7 + $0x98] sm:$0xff]
        %v4524 = vld [vmem:[#allocation7 + $0xa0] sm:$0xff]
        %v4525 = vld [vmem:[#allocation7 + $0xa8] sm:$0xff]
        %v4526 = vld [vmem:[#allocation7 + $0xb0] sm:$0xff]
        %v4527 = vld [vmem:[#allocation7 + $0xb8] sm:$0xff]
        %v4528 = vld [vmem:[#allocation7 + $0xc0] sm:$0xff]
        %v4529 = vld [vmem:[#allocation7 + $0xc8] sm:$0xff]
        %v4530 = vld [vmem:[#allocation7 + $0xd0] sm:$0xff]
        %v4531 = vld [vmem:[#allocation7 + $0xd8] sm:$0xff]
        %v4532 = vld [vmem:[#allocation7 + $0xe0] sm:$0xff]
        %v4533 = vld [vmem:[#allocation7 + $0xe8] sm:$0xff]
        %v4534 = vld [vmem:[#allocation7 + $0xf0] sm:$0xff]
        %v4535 = vld [vmem:[#allocation7 + $0xf8] sm:$0xff]
        %v4536 = vld [vmem:[#allocation7 + $0x100] sm:$0xff]
        %v4537 = vld [vmem:[#allocation7 + $0x108] sm:$0xff]
        %v4538 = vld [vmem:[#allocation7 + $0x110] sm:$0xff]
        %v4539 = vld [vmem:[#allocation7 + $0x118] sm:$0xff]
        %v4540 = vld [vmem:[#allocation7 + $0x120] sm:$0xff]
        %v4541 = vld [vmem:[#allocation7 + $0x128] sm:$0xff]
        %v4542 = vld [vmem:[#allocation7 + $0x130] sm:$0xff]
        %v4543 = vld [vmem:[#allocation7 + $0x138] sm:$0xff]
        %v4544 = vld [vmem:[#allocation7 + $0x140] sm:$0xff]
        %v4545 = vld [vmem:[#allocation7 + $0x148] sm:$0xff]
        %v4546 = vld [vmem:[#allocation7 + $0x150] sm:$0xff]
        %v4547 = vld [vmem:[#allocation7 + $0x158] sm:$0xff]
        %v4548 = vld [vmem:[#allocation7 + $0x160] sm:$0xff]
        %v4549 = vld [vmem:[#allocation7 + $0x168] sm:$0xff]
        %v4550 = vld [vmem:[#allocation7 + $0x170] sm:$0xff]
        %v4551 = vld [vmem:[#allocation7 + $0x178] sm:$0xff]
        %v4552 = vld [vmem:[#allocation7 + $0x180] sm:$0xff]
        %v4553 = vld [vmem:[#allocation7 + $0x188] sm:$0xff]
        %v4554 = vld [vmem:[#allocation7 + $0x190] sm:$0xff]
        %v4555 = vld [vmem:[#allocation7 + $0x198] sm:$0xff]
        %v4556 = vld [vmem:[#allocation7 + $0x1a0] sm:$0xff]
        %v4557 = vld [vmem:[#allocation7 + $0x1a8] sm:$0xff]
        %v4558 = vld [vmem:[#allocation7 + $0x1b0] sm:$0xff]
        %v4559 = vld [vmem:[#allocation7 + $0x1b8] sm:$0xff]
        %v4560 = vld [vmem:[#allocation7 + $0x1c0] sm:$0xff]
        %v4561 = vld [vmem:[#allocation7 + $0x1c8] sm:$0xff]
        %v4562 = vld [vmem:[#allocation7 + $0x1d0] sm:$0xff]
        %v4563 = vld [vmem:[#allocation7 + $0x1d8] sm:$0xff]
        %v4564 = vld [vmem:[#allocation7 + $0x1e0] sm:$0xff]
        %v4565 = vld [vmem:[#allocation7 + $0x1e8] sm:$0xff]
        %v4566 = vld [vmem:[#allocation7 + $0x1f0] sm:$0xff]
        %v4567 = vld [vmem:[#allocation7 + $0x1f8] sm:$0xff]
        %v4568 = vld [vmem:[#allocation7 + $0x200] sm:$0xff]
        %v4569 = vld [vmem:[#allocation7 + $0x208] sm:$0xff]
        %v4570 = vld [vmem:[#allocation7 + $0x210] sm:$0xff]
        %v4571 = vld [vmem:[#allocation7 + $0x218] sm:$0xff]
        %v4572 = vld [vmem:[#allocation7 + $0x220] sm:$0xff]
        %v4573 = vld [vmem:[#allocation7 + $0x228] sm:$0xff]
        %v4574 = vld [vmem:[#allocation7 + $0x230] sm:$0xff]
        %v4575 = vld [vmem:[#allocation7 + $0x238] sm:$0xff]
        %v4576 = vld [vmem:[#allocation7 + $0x240] sm:$0xff]
        %v4577 = vld [vmem:[#allocation7 + $0x248] sm:$0xff]
        %v4578 = vld [vmem:[#allocation7 + $0x250] sm:$0xff]
        %v4579 = vld [vmem:[#allocation7 + $0x258] sm:$0xff]
        %v4580 = vld [vmem:[#allocation7 + $0x260] sm:$0xff]
        %v4581 = vld [vmem:[#allocation7 + $0x268] sm:$0xff]
        %v4582 = vld [vmem:[#allocation7 + $0x270] sm:$0xff]
        %v4583 = vld [vmem:[#allocation7 + $0x278] sm:$0xff]
        %v4584 = vld [vmem:[#allocation7 + $0x280] sm:$0xff]
        %v4585 = vld [vmem:[#allocation7 + $0x288] sm:$0xff]
        %v4586 = vld [vmem:[#allocation7 + $0x290] sm:$0xff]
        %v4587 = vld [vmem:[#allocation7 + $0x298] sm:$0xff]
        %v4588 = vld [vmem:[#allocation7 + $0x2a0] sm:$0xff]
        %v4589 = vld [vmem:[#allocation7 + $0x2a8] sm:$0xff]
        %v4590 = vld [vmem:[#allocation7 + $0x2b0] sm:$0xff]
        %v4591 = vld [vmem:[#allocation7 + $0x2b8] sm:$0xff]
        %v4592 = vld [vmem:[#allocation7 + $0x2c0] sm:$0xff]
        %v4593 = vld [vmem:[#allocation7 + $0x2c8] sm:$0xff]
        %v4594 = vld [vmem:[#allocation7 + $0x2d0] sm:$0xff]
        %v4595 = vld [vmem:[#allocation7 + $0x2d8] sm:$0xff]
        %v4596 = vld [vmem:[#allocation7 + $0x2e0] sm:$0xff]
        %v4597 = vld [vmem:[#allocation7 + $0x2e8] sm:$0xff]
        %v4598 = vld [vmem:[#allocation7 + $0x2f0] sm:$0xff]
        %v4599 = vld [vmem:[#allocation7 + $0x2f8] sm:$0xff]
        %v4600 = vld [vmem:[#allocation7 + $0x300] sm:$0xff]
        %v4601 = vld [vmem:[#allocation7 + $0x308] sm:$0xff]
        %v4602 = vld [vmem:[#allocation7 + $0x310] sm:$0xff]
        %v4603 = vld [vmem:[#allocation7 + $0x318] sm:$0xff]
        %v4604 = vld [vmem:[#allocation7 + $0x320] sm:$0xff]
        %v4605 = vld [vmem:[#allocation7 + $0x328] sm:$0xff]
        %v4606 = vld [vmem:[#allocation7 + $0x330] sm:$0xff]
        %v4607 = vld [vmem:[#allocation7 + $0x338] sm:$0xff]
        %v4608 = vld [vmem:[#allocation7 + $0x340] sm:$0xff]
        %v4609 = vld [vmem:[#allocation7 + $0x348] sm:$0xff]
        %v4610 = vld [vmem:[#allocation7 + $0x350] sm:$0xff]
        %v4611 = vld [vmem:[#allocation7 + $0x358] sm:$0xff]
        %v4612 = vld [vmem:[#allocation7 + $0x360] sm:$0xff]
        %v4613 = vld [vmem:[#allocation7 + $0x368] sm:$0xff]
        %v4614 = vld [vmem:[#allocation7 + $0x370] sm:$0xff]
        %v4615 = vld [vmem:[#allocation7 + $0x378] sm:$0xff]
        %v4616 = vld [vmem:[#allocation7 + $0x380] sm:$0xff]
        %v4617 = vld [vmem:[#allocation7 + $0x388] sm:$0xff]
        %v4618 = vld [vmem:[#allocation7 + $0x390] sm:$0xff]
        %v4619 = vld [vmem:[#allocation7 + $0x398] sm:$0xff]
        %v4620 = vld [vmem:[#allocation7 + $0x3a0] sm:$0xff]
        %v4621 = vld [vmem:[#allocation7 + $0x3a8] sm:$0xff]
        %v4622 = vld [vmem:[#allocation7 + $0x3b0] sm:$0xff]
        %v4623 = vld [vmem:[#allocation7 + $0x3b8] sm:$0xff]
        %v4624 = vld [vmem:[#allocation7 + $0x3c0] sm:$0xff]
        %v4625 = vld [vmem:[#allocation7 + $0x3c8] sm:$0xff]
        %v4626 = vld [vmem:[#allocation7 + $0x3d0] sm:$0xff]
        %v4627 = vld [vmem:[#allocation7 + $0x3d8] sm:$0xff]
        %v4628 = vld [vmem:[#allocation7 + $0x3e0] sm:$0xff]
        %v4629 = vld [vmem:[#allocation7 + $0x3e8] sm:$0xff]
        %v4630 = vld [vmem:[#allocation7 + $0x3f0] sm:$0xff]
        %v4631 = vld [vmem:[#allocation7 + $0x3f8] sm:$0xff]
        %v4632 = vld [vmem:[#allocation7 + $0x400] sm:$0xff]
        %v4633 = vld [vmem:[#allocation7 + $0x408] sm:$0xff]
        %v4634 = vld [vmem:[#allocation7 + $0x410] sm:$0xff]
        %v4635 = vld [vmem:[#allocation7 + $0x418] sm:$0xff]
        %v4636 = vld [vmem:[#allocation7 + $0x420] sm:$0xff]
        %v4637 = vld [vmem:[#allocation7 + $0x428] sm:$0xff]
        %v4638 = vld [vmem:[#allocation7 + $0x430] sm:$0xff]
        %v4639 = vld [vmem:[#allocation7 + $0x438] sm:$0xff]
        %v4640 = vld [vmem:[#allocation7 + $0x440] sm:$0xff]
        %v4641 = vld [vmem:[#allocation7 + $0x448] sm:$0xff]
        %v4642 = vld [vmem:[#allocation7 + $0x450] sm:$0xff]
        %v4643 = vld [vmem:[#allocation7 + $0x458] sm:$0xff]
        %v4644 = vld [vmem:[#allocation7 + $0x460] sm:$0xff]
        %v4645 = vld [vmem:[#allocation7 + $0x468] sm:$0xff]
        %v4646 = vld [vmem:[#allocation7 + $0x470] sm:$0xff]
        %v4647 = vld [vmem:[#allocation7 + $0x478] sm:$0xff]
        %s4648 = scalar_lea.vmem [#allocation8], 48
        %v4649 = vld [vmem:[%s4648] ss:$8 sm:$0xf]
        %v4650 = vld [vmem:[%s4648] ss:$8 sm:$0x30]
        %v4651 = vor.u32 %v4649, %v4650
        %v4653 = vlaneseq
        %v4654 = vshrl.u32 %v4653, 7
        %v4655 = vsub.s32 0, %v4654
        %v4656 = vrot.slane %v4651, %v4655
        %v4657 = vlaneseq
        %v4658 = vshrl.u32 %v4657, 7
        %v4659 = vsub.s32 1, %v4658
        %v4660 = vrot.slane %v4651, %v4659
        %v4661 = vlaneseq
        %v4662 = vshrl.u32 %v4661, 7
        %v4663 = vsub.s32 2, %v4662
        %v4664 = vrot.slane %v4651, %v4663
        %v4665 = vlaneseq
        %v4666 = vshrl.u32 %v4665, 7
        %v4667 = vsub.s32 3, %v4666
        %v4668 = vrot.slane %v4651, %v4667
        %v4669 = vlaneseq
        %v4670 = vshrl.u32 %v4669, 7
        %v4671 = vsub.s32 4, %v4670
        %v4672 = vrot.slane %v4651, %v4671
        %v4673 = vlaneseq
        %v4674 = vshrl.u32 %v4673, 7
        %v4675 = vsub.s32 5, %v4674
        %v4676 = vrot.slane %v4651, %v4675
        %v4827 = vunpack.c.l.b16 %v4504
        %v4828 = vunpack.c.h.b16 %v4504
        %v4829 = vunpack.c.l.b16 %v4505
        %v4830 = vunpack.c.h.b16 %v4505
        %v4831 = vunpack.c.l.b16 %v4506
        %v4832 = vunpack.c.h.b16 %v4506
        %v4833 = vunpack.c.l.b16 %v4507
        %v4834 = vunpack.c.h.b16 %v4507
        %v4835 = vunpack.c.l.b16 %v4508
        %v4836 = vunpack.c.h.b16 %v4508
        %v4837 = vunpack.c.l.b16 %v4509
        %v4838 = vunpack.c.h.b16 %v4509
        %v4839 = vunpack.c.l.b16 %v4510
        %v4840 = vunpack.c.h.b16 %v4510
        %v4841 = vunpack.c.l.b16 %v4511
        %v4842 = vunpack.c.h.b16 %v4511
        %v4843 = vunpack.c.l.b16 %v4512
        %v4844 = vunpack.c.h.b16 %v4512
        %v4845 = vunpack.c.l.b16 %v4513
        %v4846 = vunpack.c.h.b16 %v4513
        %v4847 = vunpack.c.l.b16 %v4514
        %v4848 = vunpack.c.h.b16 %v4514
        %v4849 = vunpack.c.l.b16 %v4515
        %v4850 = vunpack.c.h.b16 %v4515
        %v4851 = vunpack.c.l.b16 %v4516
        %v4852 = vunpack.c.h.b16 %v4516
        %v4853 = vunpack.c.l.b16 %v4517
        %v4854 = vunpack.c.h.b16 %v4517
        %v4855 = vunpack.c.l.b16 %v4518
        %v4856 = vunpack.c.h.b16 %v4518
        %v4857 = vunpack.c.l.b16 %v4519
        %v4858 = vunpack.c.h.b16 %v4519
        %v4859 = vunpack.c.l.b16 %v4520
        %v4860 = vunpack.c.h.b16 %v4520
        %v4861 = vunpack.c.l.b16 %v4521
        %v4862 = vunpack.c.h.b16 %v4521
        %v4863 = vunpack.c.l.b16 %v4522
        %v4864 = vunpack.c.h.b16 %v4522
        %v4865 = vunpack.c.l.b16 %v4523
        %v4866 = vunpack.c.h.b16 %v4523
        %v4867 = vunpack.c.l.b16 %v4524
        %v4868 = vunpack.c.h.b16 %v4524
        %v4869 = vunpack.c.l.b16 %v4525
        %v4870 = vunpack.c.h.b16 %v4525
        %v4871 = vunpack.c.l.b16 %v4526
        %v4872 = vunpack.c.h.b16 %v4526
        %v4873 = vunpack.c.l.b16 %v4527
        %v4874 = vunpack.c.h.b16 %v4527
        %v4875 = vunpack.c.l.b16 %v4528
        %v4876 = vunpack.c.h.b16 %v4528
        %v4877 = vunpack.c.l.b16 %v4529
        %v4878 = vunpack.c.h.b16 %v4529
        %v4879 = vunpack.c.l.b16 %v4530
        %v4880 = vunpack.c.h.b16 %v4530
        %v4881 = vunpack.c.l.b16 %v4531
        %v4882 = vunpack.c.h.b16 %v4531
        %v4883 = vunpack.c.l.b16 %v4532
        %v4884 = vunpack.c.h.b16 %v4532
        %v4885 = vunpack.c.l.b16 %v4533
        %v4886 = vunpack.c.h.b16 %v4533
        %v4887 = vunpack.c.l.b16 %v4534
        %v4888 = vunpack.c.h.b16 %v4534
        %v4889 = vunpack.c.l.b16 %v4535
        %v4890 = vunpack.c.h.b16 %v4535
        %v4891 = vunpack.c.l.b16 %v4536
        %v4892 = vunpack.c.h.b16 %v4536
        %v4893 = vunpack.c.l.b16 %v4537
        %v4894 = vunpack.c.h.b16 %v4537
        %v4895 = vunpack.c.l.b16 %v4538
        %v4896 = vunpack.c.h.b16 %v4538
        %v4897 = vunpack.c.l.b16 %v4539
        %v4898 = vunpack.c.h.b16 %v4539
        %v4899 = vunpack.c.l.b16 %v4540
        %v4900 = vunpack.c.h.b16 %v4540
        %v4901 = vunpack.c.l.b16 %v4541
        %v4902 = vunpack.c.h.b16 %v4541
        %v4903 = vunpack.c.l.b16 %v4542
        %v4904 = vunpack.c.h.b16 %v4542
        %v4905 = vunpack.c.l.b16 %v4543
        %v4906 = vunpack.c.h.b16 %v4543
        %v4907 = vunpack.c.l.b16 %v4544
        %v4908 = vunpack.c.h.b16 %v4544
        %v4909 = vunpack.c.l.b16 %v4545
        %v4910 = vunpack.c.h.b16 %v4545
        %v4911 = vunpack.c.l.b16 %v4546
        %v4912 = vunpack.c.h.b16 %v4546
        %v4913 = vunpack.c.l.b16 %v4547
        %v4914 = vunpack.c.h.b16 %v4547
        %v4915 = vunpack.c.l.b16 %v4548
        %v4916 = vunpack.c.h.b16 %v4548
        %v4917 = vunpack.c.l.b16 %v4549
        %v4918 = vunpack.c.h.b16 %v4549
        %v4919 = vunpack.c.l.b16 %v4550
        %v4920 = vunpack.c.h.b16 %v4550
        %v4921 = vunpack.c.l.b16 %v4551
        %v4922 = vunpack.c.h.b16 %v4551
        %v4923 = vunpack.c.l.b16 %v4552
        %v4924 = vunpack.c.h.b16 %v4552
        %v4925 = vunpack.c.l.b16 %v4553
        %v4926 = vunpack.c.h.b16 %v4553
        %v4927 = vunpack.c.l.b16 %v4554
        %v4928 = vunpack.c.h.b16 %v4554
        %v4929 = vunpack.c.l.b16 %v4555
        %v4930 = vunpack.c.h.b16 %v4555
        %v4931 = vunpack.c.l.b16 %v4556
        %v4932 = vunpack.c.h.b16 %v4556
        %v4933 = vunpack.c.l.b16 %v4557
        %v4934 = vunpack.c.h.b16 %v4557
        %v4935 = vunpack.c.l.b16 %v4558
        %v4936 = vunpack.c.h.b16 %v4558
        %v4937 = vunpack.c.l.b16 %v4559
        %v4938 = vunpack.c.h.b16 %v4559
        %v4939 = vunpack.c.l.b16 %v4560
        %v4940 = vunpack.c.h.b16 %v4560
        %v4941 = vunpack.c.l.b16 %v4561
        %v4942 = vunpack.c.h.b16 %v4561
        %v4943 = vunpack.c.l.b16 %v4562
        %v4944 = vunpack.c.h.b16 %v4562
        %v4945 = vunpack.c.l.b16 %v4563
        %v4946 = vunpack.c.h.b16 %v4563
        %v4947 = vunpack.c.l.b16 %v4564
        %v4948 = vunpack.c.h.b16 %v4564
        %v4949 = vunpack.c.l.b16 %v4565
        %v4950 = vunpack.c.h.b16 %v4565
        %v4951 = vunpack.c.l.b16 %v4566
        %v4952 = vunpack.c.h.b16 %v4566
        %v4953 = vunpack.c.l.b16 %v4567
        %v4954 = vunpack.c.h.b16 %v4567
        %v4955 = vunpack.c.l.b16 %v4568
        %v4956 = vunpack.c.h.b16 %v4568
        %v4957 = vunpack.c.l.b16 %v4569
        %v4958 = vunpack.c.h.b16 %v4569
        %v4959 = vunpack.c.l.b16 %v4570
        %v4960 = vunpack.c.h.b16 %v4570
        %v4961 = vunpack.c.l.b16 %v4571
        %v4962 = vunpack.c.h.b16 %v4571
        %v4963 = vunpack.c.l.b16 %v4572
        %v4964 = vunpack.c.h.b16 %v4572
        %v4965 = vunpack.c.l.b16 %v4573
        %v4966 = vunpack.c.h.b16 %v4573
        %v4967 = vunpack.c.l.b16 %v4574
        %v4968 = vunpack.c.h.b16 %v4574
        %v4969 = vunpack.c.l.b16 %v4575
        %v4970 = vunpack.c.h.b16 %v4575
        %v4971 = vunpack.c.l.b16 %v4576
        %v4972 = vunpack.c.h.b16 %v4576
        %v4973 = vunpack.c.l.b16 %v4577
        %v4974 = vunpack.c.h.b16 %v4577
        %v4975 = vunpack.c.l.b16 %v4578
        %v4976 = vunpack.c.h.b16 %v4578
        %v4977 = vunpack.c.l.b16 %v4579
        %v4978 = vunpack.c.h.b16 %v4579
        %v4979 = vunpack.c.l.b16 %v4580
        %v4980 = vunpack.c.h.b16 %v4580
        %v4981 = vunpack.c.l.b16 %v4581
        %v4982 = vunpack.c.h.b16 %v4581
        %v4983 = vunpack.c.l.b16 %v4582
        %v4984 = vunpack.c.h.b16 %v4582
        %v4985 = vunpack.c.l.b16 %v4583
        %v4986 = vunpack.c.h.b16 %v4583
        %v4987 = vunpack.c.l.b16 %v4584
        %v4988 = vunpack.c.h.b16 %v4584
        %v4989 = vunpack.c.l.b16 %v4585
        %v4990 = vunpack.c.h.b16 %v4585
        %v4991 = vunpack.c.l.b16 %v4586
        %v4992 = vunpack.c.h.b16 %v4586
        %v4993 = vunpack.c.l.b16 %v4587
        %v4994 = vunpack.c.h.b16 %v4587
        %v4995 = vunpack.c.l.b16 %v4588
        %v4996 = vunpack.c.h.b16 %v4588
        %v4997 = vunpack.c.l.b16 %v4589
        %v4998 = vunpack.c.h.b16 %v4589
        %v4999 = vunpack.c.l.b16 %v4590
        %v5000 = vunpack.c.h.b16 %v4590
        %v5001 = vunpack.c.l.b16 %v4591
        %v5002 = vunpack.c.h.b16 %v4591
        %v5003 = vunpack.c.l.b16 %v4592
        %v5004 = vunpack.c.h.b16 %v4592
        %v5005 = vunpack.c.l.b16 %v4593
        %v5006 = vunpack.c.h.b16 %v4593
        %v5007 = vunpack.c.l.b16 %v4594
        %v5008 = vunpack.c.h.b16 %v4594
        %v5009 = vunpack.c.l.b16 %v4595
        %v5010 = vunpack.c.h.b16 %v4595
        %v5011 = vunpack.c.l.b16 %v4596
        %v5012 = vunpack.c.h.b16 %v4596
        %v5013 = vunpack.c.l.b16 %v4597
        %v5014 = vunpack.c.h.b16 %v4597
        %v5015 = vunpack.c.l.b16 %v4598
        %v5016 = vunpack.c.h.b16 %v4598
        %v5017 = vunpack.c.l.b16 %v4599
        %v5018 = vunpack.c.h.b16 %v4599
        %v5019 = vunpack.c.l.b16 %v4600
        %v5020 = vunpack.c.h.b16 %v4600
        %v5021 = vunpack.c.l.b16 %v4601
        %v5022 = vunpack.c.h.b16 %v4601
        %v5023 = vunpack.c.l.b16 %v4602
        %v5024 = vunpack.c.h.b16 %v4602
        %v5025 = vunpack.c.l.b16 %v4603
        %v5026 = vunpack.c.h.b16 %v4603
        %v5027 = vunpack.c.l.b16 %v4604
        %v5028 = vunpack.c.h.b16 %v4604
        %v5029 = vunpack.c.l.b16 %v4605
        %v5030 = vunpack.c.h.b16 %v4605
        %v5031 = vunpack.c.l.b16 %v4606
        %v5032 = vunpack.c.h.b16 %v4606
        %v5033 = vunpack.c.l.b16 %v4607
        %v5034 = vunpack.c.h.b16 %v4607
        %v5035 = vunpack.c.l.b16 %v4608
        %v5036 = vunpack.c.h.b16 %v4608
        %v5037 = vunpack.c.l.b16 %v4609
        %v5038 = vunpack.c.h.b16 %v4609
        %v5039 = vunpack.c.l.b16 %v4610
        %v5040 = vunpack.c.h.b16 %v4610
        %v5041 = vunpack.c.l.b16 %v4611
        %v5042 = vunpack.c.h.b16 %v4611
        %v5043 = vunpack.c.l.b16 %v4612
        %v5044 = vunpack.c.h.b16 %v4612
        %v5045 = vunpack.c.l.b16 %v4613
        %v5046 = vunpack.c.h.b16 %v4613
        %v5047 = vunpack.c.l.b16 %v4614
        %v5048 = vunpack.c.h.b16 %v4614
        %v5049 = vunpack.c.l.b16 %v4615
        %v5050 = vunpack.c.h.b16 %v4615
        %v5051 = vunpack.c.l.b16 %v4616
        %v5052 = vunpack.c.h.b16 %v4616
        %v5053 = vunpack.c.l.b16 %v4617
        %v5054 = vunpack.c.h.b16 %v4617
        %v5055 = vunpack.c.l.b16 %v4618
        %v5056 = vunpack.c.h.b16 %v4618
        %v5057 = vunpack.c.l.b16 %v4619
        %v5058 = vunpack.c.h.b16 %v4619
        %v5059 = vunpack.c.l.b16 %v4620
        %v5060 = vunpack.c.h.b16 %v4620
        %v5061 = vunpack.c.l.b16 %v4621
        %v5062 = vunpack.c.h.b16 %v4621
        %v5063 = vunpack.c.l.b16 %v4622
        %v5064 = vunpack.c.h.b16 %v4622
        %v5065 = vunpack.c.l.b16 %v4623
        %v5066 = vunpack.c.h.b16 %v4623
        %v5067 = vunpack.c.l.b16 %v4624
        %v5068 = vunpack.c.h.b16 %v4624
        %v5069 = vunpack.c.l.b16 %v4625
        %v5070 = vunpack.c.h.b16 %v4625
        %v5071 = vunpack.c.l.b16 %v4626
        %v5072 = vunpack.c.h.b16 %v4626
        %v5073 = vunpack.c.l.b16 %v4627
        %v5074 = vunpack.c.h.b16 %v4627
        %v5075 = vunpack.c.l.b16 %v4628
        %v5076 = vunpack.c.h.b16 %v4628
        %v5077 = vunpack.c.l.b16 %v4629
        %v5078 = vunpack.c.h.b16 %v4629
        %v5079 = vunpack.c.l.b16 %v4630
        %v5080 = vunpack.c.h.b16 %v4630
        %v5081 = vunpack.c.l.b16 %v4631
        %v5082 = vunpack.c.h.b16 %v4631
        %v5083 = vunpack.c.l.b16 %v4632
        %v5084 = vunpack.c.h.b16 %v4632
        %v5085 = vunpack.c.l.b16 %v4633
        %v5086 = vunpack.c.h.b16 %v4633
        %v5087 = vunpack.c.l.b16 %v4634
        %v5088 = vunpack.c.h.b16 %v4634
        %v5089 = vunpack.c.l.b16 %v4635
        %v5090 = vunpack.c.h.b16 %v4635
        %v5091 = vunpack.c.l.b16 %v4636
        %v5092 = vunpack.c.h.b16 %v4636
        %v5093 = vunpack.c.l.b16 %v4637
        %v5094 = vunpack.c.h.b16 %v4637
        %v5095 = vunpack.c.l.b16 %v4638
        %v5096 = vunpack.c.h.b16 %v4638
        %v5097 = vunpack.c.l.b16 %v4639
        %v5098 = vunpack.c.h.b16 %v4639
        %v5099 = vunpack.c.l.b16 %v4640
        %v5100 = vunpack.c.h.b16 %v4640
        %v5101 = vunpack.c.l.b16 %v4641
        %v5102 = vunpack.c.h.b16 %v4641
        %v5103 = vunpack.c.l.b16 %v4642
        %v5104 = vunpack.c.h.b16 %v4642
        %v5105 = vunpack.c.l.b16 %v4643
        %v5106 = vunpack.c.h.b16 %v4643
        %v5107 = vunpack.c.l.b16 %v4644
        %v5108 = vunpack.c.h.b16 %v4644
        %v5109 = vunpack.c.l.b16 %v4645
        %v5110 = vunpack.c.h.b16 %v4645
        %v5111 = vunpack.c.l.b16 %v4646
        %v5112 = vunpack.c.h.b16 %v4646
        %v5113 = vunpack.c.l.b16 %v4647
        %v5114 = vunpack.c.h.b16 %v4647
        %v5115 = vpack.c.b16 %v4833, %v4827
        %v5116 = vpack.c.b16 %v4834, %v4828
        %v5117 = vpack.c.b16 %v4835, %v4829
        %v5118 = vpack.c.b16 %v4836, %v4830
        %v5119 = vpack.c.b16 %v4837, %v4831
        %v5120 = vpack.c.b16 %v4838, %v4832
        %v5121 = vpack.c.b16 %v4845, %v4839
        %v5122 = vpack.c.b16 %v4846, %v4840
        %v5123 = vpack.c.b16 %v4847, %v4841
        %v5124 = vpack.c.b16 %v4848, %v4842
        %v5125 = vpack.c.b16 %v4849, %v4843
        %v5126 = vpack.c.b16 %v4850, %v4844
        %v5127 = vpack.c.b16 %v4857, %v4851
        %v5128 = vpack.c.b16 %v4858, %v4852
        %v5129 = vpack.c.b16 %v4859, %v4853
        %v5130 = vpack.c.b16 %v4860, %v4854
        %v5131 = vpack.c.b16 %v4861, %v4855
        %v5132 = vpack.c.b16 %v4862, %v4856
        %v5133 = vpack.c.b16 %v4869, %v4863
        %v5134 = vpack.c.b16 %v4870, %v4864
        %v5135 = vpack.c.b16 %v4871, %v4865
        %v5136 = vpack.c.b16 %v4872, %v4866
        %v5137 = vpack.c.b16 %v4873, %v4867
        %v5138 = vpack.c.b16 %v4874, %v4868
        %v5139 = vpack.c.b16 %v4881, %v4875
        %v5140 = vpack.c.b16 %v4882, %v4876
        %v5141 = vpack.c.b16 %v4883, %v4877
        %v5142 = vpack.c.b16 %v4884, %v4878
        %v5143 = vpack.c.b16 %v4885, %v4879
        %v5144 = vpack.c.b16 %v4886, %v4880
        %v5145 = vpack.c.b16 %v4893, %v4887
        %v5146 = vpack.c.b16 %v4894, %v4888
        %v5147 = vpack.c.b16 %v4895, %v4889
        %v5148 = vpack.c.b16 %v4896, %v4890
        %v5149 = vpack.c.b16 %v4897, %v4891
        %v5150 = vpack.c.b16 %v4898, %v4892
        %v5151 = vpack.c.b16 %v4905, %v4899
        %v5152 = vpack.c.b16 %v4906, %v4900
        %v5153 = vpack.c.b16 %v4907, %v4901
        %v5154 = vpack.c.b16 %v4908, %v4902
        %v5155 = vpack.c.b16 %v4909, %v4903
        %v5156 = vpack.c.b16 %v4910, %v4904
        %v5157 = vpack.c.b16 %v4917, %v4911
        %v5158 = vpack.c.b16 %v4918, %v4912
        %v5159 = vpack.c.b16 %v4919, %v4913
        %v5160 = vpack.c.b16 %v4920, %v4914
        %v5161 = vpack.c.b16 %v4921, %v4915
        %v5162 = vpack.c.b16 %v4922, %v4916
        %v5163 = vpack.c.b16 %v4929, %v4923
        %v5164 = vpack.c.b16 %v4930, %v4924
        %v5165 = vpack.c.b16 %v4931, %v4925
        %v5166 = vpack.c.b16 %v4932, %v4926
        %v5167 = vpack.c.b16 %v4933, %v4927
        %v5168 = vpack.c.b16 %v4934, %v4928
        %v5169 = vpack.c.b16 %v4941, %v4935
        %v5170 = vpack.c.b16 %v4942, %v4936
        %v5171 = vpack.c.b16 %v4943, %v4937
        %v5172 = vpack.c.b16 %v4944, %v4938
        %v5173 = vpack.c.b16 %v4945, %v4939
        %v5174 = vpack.c.b16 %v4946, %v4940
        %v5175 = vpack.c.b16 %v4953, %v4947
        %v5176 = vpack.c.b16 %v4954, %v4948
        %v5177 = vpack.c.b16 %v4955, %v4949
        %v5178 = vpack.c.b16 %v4956, %v4950
        %v5179 = vpack.c.b16 %v4957, %v4951
        %v5180 = vpack.c.b16 %v4958, %v4952
        %v5181 = vpack.c.b16 %v4965, %v4959
        %v5182 = vpack.c.b16 %v4966, %v4960
        %v5183 = vpack.c.b16 %v4967, %v4961
        %v5184 = vpack.c.b16 %v4968, %v4962
        %v5185 = vpack.c.b16 %v4969, %v4963
        %v5186 = vpack.c.b16 %v4970, %v4964
        %v5187 = vpack.c.b16 %v4977, %v4971
        %v5188 = vpack.c.b16 %v4978, %v4972
        %v5189 = vpack.c.b16 %v4979, %v4973
        %v5190 = vpack.c.b16 %v4980, %v4974
        %v5191 = vpack.c.b16 %v4981, %v4975
        %v5192 = vpack.c.b16 %v4982, %v4976
        %v5193 = vpack.c.b16 %v4989, %v4983
        %v5194 = vpack.c.b16 %v4990, %v4984
        %v5195 = vpack.c.b16 %v4991, %v4985
        %v5196 = vpack.c.b16 %v4992, %v4986
        %v5197 = vpack.c.b16 %v4993, %v4987
        %v5198 = vpack.c.b16 %v4994, %v4988
        %v5199 = vpack.c.b16 %v5001, %v4995
        %v5200 = vpack.c.b16 %v5002, %v4996
        %v5201 = vpack.c.b16 %v5003, %v4997
        %v5202 = vpack.c.b16 %v5004, %v4998
        %v5203 = vpack.c.b16 %v5005, %v4999
        %v5204 = vpack.c.b16 %v5006, %v5000
        %v5205 = vpack.c.b16 %v5013, %v5007
        %v5206 = vpack.c.b16 %v5014, %v5008
        %v5207 = vpack.c.b16 %v5015, %v5009
        %v5208 = vpack.c.b16 %v5016, %v5010
        %v5209 = vpack.c.b16 %v5017, %v5011
        %v5210 = vpack.c.b16 %v5018, %v5012
        %v5211 = vpack.c.b16 %v5025, %v5019
        %v5212 = vpack.c.b16 %v5026, %v5020
        %v5213 = vpack.c.b16 %v5027, %v5021
        %v5214 = vpack.c.b16 %v5028, %v5022
        %v5215 = vpack.c.b16 %v5029, %v5023
        %v5216 = vpack.c.b16 %v5030, %v5024
        %v5217 = vpack.c.b16 %v5037, %v5031
        %v5218 = vpack.c.b16 %v5038, %v5032
        %v5219 = vpack.c.b16 %v5039, %v5033
        %v5220 = vpack.c.b16 %v5040, %v5034
        %v5221 = vpack.c.b16 %v5041, %v5035
        %v5222 = vpack.c.b16 %v5042, %v5036
        %v5223 = vpack.c.b16 %v5049, %v5043
        %v5224 = vpack.c.b16 %v5050, %v5044
        %v5225 = vpack.c.b16 %v5051, %v5045
        %v5226 = vpack.c.b16 %v5052, %v5046
        %v5227 = vpack.c.b16 %v5053, %v5047
        %v5228 = vpack.c.b16 %v5054, %v5048
        %v5229 = vpack.c.b16 %v5061, %v5055
        %v5230 = vpack.c.b16 %v5062, %v5056
        %v5231 = vpack.c.b16 %v5063, %v5057
        %v5232 = vpack.c.b16 %v5064, %v5058
        %v5233 = vpack.c.b16 %v5065, %v5059
        %v5234 = vpack.c.b16 %v5066, %v5060
        %v5235 = vpack.c.b16 %v5073, %v5067
        %v5236 = vpack.c.b16 %v5074, %v5068
        %v5237 = vpack.c.b16 %v5075, %v5069
        %v5238 = vpack.c.b16 %v5076, %v5070
        %v5239 = vpack.c.b16 %v5077, %v5071
        %v5240 = vpack.c.b16 %v5078, %v5072
        %v5241 = vpack.c.b16 %v5085, %v5079
        %v5242 = vpack.c.b16 %v5086, %v5080
        %v5243 = vpack.c.b16 %v5087, %v5081
        %v5244 = vpack.c.b16 %v5088, %v5082
        %v5245 = vpack.c.b16 %v5089, %v5083
        %v5246 = vpack.c.b16 %v5090, %v5084
        %v5247 = vpack.c.b16 %v5097, %v5091
        %v5248 = vpack.c.b16 %v5098, %v5092
        %v5249 = vpack.c.b16 %v5099, %v5093
        %v5250 = vpack.c.b16 %v5100, %v5094
        %v5251 = vpack.c.b16 %v5101, %v5095
        %v5252 = vpack.c.b16 %v5102, %v5096
        %v5253 = vpack.c.b16 %v5109, %v5103
        %v5254 = vpack.c.b16 %v5110, %v5104
        %v5255 = vpack.c.b16 %v5111, %v5105
        %v5256 = vpack.c.b16 %v5112, %v5106
        %v5257 = vpack.c.b16 %v5113, %v5107
        %v5258 = vpack.c.b16 %v5114, %v5108
        %5403 = vmatprep.subr.bf16.mxu0 %v5116
        %5404 = vmatpush1.bf16.msra.mxu0 %v5115
        %5405 = vmatprep.subr.bf16.mxu0 %v5122
        %5406 = vmatpush1.bf16.msra.mxu0 %v5121
        %5407 = vmatprep.subr.bf16.mxu0 %v5128
        %5408 = vmatpush1.bf16.msra.mxu0 %v5127
        %5409 = vmatprep.subr.bf16.mxu0 %v5134
        %5410 = vmatpush1.bf16.msra.mxu0 %v5133
        %5411 = vmatprep.subr.bf16.mxu0 %v5140
        %5412 = vmatpush1.bf16.msra.mxu0 %v5139
        %5413 = vmatprep.subr.bf16.mxu0 %v5146
        %5414 = vmatpush1.bf16.msra.mxu0 %v5145
        %5415 = vmatprep.subr.bf16.mxu0 %v5152
        %5416 = vmatpush1.bf16.msra.mxu0 %v5151
        %5417 = vmatprep.subr.bf16.mxu0 %v5158
        %5418 = vmatpush1.bf16.msra.mxu0 %v5157
        %5419 = vmatprep.subr.bf16.mxu0 %v5164
        %5420 = vmatpush1.bf16.msra.mxu0 %v5163
        %5421 = vmatprep.subr.bf16.mxu0 %v5170
        %5422 = vmatpush1.bf16.msra.mxu0 %v5169
        %5423 = vmatprep.subr.bf16.mxu0 %v5176
        %5424 = vmatpush1.bf16.msra.mxu0 %v5175
        %5425 = vmatprep.subr.bf16.mxu0 %v5182
        %5426 = vmatpush1.bf16.msra.mxu0 %v5181
        %5427 = vmatprep.subr.bf16.mxu0 %v5188
        %5428 = vmatpush1.bf16.msra.mxu0 %v5187
        %5429 = vmatprep.subr.bf16.mxu0 %v5194
        %5430 = vmatpush1.bf16.msra.mxu0 %v5193
        %5431 = vmatprep.subr.bf16.mxu0 %v5200
        %5432 = vmatpush1.bf16.msra.mxu0 %v5199
        %5433 = vmatprep.subr.bf16.mxu0 %v5206
        %5434 = vmatpush1.bf16.msra.mxu0 %v5205
        %5435 = vmatprep.mubr.bf16.mxu0 %v4481
        %5436 = vmatmul.mubr.bf16.gmra.mrb[0].mxu0 %v4480
        %v5437 = vpop.f32.mrb[0].mxu0
        %v5438 = vadd.f32 %v4656, %v5437
        %v5439 = vpop.f32.mrb[0].mxu0
        %v5440 = vadd.f32 %v4660, %v5439
        %v5441 = vpop.f32.mrb[0].mxu0
        %v5442 = vadd.f32 %v4656, %v5441
        %v5443 = vpop.f32.mrb[0].mxu0
        %v5444 = vadd.f32 %v4660, %v5443
        %5445 = vmatprep.mubr.bf16.mxu0 %v4484
        %5446 = vmatmul.mubr.bf16.gmra.mrb[0].mxu0 %v4483
        %v5447 = vpop.f32.mrb[0].mxu0
        %v5448 = vadd.f32 %v4656, %v5447
        %v5449 = vpop.f32.mrb[0].mxu0
        %v5450 = vadd.f32 %v4660, %v5449
        %v5451 = vpop.f32.mrb[0].mxu0
        %v5452 = vadd.f32 %v4656, %v5451
        %v5453 = vpop.f32.mrb[0].mxu0
        %v5454 = vadd.f32 %v4660, %v5453
        %5455 = vmatprep.mubr.bf16.mxu0 %v4487
        %5456 = vmatmul.mubr.bf16.gmra.mrb[0].mxu0 %v4486
        %v5457 = vpop.f32.mrb[0].mxu0
        %v5458 = vadd.f32 %v4656, %v5457
        %v5459 = vpop.f32.mrb[0].mxu0
        %v5460 = vadd.f32 %v4660, %v5459
        %v5461 = vpop.f32.mrb[0].mxu0
        %v5462 = vadd.f32 %v4656, %v5461
        %v5463 = vpop.f32.mrb[0].mxu0
        %v5464 = vadd.f32 %v4660, %v5463
        %5465 = vmatprep.mubr.bf16.mxu0 %v4490
        %5466 = vmatmul.mubr.bf16.gmra.mrb[0].mxu0 %v4489
        %v5467 = vpop.f32.mrb[0].mxu0
        %v5468 = vadd.f32 %v4656, %v5467
        %v5469 = vpop.f32.mrb[0].mxu0
        %v5470 = vadd.f32 %v4660, %v5469
        %v5471 = vpop.f32.mrb[0].mxu0
        %v5472 = vadd.f32 %v4656, %v5471
        %v5473 = vpop.f32.mrb[0].mxu0
        %v5474 = vadd.f32 %v4660, %v5473
        %5475 = vmatprep.mubr.bf16.mxu0 %v4493
        %5476 = vmatmul.mubr.bf16.gmra.mrb[0].mxu0 %v4492
        %v5477 = vpop.f32.mrb[0].mxu0
        %v5478 = vadd.f32 %v4656, %v5477
        %v5479 = vpop.f32.mrb[0].mxu0
        %v5480 = vadd.f32 %v4660, %v5479
        %v5481 = vpop.f32.mrb[0].mxu0
        %v5482 = vadd.f32 %v4656, %v5481
        %v5483 = vpop.f32.mrb[0].mxu0
        %v5484 = vadd.f32 %v4660, %v5483
        %5485 = vmatprep.mubr.bf16.mxu0 %v4496
        %5486 = vmatmul.mubr.bf16.gmra.mrb[0].mxu0 %v4495
        %v5487 = vpop.f32.mrb[0].mxu0
        %v5488 = vadd.f32 %v4656, %v5487
        %v5489 = vpop.f32.mrb[0].mxu0
        %v5490 = vadd.f32 %v4660, %v5489
        %v5491 = vpop.f32.mrb[0].mxu0
        %v5492 = vadd.f32 %v4656, %v5491
        %v5493 = vpop.f32.mrb[0].mxu0
        %v5494 = vadd.f32 %v4660, %v5493
        %5495 = vmatprep.mubr.bf16.mxu0 %v4499
        %5496 = vmatmul.mubr.bf16.gmra.mrb[0].mxu0 %v4498
        %v5497 = vpop.f32.mrb[0].mxu0
        %v5498 = vadd.f32 %v4656, %v5497
        %v5499 = vpop.f32.mrb[0].mxu0
        %v5500 = vadd.f32 %v4660, %v5499
        %v5501 = vpop.f32.mrb[0].mxu0
        %v5502 = vadd.f32 %v4656, %v5501
        %v5503 = vpop.f32.mrb[0].mxu0
        %v5504 = vadd.f32 %v4660, %v5503
        %5505 = vmatprep.mubr.bf16.mxu0 %v4502
        %5506 = vmatmul.mubr.bf16.gmra.mrb[0].mxu0 %v4501
        %v5507 = vpop.f32.mrb[0].mxu0
        %v5508 = vadd.f32 %v4656, %v5507
        %v5509 = vpop.f32.mrb[0].mxu0
        %v5510 = vadd.f32 %v4660, %v5509
        %v5511 = vpop.f32.mrb[0].mxu0
        %v5512 = vadd.f32 %v4656, %v5511
        %v5513 = vpop.f32.mrb[0].mxu0
        %v5514 = vadd.f32 %v4660, %v5513
        %5515 = vdwg.mxu0
        %5516 = vmatprep.subr.bf16.mxu0 %v5212
        %5517 = vmatpush1.bf16.msra.mxu0 %v5211
        %5518 = vmatprep.subr.bf16.mxu0 %v5218
        %5519 = vmatpush1.bf16.msra.mxu0 %v5217
        %5520 = vmatprep.subr.bf16.mxu0 %v5224
        %5521 = vmatpush1.bf16.msra.mxu0 %v5223
        %5522 = vmatprep.subr.bf16.mxu0 %v5230
        %5523 = vmatpush1.bf16.msra.mxu0 %v5229
        %5524 = vmatprep.subr.bf16.mxu0 %v5236
        %5525 = vmatpush1.bf16.msra.mxu0 %v5235
        %5526 = vmatprep.subr.bf16.mxu0 %v5242
        %5527 = vmatpush1.bf16.msra.mxu0 %v5241
        %5528 = vmatprep.subr.bf16.mxu0 %v5248
        %5529 = vmatpush1.bf16.msra.mxu0 %v5247
        %5530 = vmatprep.subr.bf16.mxu0 %v5254
        %5531 = vmatpush1.bf16.msra.mxu0 %v5253
        %5532 = vmatprep.subr.bf16.mxu0 0
        %5533 = vmatpush1.bf16.msra.mxu0 0
        %5534 = vmatprep.subr.bf16.mxu0 0
        %5535 = vmatpush1.bf16.msra.mxu0 0
        %5536 = vmatprep.subr.bf16.mxu0 0
        %5537 = vmatpush1.bf16.msra.mxu0 0
        %5538 = vmatprep.subr.bf16.mxu0 0
        %5539 = vmatpush1.bf16.msra.mxu0 0
        %5540 = vmatprep.subr.bf16.mxu0 0
        %5541 = vmatpush1.bf16.msra.mxu0 0
        %5542 = vmatprep.subr.bf16.mxu0 0
        %5543 = vmatpush1.bf16.msra.mxu0 0
        %5544 = vmatprep.subr.bf16.mxu0 0
        %5545 = vmatpush1.bf16.msra.mxu0 0
        %5546 = vmatprep.subr.bf16.mxu0 0
        %5547 = vmatpush1.bf16.msra.mxu0 0
        %5548 = vmatprep.mubr.bf16.mxu0 0
        %5549 = vmatmul.mubr.bf16.gmra.mrb[0].mxu0 %v4482
        %v5550 = vpop.f32.mrb[0].mxu0
        %v5551 = vadd.f32 %v5438, %v5550
        %v5552 = vpop.f32.mrb[0].mxu0
        %v5553 = vadd.f32 %v5440, %v5552
        %v5554 = vpop.f32.mrb[0].mxu0
        %v5555 = vadd.f32 %v5442, %v5554
        %v5556 = vpop.f32.mrb[0].mxu0
        %v5557 = vadd.f32 %v5444, %v5556
        %5558 = vmatprep.mubr.bf16.mxu0 0
        %5559 = vmatmul.mubr.bf16.gmra.mrb[0].mxu0 %v4485
        %v5560 = vpop.f32.mrb[0].mxu0
        %v5561 = vadd.f32 %v5448, %v5560
        %v5562 = vpop.f32.mrb[0].mxu0
        %v5563 = vadd.f32 %v5450, %v5562
        %v5564 = vpop.f32.mrb[0].mxu0
        %v5565 = vadd.f32 %v5452, %v5564
        %v5566 = vpop.f32.mrb[0].mxu0
        %v5567 = vadd.f32 %v5454, %v5566
        %5568 = vmatprep.mubr.bf16.mxu0 0
        %5569 = vmatmul.mubr.bf16.gmra.mrb[0].mxu0 %v4488
        %v5570 = vpop.f32.mrb[0].mxu0
        %v5571 = vadd.f32 %v5458, %v5570
        %v5572 = vpop.f32.mrb[0].mxu0
        %v5573 = vadd.f32 %v5460, %v5572
        %v5574 = vpop.f32.mrb[0].mxu0
        %v5575 = vadd.f32 %v5462, %v5574
        %v5576 = vpop.f32.mrb[0].mxu0
        %v5577 = vadd.f32 %v5464, %v5576
        %5578 = vmatprep.mubr.bf16.mxu0 0
        %5579 = vmatmul.mubr.bf16.gmra.mrb[0].mxu0 %v4491
        %v5580 = vpop.f32.mrb[0].mxu0
        %v5581 = vadd.f32 %v5468, %v5580
        %v5582 = vpop.f32.mrb[0].mxu0
        %v5583 = vadd.f32 %v5470, %v5582
        %v5584 = vpop.f32.mrb[0].mxu0
        %v5585 = vadd.f32 %v5472, %v5584
        %v5586 = vpop.f32.mrb[0].mxu0
        %v5587 = vadd.f32 %v5474, %v5586
        %5588 = vmatprep.mubr.bf16.mxu0 0
        %5589 = vmatmul.mubr.bf16.gmra.mrb[0].mxu0 %v4494
        %v5590 = vpop.f32.mrb[0].mxu0
        %v5591 = vadd.f32 %v5478, %v5590
        %v5592 = vpop.f32.mrb[0].mxu0
        %v5593 = vadd.f32 %v5480, %v5592
        %v5594 = vpop.f32.mrb[0].mxu0
        %v5595 = vadd.f32 %v5482, %v5594
        %v5596 = vpop.f32.mrb[0].mxu0
        %v5597 = vadd.f32 %v5484, %v5596
        %5598 = vmatprep.mubr.bf16.mxu0 0
        %5599 = vmatmul.mubr.bf16.gmra.mrb[0].mxu0 %v4497
        %v5600 = vpop.f32.mrb[0].mxu0
        %v5601 = vadd.f32 %v5488, %v5600
        %v5602 = vpop.f32.mrb[0].mxu0
        %v5603 = vadd.f32 %v5490, %v5602
        %v5604 = vpop.f32.mrb[0].mxu0
        %v5605 = vadd.f32 %v5492, %v5604
        %v5606 = vpop.f32.mrb[0].mxu0
        %v5607 = vadd.f32 %v5494, %v5606
        %5608 = vmatprep.mubr.bf16.mxu0 0
        %5609 = vmatmul.mubr.bf16.gmra.mrb[0].mxu0 %v4500
        %v5610 = vpop.f32.mrb[0].mxu0
        %v5611 = vadd.f32 %v5498, %v5610
        %v5612 = vpop.f32.mrb[0].mxu0
        %v5613 = vadd.f32 %v5500, %v5612
        %v5614 = vpop.f32.mrb[0].mxu0
        %v5615 = vadd.f32 %v5502, %v5614
        %v5616 = vpop.f32.mrb[0].mxu0
        %v5617 = vadd.f32 %v5504, %v5616
        %5618 = vmatprep.mubr.bf16.mxu0 0
        %5619 = vmatmul.mubr.bf16.gmra.mrb[0].mxu0 %v4503
        %v5620 = vpop.f32.mrb[0].mxu0
        %v5621 = vadd.f32 %v5508, %v5620
        %v5622 = vpop.f32.mrb[0].mxu0
        %v5623 = vadd.f32 %v5510, %v5622
        %v5624 = vpop.f32.mrb[0].mxu0
        %v5625 = vadd.f32 %v5512, %v5624
        %v5626 = vpop.f32.mrb[0].mxu0
        %v5627 = vadd.f32 %v5514, %v5626
        %5628 = vdwg.mxu0
        %5629 = vmatprep.subr.bf16.mxu0 %v5118
        %5630 = vmatpush1.bf16.msra.mxu0 %v5117
        %5631 = vmatprep.subr.bf16.mxu0 %v5124
        %5632 = vmatpush1.bf16.msra.mxu0 %v5123
        %5633 = vmatprep.subr.bf16.mxu0 %v5130
        %5634 = vmatpush1.bf16.msra.mxu0 %v5129
        %5635 = vmatprep.subr.bf16.mxu0 %v5136
        %5636 = vmatpush1.bf16.msra.mxu0 %v5135
        %5637 = vmatprep.subr.bf16.mxu0 %v5142
        %5638 = vmatpush1.bf16.msra.mxu0 %v5141
        %5639 = vmatprep.subr.bf16.mxu0 %v5148
        %5640 = vmatpush1.bf16.msra.mxu0 %v5147
        %5641 = vmatprep.subr.bf16.mxu0 %v5154
        %5642 = vmatpush1.bf16.msra.mxu0 %v5153
        %5643 = vmatprep.subr.bf16.mxu0 %v5160
        %5644 = vmatpush1.bf16.msra.mxu0 %v5159
        %5645 = vmatprep.subr.bf16.mxu0 %v5166
        %5646 = vmatpush1.bf16.msra.mxu0 %v5165
        %5647 = vmatprep.subr.bf16.mxu0 %v5172
        %5648 = vmatpush1.bf16.msra.mxu0 %v5171
        %5649 = vmatprep.subr.bf16.mxu0 %v5178
        %5650 = vmatpush1.bf16.msra.mxu0 %v5177
        %5651 = vmatprep.subr.bf16.mxu0 %v5184
        %5652 = vmatpush1.bf16.msra.mxu0 %v5183
        %5653 = vmatprep.subr.bf16.mxu0 %v5190
        %5654 = vmatpush1.bf16.msra.mxu0 %v5189
        %5655 = vmatprep.subr.bf16.mxu0 %v5196
        %5656 = vmatpush1.bf16.msra.mxu0 %v5195
        %5657 = vmatprep.subr.bf16.mxu0 %v5202
        %5658 = vmatpush1.bf16.msra.mxu0 %v5201
        %5659 = vmatprep.subr.bf16.mxu0 %v5208
        %5660 = vmatpush1.bf16.msra.mxu0 %v5207
        %5661 = vmatprep.mubr.bf16.mxu0 %v4481
        %5662 = vmatmul.mubr.bf16.gmra.mrb[0].mxu0 %v4480
        %v5663 = vpop.f32.mrb[0].mxu0
        %v5664 = vadd.f32 %v4664, %v5663
        %v5665 = vpop.f32.mrb[0].mxu0
        %v5666 = vadd.f32 %v4668, %v5665
        %v5667 = vpop.f32.mrb[0].mxu0
        %v5668 = vadd.f32 %v4664, %v5667
        %v5669 = vpop.f32.mrb[0].mxu0
        %v5670 = vadd.f32 %v4668, %v5669
        %5671 = vmatprep.mubr.bf16.mxu0 %v4484
        %5672 = vmatmul.mubr.bf16.gmra.mrb[0].mxu0 %v4483
        %v5673 = vpop.f32.mrb[0].mxu0
        %v5674 = vadd.f32 %v4664, %v5673
        %v5675 = vpop.f32.mrb[0].mxu0
        %v5676 = vadd.f32 %v4668, %v5675
        %v5677 = vpop.f32.mrb[0].mxu0
        %v5678 = vadd.f32 %v4664, %v5677
        %v5679 = vpop.f32.mrb[0].mxu0
        %v5680 = vadd.f32 %v4668, %v5679
        %5681 = vmatprep.mubr.bf16.mxu0 %v4487
        %5682 = vmatmul.mubr.bf16.gmra.mrb[0].mxu0 %v4486
        %v5683 = vpop.f32.mrb[0].mxu0
        %v5684 = vadd.f32 %v4664, %v5683
        %v5685 = vpop.f32.mrb[0].mxu0
        %v5686 = vadd.f32 %v4668, %v5685
        %v5687 = vpop.f32.mrb[0].mxu0
        %v5688 = vadd.f32 %v4664, %v5687
        %v5689 = vpop.f32.mrb[0].mxu0
        %v5690 = vadd.f32 %v4668, %v5689
        %5691 = vmatprep.mubr.bf16.mxu0 %v4490
        %5692 = vmatmul.mubr.bf16.gmra.mrb[0].mxu0 %v4489
        %v5693 = vpop.f32.mrb[0].mxu0
        %v5694 = vadd.f32 %v4664, %v5693
        %v5695 = vpop.f32.mrb[0].mxu0
        %v5696 = vadd.f32 %v4668, %v5695
        %v5697 = vpop.f32.mrb[0].mxu0
        %v5698 = vadd.f32 %v4664, %v5697
        %v5699 = vpop.f32.mrb[0].mxu0
        %v5700 = vadd.f32 %v4668, %v5699
        %5701 = vmatprep.mubr.bf16.mxu0 %v4493
        %5702 = vmatmul.mubr.bf16.gmra.mrb[0].mxu0 %v4492
        %v5703 = vpop.f32.mrb[0].mxu0
        %v5704 = vadd.f32 %v4664, %v5703
        %v5705 = vpop.f32.mrb[0].mxu0
        %v5706 = vadd.f32 %v4668, %v5705
        %v5707 = vpop.f32.mrb[0].mxu0
        %v5708 = vadd.f32 %v4664, %v5707
        %v5709 = vpop.f32.mrb[0].mxu0
        %v5710 = vadd.f32 %v4668, %v5709
        %5711 = vmatprep.mubr.bf16.mxu0 %v4496
        %5712 = vmatmul.mubr.bf16.gmra.mrb[0].mxu0 %v4495
        %v5713 = vpop.f32.mrb[0].mxu0
        %v5714 = vadd.f32 %v4664, %v5713
        %v5715 = vpop.f32.mrb[0].mxu0
        %v5716 = vadd.f32 %v4668, %v5715
        %v5717 = vpop.f32.mrb[0].mxu0
        %v5718 = vadd.f32 %v4664, %v5717
        %v5719 = vpop.f32.mrb[0].mxu0
        %v5720 = vadd.f32 %v4668, %v5719
        %5721 = vmatprep.mubr.bf16.mxu0 %v4499
        %5722 = vmatmul.mubr.bf16.gmra.mrb[0].mxu0 %v4498
        %v5723 = vpop.f32.mrb[0].mxu0
        %v5724 = vadd.f32 %v4664, %v5723
        %v5725 = vpop.f32.mrb[0].mxu0
        %v5726 = vadd.f32 %v4668, %v5725
        %v5727 = vpop.f32.mrb[0].mxu0
        %v5728 = vadd.f32 %v4664, %v5727
        %v5729 = vpop.f32.mrb[0].mxu0
        %v5730 = vadd.f32 %v4668, %v5729
        %5731 = vmatprep.mubr.bf16.mxu0 %v4502
        %5732 = vmatmul.mubr.bf16.gmra.mrb[0].mxu0 %v4501
        %v5733 = vpop.f32.mrb[0].mxu0
        %v5734 = vadd.f32 %v4664, %v5733
        %v5735 = vpop.f32.mrb[0].mxu0
        %v5736 = vadd.f32 %v4668, %v5735
        %v5737 = vpop.f32.mrb[0].mxu0
        %v5738 = vadd.f32 %v4664, %v5737
        %v5739 = vpop.f32.mrb[0].mxu0
        %v5740 = vadd.f32 %v4668, %v5739
        %5741 = vdwg.mxu0
        %5742 = vmatprep.subr.bf16.mxu0 %v5214
        %5743 = vmatpush1.bf16.msra.mxu0 %v5213
        %5744 = vmatprep.subr.bf16.mxu0 %v5220
        %5745 = vmatpush1.bf16.msra.mxu0 %v5219
        %5746 = vmatprep.subr.bf16.mxu0 %v5226
        %5747 = vmatpush1.bf16.msra.mxu0 %v5225
        %5748 = vmatprep.subr.bf16.mxu0 %v5232
        %5749 = vmatpush1.bf16.msra.mxu0 %v5231
        %5750 = vmatprep.subr.bf16.mxu0 %v5238
        %5751 = vmatpush1.bf16.msra.mxu0 %v5237
        %5752 = vmatprep.subr.bf16.mxu0 %v5244
        %5753 = vmatpush1.bf16.msra.mxu0 %v5243
        %5754 = vmatprep.subr.bf16.mxu0 %v5250
        %5755 = vmatpush1.bf16.msra.mxu0 %v5249
        %5756 = vmatprep.subr.bf16.mxu0 %v5256
        %5757 = vmatpush1.bf16.msra.mxu0 %v5255
        %5758 = vmatprep.subr.bf16.mxu0 0
        %5759 = vmatpush1.bf16.msra.mxu0 0
        %5760 = vmatprep.subr.bf16.mxu0 0
        %5761 = vmatpush1.bf16.msra.mxu0 0
        %5762 = vmatprep.subr.bf16.mxu0 0
        %5763 = vmatpush1.bf16.msra.mxu0 0
        %5764 = vmatprep.subr.bf16.mxu0 0
        %5765 = vmatpush1.bf16.msra.mxu0 0
        %5766 = vmatprep.subr.bf16.mxu0 0
        %5767 = vmatpush1.bf16.msra.mxu0 0
        %5768 = vmatprep.subr.bf16.mxu0 0
        %5769 = vmatpush1.bf16.msra.mxu0 0
        %5770 = vmatprep.subr.bf16.mxu0 0
        %5771 = vmatpush1.bf16.msra.mxu0 0
        %5772 = vmatprep.subr.bf16.mxu0 0
        %5773 = vmatpush1.bf16.msra.mxu0 0
        %5774 = vmatprep.mubr.bf16.mxu0 0
        %5775 = vmatmul.mubr.bf16.gmra.mrb[0].mxu0 %v4482
        %v5776 = vpop.f32.mrb[0].mxu0
        %v5777 = vadd.f32 %v5664, %v5776
        %v5778 = vpop.f32.mrb[0].mxu0
        %v5779 = vadd.f32 %v5666, %v5778
        %v5780 = vpop.f32.mrb[0].mxu0
        %v5781 = vadd.f32 %v5668, %v5780
        %v5782 = vpop.f32.mrb[0].mxu0
        %v5783 = vadd.f32 %v5670, %v5782
        %5784 = vmatprep.mubr.bf16.mxu0 0
        %5785 = vmatmul.mubr.bf16.gmra.mrb[0].mxu0 %v4485
        %v5786 = vpop.f32.mrb[0].mxu0
        %v5787 = vadd.f32 %v5674, %v5786
        %v5788 = vpop.f32.mrb[0].mxu0
        %v5789 = vadd.f32 %v5676, %v5788
        %v5790 = vpop.f32.mrb[0].mxu0
        %v5791 = vadd.f32 %v5678, %v5790
        %v5792 = vpop.f32.mrb[0].mxu0
        %v5793 = vadd.f32 %v5680, %v5792
        %5794 = vmatprep.mubr.bf16.mxu0 0
        %5795 = vmatmul.mubr.bf16.gmra.mrb[0].mxu0 %v4488
        %v5796 = vpop.f32.mrb[0].mxu0
        %v5797 = vadd.f32 %v5684, %v5796
        %v5798 = vpop.f32.mrb[0].mxu0
        %v5799 = vadd.f32 %v5686, %v5798
        %v5800 = vpop.f32.mrb[0].mxu0
        %v5801 = vadd.f32 %v5688, %v5800
        %v5802 = vpop.f32.mrb[0].mxu0
        %v5803 = vadd.f32 %v5690, %v5802
        %5804 = vmatprep.mubr.bf16.mxu0 0
        %5805 = vmatmul.mubr.bf16.gmra.mrb[0].mxu0 %v4491
        %v5806 = vpop.f32.mrb[0].mxu0
        %v5807 = vadd.f32 %v5694, %v5806
        %v5808 = vpop.f32.mrb[0].mxu0
        %v5809 = vadd.f32 %v5696, %v5808
        %v5810 = vpop.f32.mrb[0].mxu0
        %v5811 = vadd.f32 %v5698, %v5810
        %v5812 = vpop.f32.mrb[0].mxu0
        %v5813 = vadd.f32 %v5700, %v5812
        %5814 = vmatprep.mubr.bf16.mxu0 0
        %5815 = vmatmul.mubr.bf16.gmra.mrb[0].mxu0 %v4494
        %v5816 = vpop.f32.mrb[0].mxu0
        %v5817 = vadd.f32 %v5704, %v5816
        %v5818 = vpop.f32.mrb[0].mxu0
        %v5819 = vadd.f32 %v5706, %v5818
        %v5820 = vpop.f32.mrb[0].mxu0
        %v5821 = vadd.f32 %v5708, %v5820
        %v5822 = vpop.f32.mrb[0].mxu0
        %v5823 = vadd.f32 %v5710, %v5822
        %5824 = vmatprep.mubr.bf16.mxu0 0
        %5825 = vmatmul.mubr.bf16.gmra.mrb[0].mxu0 %v4497
        %v5826 = vpop.f32.mrb[0].mxu0
        %v5827 = vadd.f32 %v5714, %v5826
        %v5828 = vpop.f32.mrb[0].mxu0
        %v5829 = vadd.f32 %v5716, %v5828
        %v5830 = vpop.f32.mrb[0].mxu0
        %v5831 = vadd.f32 %v5718, %v5830
        %v5832 = vpop.f32.mrb[0].mxu0
        %v5833 = vadd.f32 %v5720, %v5832
        %5834 = vmatprep.mubr.bf16.mxu0 0
        %5835 = vmatmul.mubr.bf16.gmra.mrb[0].mxu0 %v4500
        %v5836 = vpop.f32.mrb[0].mxu0
        %v5837 = vadd.f32 %v5724, %v5836
        %v5838 = vpop.f32.mrb[0].mxu0
        %v5839 = vadd.f32 %v5726, %v5838
        %v5840 = vpop.f32.mrb[0].mxu0
        %v5841 = vadd.f32 %v5728, %v5840
        %v5842 = vpop.f32.mrb[0].mxu0
        %v5843 = vadd.f32 %v5730, %v5842
        %5844 = vmatprep.mubr.bf16.mxu0 0
        %5845 = vmatmul.mubr.bf16.gmra.mrb[0].mxu0 %v4503
        %v5846 = vpop.f32.mrb[0].mxu0
        %v5847 = vadd.f32 %v5734, %v5846
        %v5848 = vpop.f32.mrb[0].mxu0
        %v5849 = vadd.f32 %v5736, %v5848
        %v5850 = vpop.f32.mrb[0].mxu0
        %v5851 = vadd.f32 %v5738, %v5850
        %v5852 = vpop.f32.mrb[0].mxu0
        %v5853 = vadd.f32 %v5740, %v5852
        %5854 = vdwg.mxu0
        %5855 = vmatprep.subr.bf16.mxu0 %v5120
        %5856 = vmatpush1.bf16.msra.mxu0 %v5119
        %5857 = vmatprep.subr.bf16.mxu0 %v5126
        %5858 = vmatpush1.bf16.msra.mxu0 %v5125
        %5859 = vmatprep.subr.bf16.mxu0 %v5132
        %5860 = vmatpush1.bf16.msra.mxu0 %v5131
        %5861 = vmatprep.subr.bf16.mxu0 %v5138
        %5862 = vmatpush1.bf16.msra.mxu0 %v5137
        %5863 = vmatprep.subr.bf16.mxu0 %v5144
        %5864 = vmatpush1.bf16.msra.mxu0 %v5143
        %5865 = vmatprep.subr.bf16.mxu0 %v5150
        %5866 = vmatpush1.bf16.msra.mxu0 %v5149
        %5867 = vmatprep.subr.bf16.mxu0 %v5156
        %5868 = vmatpush1.bf16.msra.mxu0 %v5155
        %5869 = vmatprep.subr.bf16.mxu0 %v5162
        %5870 = vmatpush1.bf16.msra.mxu0 %v5161
        %5871 = vmatprep.subr.bf16.mxu0 %v5168
        %5872 = vmatpush1.bf16.msra.mxu0 %v5167
        %5873 = vmatprep.subr.bf16.mxu0 %v5174
        %5874 = vmatpush1.bf16.msra.mxu0 %v5173
        %5875 = vmatprep.subr.bf16.mxu0 %v5180
        %5876 = vmatpush1.bf16.msra.mxu0 %v5179
        %5877 = vmatprep.subr.bf16.mxu0 %v5186
        %5878 = vmatpush1.bf16.msra.mxu0 %v5185
        %5879 = vmatprep.subr.bf16.mxu0 %v5192
        %5880 = vmatpush1.bf16.msra.mxu0 %v5191
        %5881 = vmatprep.subr.bf16.mxu0 %v5198
        %5882 = vmatpush1.bf16.msra.mxu0 %v5197
        %5883 = vmatprep.subr.bf16.mxu0 %v5204
        %5884 = vmatpush1.bf16.msra.mxu0 %v5203
        %5885 = vmatprep.subr.bf16.mxu0 %v5210
        %5886 = vmatpush1.bf16.msra.mxu0 %v5209
        %5887 = vmatprep.mubr.bf16.mxu0 %v4481
        %5888 = vmatmul.mubr.bf16.gmra.mrb[0].mxu0 %v4480
        %v5889 = vpop.f32.mrb[0].mxu0
        %v5890 = vadd.f32 %v4672, %v5889
        %v5891 = vpop.f32.mrb[0].mxu0
        %v5892 = vadd.f32 %v4676, %v5891
        %v5893 = vpop.f32.mrb[0].mxu0
        %v5894 = vadd.f32 %v4672, %v5893
        %v5895 = vpop.f32.mrb[0].mxu0
        %v5896 = vadd.f32 %v4676, %v5895
        %5897 = vmatprep.mubr.bf16.mxu0 %v4484
        %5898 = vmatmul.mubr.bf16.gmra.mrb[0].mxu0 %v4483
        %v5899 = vpop.f32.mrb[0].mxu0
        %v5900 = vadd.f32 %v4672, %v5899
        %v5901 = vpop.f32.mrb[0].mxu0
        %v5902 = vadd.f32 %v4676, %v5901
        %v5903 = vpop.f32.mrb[0].mxu0
        %v5904 = vadd.f32 %v4672, %v5903
        %v5905 = vpop.f32.mrb[0].mxu0
        %v5906 = vadd.f32 %v4676, %v5905
        %5907 = vmatprep.mubr.bf16.mxu0 %v4487
        %5908 = vmatmul.mubr.bf16.gmra.mrb[0].mxu0 %v4486
        %v5909 = vpop.f32.mrb[0].mxu0
        %v5910 = vadd.f32 %v4672, %v5909
        %v5911 = vpop.f32.mrb[0].mxu0
        %v5912 = vadd.f32 %v4676, %v5911
        %v5913 = vpop.f32.mrb[0].mxu0
        %v5914 = vadd.f32 %v4672, %v5913
        %v5915 = vpop.f32.mrb[0].mxu0
        %v5916 = vadd.f32 %v4676, %v5915
        %5917 = vmatprep.mubr.bf16.mxu0 %v4490
        %5918 = vmatmul.mubr.bf16.gmra.mrb[0].mxu0 %v4489
        %v5919 = vpop.f32.mrb[0].mxu0
        %v5920 = vadd.f32 %v4672, %v5919
        %v5921 = vpop.f32.mrb[0].mxu0
        %v5922 = vadd.f32 %v4676, %v5921
        %v5923 = vpop.f32.mrb[0].mxu0
        %v5924 = vadd.f32 %v4672, %v5923
        %v5925 = vpop.f32.mrb[0].mxu0
        %v5926 = vadd.f32 %v4676, %v5925
        %5927 = vmatprep.mubr.bf16.mxu0 %v4493
        %5928 = vmatmul.mubr.bf16.gmra.mrb[0].mxu0 %v4492
        %v5929 = vpop.f32.mrb[0].mxu0
        %v5930 = vadd.f32 %v4672, %v5929
        %v5931 = vpop.f32.mrb[0].mxu0
        %v5932 = vadd.f32 %v4676, %v5931
        %v5933 = vpop.f32.mrb[0].mxu0
        %v5934 = vadd.f32 %v4672, %v5933
        %v5935 = vpop.f32.mrb[0].mxu0
        %v5936 = vadd.f32 %v4676, %v5935
        %5937 = vmatprep.mubr.bf16.mxu0 %v4496
        %5938 = vmatmul.mubr.bf16.gmra.mrb[0].mxu0 %v4495
        %v5939 = vpop.f32.mrb[0].mxu0
        %v5940 = vadd.f32 %v4672, %v5939
        %v5941 = vpop.f32.mrb[0].mxu0
        %v5942 = vadd.f32 %v4676, %v5941
        %v5943 = vpop.f32.mrb[0].mxu0
        %v5944 = vadd.f32 %v4672, %v5943
        %v5945 = vpop.f32.mrb[0].mxu0
        %v5946 = vadd.f32 %v4676, %v5945
        %5947 = vmatprep.mubr.bf16.mxu0 %v4499
        %5948 = vmatmul.mubr.bf16.gmra.mrb[0].mxu0 %v4498
        %v5949 = vpop.f32.mrb[0].mxu0
        %v5950 = vadd.f32 %v4672, %v5949
        %v5951 = vpop.f32.mrb[0].mxu0
        %v5952 = vadd.f32 %v4676, %v5951
        %v5953 = vpop.f32.mrb[0].mxu0
        %v5954 = vadd.f32 %v4672, %v5953
        %v5955 = vpop.f32.mrb[0].mxu0
        %v5956 = vadd.f32 %v4676, %v5955
        %5957 = vmatprep.mubr.bf16.mxu0 %v4502
        %5958 = vmatmul.mubr.bf16.gmra.mrb[0].mxu0 %v4501
        %v5959 = vpop.f32.mrb[0].mxu0
        %v5960 = vadd.f32 %v4672, %v5959
        %v5961 = vpop.f32.mrb[0].mxu0
        %v5962 = vadd.f32 %v4676, %v5961
        %v5963 = vpop.f32.mrb[0].mxu0
        %v5964 = vadd.f32 %v4672, %v5963
        %v5965 = vpop.f32.mrb[0].mxu0
        %v5966 = vadd.f32 %v4676, %v5965
        %5967 = vdwg.mxu0
        %5968 = vmatprep.subr.bf16.mxu0 %v5216
        %5969 = vmatpush1.bf16.msra.mxu0 %v5215
        %5970 = vmatprep.subr.bf16.mxu0 %v5222
        %5971 = vmatpush1.bf16.msra.mxu0 %v5221
        %5972 = vmatprep.subr.bf16.mxu0 %v5228
        %5973 = vmatpush1.bf16.msra.mxu0 %v5227
        %5974 = vmatprep.subr.bf16.mxu0 %v5234
        %5975 = vmatpush1.bf16.msra.mxu0 %v5233
        %5976 = vmatprep.subr.bf16.mxu0 %v5240
        %5977 = vmatpush1.bf16.msra.mxu0 %v5239
        %5978 = vmatprep.subr.bf16.mxu0 %v5246
        %5979 = vmatpush1.bf16.msra.mxu0 %v5245
        %5980 = vmatprep.subr.bf16.mxu0 %v5252
        %5981 = vmatpush1.bf16.msra.mxu0 %v5251
        %5982 = vmatprep.subr.bf16.mxu0 %v5258
        %5983 = vmatpush1.bf16.msra.mxu0 %v5257
        %5984 = vmatprep.subr.bf16.mxu0 0
        %5985 = vmatpush1.bf16.msra.mxu0 0
        %5986 = vmatprep.subr.bf16.mxu0 0
        %5987 = vmatpush1.bf16.msra.mxu0 0
        %5988 = vmatprep.subr.bf16.mxu0 0
        %5989 = vmatpush1.bf16.msra.mxu0 0
        %5990 = vmatprep.subr.bf16.mxu0 0
        %5991 = vmatpush1.bf16.msra.mxu0 0
        %5992 = vmatprep.subr.bf16.mxu0 0
        %5993 = vmatpush1.bf16.msra.mxu0 0
        %5994 = vmatprep.subr.bf16.mxu0 0
        %5995 = vmatpush1.bf16.msra.mxu0 0
        %5996 = vmatprep.subr.bf16.mxu0 0
        %5997 = vmatpush1.bf16.msra.mxu0 0
        %5998 = vmatprep.subr.bf16.mxu0 0
        %5999 = vmatpush1.bf16.msra.mxu0 0
        %6000 = vmatprep.mubr.bf16.mxu0 0
        %6001 = vmatmul.mubr.bf16.gmra.mrb[0].mxu0 %v4482
        %v6002 = vpop.f32.mrb[0].mxu0
        %v6003 = vadd.f32 %v5890, %v6002
        %v6004 = vpop.f32.mrb[0].mxu0
        %v6005 = vadd.f32 %v5892, %v6004
        %v6006 = vpop.f32.mrb[0].mxu0
        %v6007 = vadd.f32 %v5894, %v6006
        %v6008 = vpop.f32.mrb[0].mxu0
        %v6009 = vadd.f32 %v5896, %v6008
        %6010 = vmatprep.mubr.bf16.mxu0 0
        %6011 = vmatmul.mubr.bf16.gmra.mrb[0].mxu0 %v4485
        %v6012 = vpop.f32.mrb[0].mxu0
        %v6013 = vadd.f32 %v5900, %v6012
        %v6014 = vpop.f32.mrb[0].mxu0
        %v6015 = vadd.f32 %v5902, %v6014
        %v6016 = vpop.f32.mrb[0].mxu0
        %v6017 = vadd.f32 %v5904, %v6016
        %v6018 = vpop.f32.mrb[0].mxu0
        %v6019 = vadd.f32 %v5906, %v6018
        %6020 = vmatprep.mubr.bf16.mxu0 0
        %6021 = vmatmul.mubr.bf16.gmra.mrb[0].mxu0 %v4488
        %v6022 = vpop.f32.mrb[0].mxu0
        %v6023 = vadd.f32 %v5910, %v6022
        %v6024 = vpop.f32.mrb[0].mxu0
        %v6025 = vadd.f32 %v5912, %v6024
        %v6026 = vpop.f32.mrb[0].mxu0
        %v6027 = vadd.f32 %v5914, %v6026
        %v6028 = vpop.f32.mrb[0].mxu0
        %v6029 = vadd.f32 %v5916, %v6028
        %6030 = vmatprep.mubr.bf16.mxu0 0
        %6031 = vmatmul.mubr.bf16.gmra.mrb[0].mxu0 %v4491
        %v6032 = vpop.f32.mrb[0].mxu0
        %v6033 = vadd.f32 %v5920, %v6032
        %v6034 = vpop.f32.mrb[0].mxu0
        %v6035 = vadd.f32 %v5922, %v6034
        %v6036 = vpop.f32.mrb[0].mxu0
        %v6037 = vadd.f32 %v5924, %v6036
        %v6038 = vpop.f32.mrb[0].mxu0
        %v6039 = vadd.f32 %v5926, %v6038
        %6040 = vmatprep.mubr.bf16.mxu0 0
        %6041 = vmatmul.mubr.bf16.gmra.mrb[0].mxu0 %v4494
        %v6042 = vpop.f32.mrb[0].mxu0
        %v6043 = vadd.f32 %v5930, %v6042
        %v6044 = vpop.f32.mrb[0].mxu0
        %v6045 = vadd.f32 %v5932, %v6044
        %v6046 = vpop.f32.mrb[0].mxu0
        %v6047 = vadd.f32 %v5934, %v6046
        %v6048 = vpop.f32.mrb[0].mxu0
        %v6049 = vadd.f32 %v5936, %v6048
        %6050 = vmatprep.mubr.bf16.mxu0 0
        %6051 = vmatmul.mubr.bf16.gmra.mrb[0].mxu0 %v4497
        %v6052 = vpop.f32.mrb[0].mxu0
        %v6053 = vadd.f32 %v5940, %v6052
        %v6054 = vpop.f32.mrb[0].mxu0
        %v6055 = vadd.f32 %v5942, %v6054
        %v6056 = vpop.f32.mrb[0].mxu0
        %v6057 = vadd.f32 %v5944, %v6056
        %v6058 = vpop.f32.mrb[0].mxu0
        %v6059 = vadd.f32 %v5946, %v6058
        %6060 = vmatprep.mubr.bf16.mxu0 0
        %6061 = vmatmul.mubr.bf16.gmra.mrb[0].mxu0 %v4500
        %v6062 = vpop.f32.mrb[0].mxu0
        %v6063 = vadd.f32 %v5950, %v6062
        %v6064 = vpop.f32.mrb[0].mxu0
        %v6065 = vadd.f32 %v5952, %v6064
        %v6066 = vpop.f32.mrb[0].mxu0
        %v6067 = vadd.f32 %v5954, %v6066
        %v6068 = vpop.f32.mrb[0].mxu0
        %v6069 = vadd.f32 %v5956, %v6068
        %6070 = vmatprep.mubr.bf16.mxu0 0
        %6071 = vmatmul.mubr.bf16.gmra.mrb[0].mxu0 %v4503
        %v6072 = vpop.f32.mrb[0].mxu0
        %v6073 = vadd.f32 %v5960, %v6072
        %v6074 = vpop.f32.mrb[0].mxu0
        %v6075 = vadd.f32 %v5962, %v6074
        %v6076 = vpop.f32.mrb[0].mxu0
        %v6077 = vadd.f32 %v5964, %v6076
        %v6078 = vpop.f32.mrb[0].mxu0
        %v6079 = vadd.f32 %v5966, %v6078
        %6080 = vdwg.mxu0
        %v6081 = vpack.c.bf16 %v5555, %v5551
        %v6082 = vpack.c.bf16 %v5557, %v5553
        %v6083 = vpack.c.bf16 %v5781, %v5777
        %v6084 = vpack.c.bf16 %v5783, %v5779
        %v6085 = vpack.c.bf16 %v6007, %v6003
        %v6086 = vpack.c.bf16 %v6009, %v6005
        %v6087 = vpack.c.bf16 %v5565, %v5561
        %v6088 = vpack.c.bf16 %v5567, %v5563
        %v6089 = vpack.c.bf16 %v5791, %v5787
        %v6090 = vpack.c.bf16 %v5793, %v5789
        %v6091 = vpack.c.bf16 %v6017, %v6013
        %v6092 = vpack.c.bf16 %v6019, %v6015
        %v6093 = vpack.c.bf16 %v5575, %v5571
        %v6094 = vpack.c.bf16 %v5577, %v5573
        %v6095 = vpack.c.bf16 %v5801, %v5797
        %v6096 = vpack.c.bf16 %v5803, %v5799
        %v6097 = vpack.c.bf16 %v6027, %v6023
        %v6098 = vpack.c.bf16 %v6029, %v6025
        %v6099 = vpack.c.bf16 %v5585, %v5581
        %v6100 = vpack.c.bf16 %v5587, %v5583
        %v6101 = vpack.c.bf16 %v5811, %v5807
        %v6102 = vpack.c.bf16 %v5813, %v5809
        %v6103 = vpack.c.bf16 %v6037, %v6033
        %v6104 = vpack.c.bf16 %v6039, %v6035
        %v6105 = vpack.c.bf16 %v5595, %v5591
        %v6106 = vpack.c.bf16 %v5597, %v5593
        %v6107 = vpack.c.bf16 %v5821, %v5817
        %v6108 = vpack.c.bf16 %v5823, %v5819
        %v6109 = vpack.c.bf16 %v6047, %v6043
        %v6110 = vpack.c.bf16 %v6049, %v6045
        %v6111 = vpack.c.bf16 %v5605, %v5601
        %v6112 = vpack.c.bf16 %v5607, %v5603
        %v6113 = vpack.c.bf16 %v5831, %v5827
        %v6114 = vpack.c.bf16 %v5833, %v5829
        %v6115 = vpack.c.bf16 %v6057, %v6053
        %v6116 = vpack.c.bf16 %v6059, %v6055
        %v6117 = vpack.c.bf16 %v5615, %v5611
        %v6118 = vpack.c.bf16 %v5617, %v5613
        %v6119 = vpack.c.bf16 %v5841, %v5837
        %v6120 = vpack.c.bf16 %v5843, %v5839
        %v6121 = vpack.c.bf16 %v6067, %v6063
        %v6122 = vpack.c.bf16 %v6069, %v6065
        %v6123 = vpack.c.bf16 %v5625, %v5621
        %v6124 = vpack.c.bf16 %v5627, %v5623
        %v6125 = vpack.c.bf16 %v5851, %v5847
        %v6126 = vpack.c.bf16 %v5853, %v5849
        %v6127 = vpack.c.bf16 %v6077, %v6073
        %v6128 = vpack.c.bf16 %v6079, %v6075
        %v6177 = vunpack.c.l.b16 %v6081
        %v6178 = vunpack.c.l.b16 %v6082
        %v6179 = vunpack.c.l.b16 %v6083
        %v6180 = vunpack.c.l.b16 %v6084
        %v6181 = vunpack.c.l.b16 %v6085
        %v6182 = vunpack.c.l.b16 %v6086
        %v6183 = vunpack.c.h.b16 %v6081
        %v6184 = vunpack.c.h.b16 %v6082
        %v6185 = vunpack.c.h.b16 %v6083
        %v6186 = vunpack.c.h.b16 %v6084
        %v6187 = vunpack.c.h.b16 %v6085
        %v6188 = vunpack.c.h.b16 %v6086
        %v6189 = vunpack.c.l.b16 %v6087
        %v6190 = vunpack.c.l.b16 %v6088
        %v6191 = vunpack.c.l.b16 %v6089
        %v6192 = vunpack.c.l.b16 %v6090
        %v6193 = vunpack.c.l.b16 %v6091
        %v6194 = vunpack.c.l.b16 %v6092
        %v6195 = vunpack.c.h.b16 %v6087
        %v6196 = vunpack.c.h.b16 %v6088
        %v6197 = vunpack.c.h.b16 %v6089
        %v6198 = vunpack.c.h.b16 %v6090
        %v6199 = vunpack.c.h.b16 %v6091
        %v6200 = vunpack.c.h.b16 %v6092
        %v6201 = vunpack.c.l.b16 %v6093
        %v6202 = vunpack.c.l.b16 %v6094
        %v6203 = vunpack.c.l.b16 %v6095
        %v6204 = vunpack.c.l.b16 %v6096
        %v6205 = vunpack.c.l.b16 %v6097
        %v6206 = vunpack.c.l.b16 %v6098
        %v6207 = vunpack.c.h.b16 %v6093
        %v6208 = vunpack.c.h.b16 %v6094
        %v6209 = vunpack.c.h.b16 %v6095
        %v6210 = vunpack.c.h.b16 %v6096
        %v6211 = vunpack.c.h.b16 %v6097
        %v6212 = vunpack.c.h.b16 %v6098
        %v6213 = vunpack.c.l.b16 %v6099
        %v6214 = vunpack.c.l.b16 %v6100
        %v6215 = vunpack.c.l.b16 %v6101
        %v6216 = vunpack.c.l.b16 %v6102
        %v6217 = vunpack.c.l.b16 %v6103
        %v6218 = vunpack.c.l.b16 %v6104
        %v6219 = vunpack.c.h.b16 %v6099
        %v6220 = vunpack.c.h.b16 %v6100
        %v6221 = vunpack.c.h.b16 %v6101
        %v6222 = vunpack.c.h.b16 %v6102
        %v6223 = vunpack.c.h.b16 %v6103
        %v6224 = vunpack.c.h.b16 %v6104
        %v6225 = vunpack.c.l.b16 %v6105
        %v6226 = vunpack.c.l.b16 %v6106
        %v6227 = vunpack.c.l.b16 %v6107
        %v6228 = vunpack.c.l.b16 %v6108
        %v6229 = vunpack.c.l.b16 %v6109
        %v6230 = vunpack.c.l.b16 %v6110
        %v6231 = vunpack.c.h.b16 %v6105
        %v6232 = vunpack.c.h.b16 %v6106
        %v6233 = vunpack.c.h.b16 %v6107
        %v6234 = vunpack.c.h.b16 %v6108
        %v6235 = vunpack.c.h.b16 %v6109
        %v6236 = vunpack.c.h.b16 %v6110
        %v6237 = vunpack.c.l.b16 %v6111
        %v6238 = vunpack.c.l.b16 %v6112
        %v6239 = vunpack.c.l.b16 %v6113
        %v6240 = vunpack.c.l.b16 %v6114
        %v6241 = vunpack.c.l.b16 %v6115
        %v6242 = vunpack.c.l.b16 %v6116
        %v6243 = vunpack.c.h.b16 %v6111
        %v6244 = vunpack.c.h.b16 %v6112
        %v6245 = vunpack.c.h.b16 %v6113
        %v6246 = vunpack.c.h.b16 %v6114
        %v6247 = vunpack.c.h.b16 %v6115
        %v6248 = vunpack.c.h.b16 %v6116
        %v6249 = vunpack.c.l.b16 %v6117
        %v6250 = vunpack.c.l.b16 %v6118
        %v6251 = vunpack.c.l.b16 %v6119
        %v6252 = vunpack.c.l.b16 %v6120
        %v6253 = vunpack.c.l.b16 %v6121
        %v6254 = vunpack.c.l.b16 %v6122
        %v6255 = vunpack.c.h.b16 %v6117
        %v6256 = vunpack.c.h.b16 %v6118
        %v6257 = vunpack.c.h.b16 %v6119
        %v6258 = vunpack.c.h.b16 %v6120
        %v6259 = vunpack.c.h.b16 %v6121
        %v6260 = vunpack.c.h.b16 %v6122
        %v6261 = vunpack.c.l.b16 %v6123
        %v6262 = vunpack.c.l.b16 %v6124
        %v6263 = vunpack.c.l.b16 %v6125
        %v6264 = vunpack.c.l.b16 %v6126
        %v6265 = vunpack.c.l.b16 %v6127
        %v6266 = vunpack.c.l.b16 %v6128
        %v6267 = vunpack.c.h.b16 %v6123
        %v6268 = vunpack.c.h.b16 %v6124
        %v6269 = vunpack.c.h.b16 %v6125
        %v6270 = vunpack.c.h.b16 %v6126
        %v6271 = vunpack.c.h.b16 %v6127
        %v6272 = vunpack.c.h.b16 %v6128
        %v6273 = vpack.c.b16 %v6178, %v6177
        %v6274 = vpack.c.b16 %v6180, %v6179
        %v6275 = vpack.c.b16 %v6182, %v6181
        %v6276 = vpack.c.b16 %v6184, %v6183
        %v6277 = vpack.c.b16 %v6186, %v6185
        %v6278 = vpack.c.b16 %v6188, %v6187
        %v6279 = vpack.c.b16 %v6190, %v6189
        %v6280 = vpack.c.b16 %v6192, %v6191
        %v6281 = vpack.c.b16 %v6194, %v6193
        %v6282 = vpack.c.b16 %v6196, %v6195
        %v6283 = vpack.c.b16 %v6198, %v6197
        %v6284 = vpack.c.b16 %v6200, %v6199
        %v6285 = vpack.c.b16 %v6202, %v6201
        %v6286 = vpack.c.b16 %v6204, %v6203
        %v6287 = vpack.c.b16 %v6206, %v6205
        %v6288 = vpack.c.b16 %v6208, %v6207
        %v6289 = vpack.c.b16 %v6210, %v6209
        %v6290 = vpack.c.b16 %v6212, %v6211
        %v6291 = vpack.c.b16 %v6214, %v6213
        %v6292 = vpack.c.b16 %v6216, %v6215
        %v6293 = vpack.c.b16 %v6218, %v6217
        %v6294 = vpack.c.b16 %v6220, %v6219
        %v6295 = vpack.c.b16 %v6222, %v6221
        %v6296 = vpack.c.b16 %v6224, %v6223
        %v6297 = vpack.c.b16 %v6226, %v6225
        %v6298 = vpack.c.b16 %v6228, %v6227
        %v6299 = vpack.c.b16 %v6230, %v6229
        %v6300 = vpack.c.b16 %v6232, %v6231
        %v6301 = vpack.c.b16 %v6234, %v6233
        %v6302 = vpack.c.b16 %v6236, %v6235
        %v6303 = vpack.c.b16 %v6238, %v6237
        %v6304 = vpack.c.b16 %v6240, %v6239
        %v6305 = vpack.c.b16 %v6242, %v6241
        %v6306 = vpack.c.b16 %v6244, %v6243
        %v6307 = vpack.c.b16 %v6246, %v6245
        %v6308 = vpack.c.b16 %v6248, %v6247
        %v6309 = vpack.c.b16 %v6250, %v6249
        %v6310 = vpack.c.b16 %v6252, %v6251
        %v6311 = vpack.c.b16 %v6254, %v6253
        %v6312 = vpack.c.b16 %v6256, %v6255
        %v6313 = vpack.c.b16 %v6258, %v6257
        %v6314 = vpack.c.b16 %v6260, %v6259
        %v6315 = vpack.c.b16 %v6262, %v6261
        %v6316 = vpack.c.b16 %v6264, %v6263
        %v6317 = vpack.c.b16 %v6266, %v6265
        %v6318 = vpack.c.b16 %v6268, %v6267
        %v6319 = vpack.c.b16 %v6270, %v6269
        %v6320 = vpack.c.b16 %v6272, %v6271
        %6369 = vst [vmem:[%s260] sm:$0xff] %v6273
        %6370 = vst [vmem:[%s260 + $0x8] sm:$0xff] %v6274
        %6371 = vst [vmem:[%s260 + $0x10] sm:$0xff] %v6275
        %6372 = vst [vmem:[%s260 + $0x18] sm:$0xff] %v6276
        %6373 = vst [vmem:[%s260 + $0x20] sm:$0xff] %v6277
        %6374 = vst [vmem:[%s260 + $0x28] sm:$0xff] %v6278
        %6375 = vst [vmem:[%s260 + $0x30] sm:$0xff] %v6279
        %6376 = vst [vmem:[%s260 + $0x38] sm:$0xff] %v6280
        %6377 = vst [vmem:[%s260 + $0x40] sm:$0xff] %v6281
        %6378 = vst [vmem:[%s260 + $0x48] sm:$0xff] %v6282
        %6379 = vst [vmem:[%s260 + $0x50] sm:$0xff] %v6283
        %6380 = vst [vmem:[%s260 + $0x58] sm:$0xff] %v6284
        %6381 = vst [vmem:[%s260 + $0x60] sm:$0xff] %v6285
        %6382 = vst [vmem:[%s260 + $0x68] sm:$0xff] %v6286
        %6383 = vst [vmem:[%s260 + $0x70] sm:$0xff] %v6287
        %6384 = vst [vmem:[%s260 + $0x78] sm:$0xff] %v6288
        %6385 = vst [vmem:[%s260 + $0x80] sm:$0xff] %v6289
        %6386 = vst [vmem:[%s260 + $0x88] sm:$0xff] %v6290
        %6387 = vst [vmem:[%s260 + $0x90] sm:$0xff] %v6291
        %6388 = vst [vmem:[%s260 + $0x98] sm:$0xff] %v6292
        %6389 = vst [vmem:[%s260 + $0xa0] sm:$0xff] %v6293
        %6390 = vst [vmem:[%s260 + $0xa8] sm:$0xff] %v6294
        %6391 = vst [vmem:[%s260 + $0xb0] sm:$0xff] %v6295
        %6392 = vst [vmem:[%s260 + $0xb8] sm:$0xff] %v6296
        %6393 = vst [vmem:[%s260 + $0xc0] sm:$0xff] %v6297
        %6394 = vst [vmem:[%s260 + $0xc8] sm:$0xff] %v6298
        %6395 = vst [vmem:[%s260 + $0xd0] sm:$0xff] %v6299
        %6396 = vst [vmem:[%s260 + $0xd8] sm:$0xff] %v6300
        %6397 = vst [vmem:[%s260 + $0xe0] sm:$0xff] %v6301
        %6398 = vst [vmem:[%s260 + $0xe8] sm:$0xff] %v6302
        %6399 = vst [vmem:[%s260 + $0xf0] sm:$0xff] %v6303
        %6400 = vst [vmem:[%s260 + $0xf8] sm:$0xff] %v6304
        %6401 = vst [vmem:[%s260 + $0x100] sm:$0xff] %v6305
        %6402 = vst [vmem:[%s260 + $0x108] sm:$0xff] %v6306
        %6403 = vst [vmem:[%s260 + $0x110] sm:$0xff] %v6307
        %6404 = vst [vmem:[%s260 + $0x118] sm:$0xff] %v6308
        %6405 = vst [vmem:[%s260 + $0x120] sm:$0xff] %v6309
        %6406 = vst [vmem:[%s260 + $0x128] sm:$0xff] %v6310
        %6407 = vst [vmem:[%s260 + $0x130] sm:$0xff] %v6311
        %6408 = vst [vmem:[%s260 + $0x138] sm:$0xff] %v6312
        %6409 = vst [vmem:[%s260 + $0x140] sm:$0xff] %v6313
        %6410 = vst [vmem:[%s260 + $0x148] sm:$0xff] %v6314
        %6411 = vst [vmem:[%s260 + $0x150] sm:$0xff] %v6315
        %6412 = vst [vmem:[%s260 + $0x158] sm:$0xff] %v6316
        %6413 = vst [vmem:[%s260 + $0x160] sm:$0xff] %v6317
        %6414 = vst [vmem:[%s260 + $0x168] sm:$0xff] %v6318
        %6415 = vst [vmem:[%s260 + $0x170] sm:$0xff] %v6319
        %6416 = vst [vmem:[%s260 + $0x178] sm:$0xff] %v6320
        %s6417 = sand.u32 %s120, 1
        %s6418 = scalar_lea.sflag [#allocation4], %s6417
        %s6419 = sand.u32 %s120, 1
        %s6420 = smul.addr %s6419, 384
        %s6421 = scalar_lea.vmem [#allocation10], %s6420
        // Predicated region
        $region53: #{fwd.1} parent=35 // pred_check
          %p6422 = pneg %p130
        $region54: #{fwd.1} parent=35 // pred_check_branch
          %6424 = sbr.rel (%p6422) target = $region56
        $region55: #{fwd.1} parent=35 // pred_region
          %s6425 = smul.u32 16, %s23
          %s6427 = ssub.s32 6144, 6144
          %6428 = vsyncadd %s6418, %s6427
          %s6429 = smul.addr %s6425, 6
          %s6430 = smul.addr %s6429, 64
          %s6431 = scalar_lea.hbm %s4, %s6430
          %s6432 = sshll.u32 %s6421, 4
          %s6433 = int_to_ptr.vmem [resolvable:$true] %s6432
          %6438 = dma.vmem_to_hbm [thread:$0]  %s6433, 6144, %s6431, %s6418, 384, 384, 24
        $region56: #{fwd.1} parent=35 // pred_fallthru
          _
      $region36: #{fwd.1} parent=5 // pred_fallthru
        _
      %p6439 = scmp.le.s32.totalorder 2, %s18
      // Predicated region
      $region57: #{fwd.1} parent=5 // pred_check
        %p6440 = pneg %p6439
      $region58: #{fwd.1} parent=5 // pred_check_branch
        %6442 = sbr.rel (%p6440) target = $region60
      $region59: #{fwd.1} parent=5 // pred_region
        %s6443 = ssub.s32 %s18, 2
        // Predicated region
        $region61: #{fwd.1} parent=59 // pred_check
          %p6444 = pneg %p136
        $region62: #{fwd.1} parent=59 // pred_check_branch
          %6446 = sbr.rel (%p6444) target = $region64
        $region63: #{fwd.1} parent=59 // pred_region
          %s6447 = sand.u32 %s121, 1
          %s6448 = scalar_lea.sflag [#allocation4], %s6447
          %s6449 = sand.u32 %s121, 1
          %s6450 = smul.addr %s6449, 384
          %s6451 = scalar_lea.vmem [#allocation10], %s6450
          %6452 = dma.done %s6448, 6144
        $region64: #{fwd.1} parent=59 // pred_fallthru
          _
      $region60: #{fwd.1} parent=5 // pred_fallthru
        _
    $region6: #{fwd.1} parent=1 // loop_footer
      %s22 = sadd.s32 1, %s18
    $region7: #{fwd.1} parent=1 // loop_footer_branch
      %17 = sbr.rel target = $region3
    $region8: #{fwd.1} parent=1 // loop_exit
      _
    %6453 = vsyncpa [#allocation3], 1
    %s6454 = scalar_lea.sflag [#allocation3], 1
    %6455 = vsyncpa %s6454, 1
    %6456 = vsyncpa [#allocation6], 1
    %6457 = vsyncpa [#allocation9], 1
    %6458 = vsyncpa [#allocation4], 1
    %s6459 = scalar_lea.sflag [#allocation4], 1
    %6460 = vsyncpa %s6459, 1

</llo_original>
